<compile_context>
chip_gen: v6e
topology: v6e:2x2x1
jax: 0.10.0
libtpu: 0.0.40
codegen_flags: <defaults>
</compile_context>

<pallas_src>
import math

import jax
import jax.numpy as jnp
from jax.experimental import pallas as pl
from jax.experimental.pallas import tpu as pltpu


_TILE_CAP = 2048                      # points per grid step (big tiles amortize step overhead)
_VMEM_LIMIT = 48 * 1024 * 1024        # explicit scoped-VMEM limit (safe on v5e/v6e/v7x)


# ---------------------------------------------------------------------------
# Pallas kernels
# ---------------------------------------------------------------------------

def _chain_body(x, w1, s1_ref, w2_ref, s2_ref, w3_ref):
    """conv1(VPU,f32)->bn->relu -> conv2(MXU)->bn->relu -> conv3(MXU, raw).

    Returns the per-tile channel max of the RAW conv3 output; the bn3 shift and any
    final ReLU are hoisted past the max (both commute with a running max over points).
      x  : (Nt, 3)  f32     w1 : (3, 64) f32     s1 : (1, 64) f32
      w2 : (64, 128) bf16   s2 : (1, 128) f32    w3 : (128, 1024) bf16
    """
    # Layer 1: Cin == 3 -> three broadcast FMAs on the VPU, kept in f32.
    h = (x[:, 0:1] * w1[0:1, :]
         + x[:, 1:2] * w1[1:2, :]
         + x[:, 2:3] * w1[2:3, :])                                   # (Nt, 64) f32
    h = jnp.maximum(h + s1_ref[...], 0.0)
    # Layers 2/3 on the MXU (bf16 operands, f32 accumulation).
    h = jnp.dot(h.astype(jnp.bfloat16), w2_ref[...],
                preferred_element_type=jnp.float32)                  # (Nt, 128)
    h = jnp.maximum(h + s2_ref[...], 0.0)
    h = jnp.dot(h.astype(jnp.bfloat16), w3_ref[...],
                preferred_element_type=jnp.float32)                  # (Nt, 1024) raw
    return jnp.max(h, axis=0, keepdims=True)                         # (1, 1024)


def _accumulate_max(acc_ref, tile_max, nt):
    @pl.when(nt == 0)
    def _init():
        acc_ref[...] = tile_max

    @pl.when(nt > 0)
    def _update():
        acc_ref[...] = jnp.maximum(acc_ref[...], tile_max)


def _stn_chain_kernel(x_ref, w1_ref, s1_ref, w2_ref, s2_ref, w3_ref, s3_ref,
                      fw1_ref, fs1_ref, fw2_ref, fs2_ref, fw3_ref, fs3_ref,
                      o_ref, acc_ref):
    """STN3d fully fused: conv chain + global max + fc1->fc2->fc3 head (per-batch)."""
    nt = pl.program_id(1)
    tile_max = _chain_body(x_ref[0], w1_ref[...], s1_ref, w2_ref, s2_ref, w3_ref)
    _accumulate_max(acc_ref, tile_max, nt)

    @pl.when(nt == pl.num_programs(1) - 1)
    def _finalize():
        # Hoisted bn3 shift + ReLU, then the FC head (runs once per batch).
        g = jnp.maximum(acc_ref[...] + s3_ref[...], 0.0)             # (1, 1024)
        f = jnp.dot(g.astype(jnp.bfloat16), fw1_ref[...],
                    preferred_element_type=jnp.float32) + fs1_ref[...]
        f = jnp.maximum(f, 0.0)
        f = jnp.dot(f.astype(jnp.bfloat16), fw2_ref[...],
                    preferred_element_type=jnp.float32) + fs2_ref[...]
        f = jnp.maximum(f, 0.0)
        o_ref[0] = jnp.dot(f.astype(jnp.bfloat16), fw3_ref[...],
                           preferred_element_type=jnp.float32) + fs3_ref[...]


def _trunk_chain_kernel(x_ref, w1_ref, s1_ref, w2_ref, s2_ref, w3_ref, s3_ref,
                        o_ref, acc_ref):
    """Trunk conv chain (per-batch conv1 weight carries the folded STN transform);
    final layer has no ReLU, and its bn3 shift is hoisted past the max."""
    nt = pl.program_id(1)
    tile_max = _chain_body(x_ref[0], w1_ref[0], s1_ref, w2_ref, s2_ref, w3_ref)
    _accumulate_max(acc_ref, tile_max, nt)

    @pl.when(nt == pl.num_programs(1) - 1)
    def _finalize():
        o_ref[0] = acc_ref[...] + s3_ref[...]


# ---------------------------------------------------------------------------
# Wrappers (pallas_call plumbing)
# ---------------------------------------------------------------------------

def _choose_tile(n):
    """One tile for small N; otherwise the multiple of 8 in [_TILE_CAP//2, _TILE_CAP]
    that minimizes last-tile padding (picked from N, not a fixed constant)."""
    if n <= _TILE_CAP:
        return max(8, -(-n // 8) * 8)
    best_tile, best_pad = _TILE_CAP, (-n) % _TILE_CAP
    for t in range(_TILE_CAP, _TILE_CAP // 2 - 1, -8):
        pad = (-n) % t
        if pad < best_pad:
            best_tile, best_pad = t, pad
            if pad == 0:
                break
    return best_tile


def _pad_points(x_nc, tile):
    """Pad (B, N, C) along N to a multiple of `tile` by repeating the last point
    (duplicates do not change a global max)."""
    B, N, C = x_nc.shape
    pad = (-N) % tile
    if pad:
        x_nc = jnp.concatenate(
            [x_nc, jnp.broadcast_to(x_nc[:, -1:, :], (B, pad, C))], axis=1)
    return x_nc


def _compiler_params():
    # TODO(synk): for B == 1 on v7x, add a parallel grid axis over halves of the 1024
    # output channels so both TensorCores are fed.
    return pltpu.CompilerParams(
        dimension_semantics=("parallel", "arbitrary"),
        vmem_limit_bytes=_VMEM_LIMIT)


def stn_chain(x_nc, p, *, tile):
    """x_nc: (B, Np, 3) f32 (Np a multiple of `tile`) -> (B, 9) f32 (pre-identity)."""
    B, Np, _ = x_nc.shape
    n_tiles = Np // tile
    const = lambda b, nt: (0, 0)
    out = pl.pallas_call(
        _stn_chain_kernel,
        out_shape=jax.ShapeDtypeStruct((B, 1, 128), jnp.float32),
        grid=(B, n_tiles),
        in_specs=[
            pl.BlockSpec((1, tile, 3), lambda b, nt: (b, nt, 0)),
            pl.BlockSpec((3, 64), const),          # shared 2-D w1 (no per-batch broadcast)
            pl.BlockSpec((1, 64), const),
            pl.BlockSpec((64, 128), const),
            pl.BlockSpec((1, 128), const),
            pl.BlockSpec((128, 1024), const),
            pl.BlockSpec((1, 1024), const),
            pl.BlockSpec((1024, 512), const),
            pl.BlockSpec((1, 512), const),
            pl.BlockSpec((512, 256), const),
            pl.BlockSpec((1, 256), const),
            pl.BlockSpec((256, 128), const),       # fc3 padded to 128 lanes
            pl.BlockSpec((1, 128), const),
        ],
        out_specs=pl.BlockSpec((1, 1, 128), lambda b, nt: (b, 0, 0)),
        scratch_shapes=[pltpu.VMEM((1, 1024), jnp.float32)],
        compiler_params=_compiler_params(),
    )(x_nc, p["stn_w1"], p["stn_s1"], p["stn_w2"], p["stn_s2"],
      p["stn_w3"], p["stn_s3"],
      p["stn_fc1_w"], p["stn_fc1_s"], p["stn_fc2_w"], p["stn_fc2_s"],
      p["stn_fc3_w"], p["stn_fc3_s"])
    return out.reshape(B, 128)[:, :9]


def trunk_chain(x_nc, w1_eff, p, *, tile):
    """x_nc: (B, Np, 3) f32; w1_eff: (B, 3, 64) f32 (trans folded per batch) -> (B, 1024)."""
    B, Np, _ = x_nc.shape
    n_tiles = Np // tile
    const = lambda b, nt: (0, 0)
    out = pl.pallas_call(
        _trunk_chain_kernel,
        out_shape=jax.ShapeDtypeStruct((B, 1, 1024), jnp.float32),
        grid=(B, n_tiles),
        in_specs=[
            pl.BlockSpec((1, tile, 3), lambda b, nt: (b, nt, 0)),
            pl.BlockSpec((1, 3, 64), lambda b, nt: (b, 0, 0)),
            pl.BlockSpec((1, 64), const),
            pl.BlockSpec((64, 128), const),
            pl.BlockSpec((1, 128), const),
            pl.BlockSpec((128, 1024), const),
            pl.BlockSpec((1, 1024), const),
        ],
        out_specs=pl.BlockSpec((1, 1, 1024), lambda b, nt: (b, 0, 0)),
        scratch_shapes=[pltpu.VMEM((1, 1024), jnp.float32)],
        compiler_params=_compiler_params(),
    )(x_nc, w1_eff, p["s1"], p["w2"], p["s2"], p["w3"], p["s3"])
    return out.reshape(B, 1024)


# ---------------------------------------------------------------------------
# Parameter initialization (deterministic, PyTorch-like), with BN/bias folding
# ---------------------------------------------------------------------------

def _init_conv_or_linear(key, cin, cout):
    k1, k2 = jax.random.split(key)
    bound = 1.0 / math.sqrt(cin)
    w = jax.random.uniform(k1, (cout, cin), jnp.float32, -bound, bound)
    b = jax.random.uniform(k2, (cout,), jnp.float32, -bound, bound)
    return w, b


def _init_bn(key, c, eps=1e-5):
    k1, k2, k3, k4 = jax.random.split(key, 4)
    gamma = jax.random.uniform(k1, (c,), jnp.float32, 0.5, 1.5)
    beta = 0.1 * jax.random.normal(k2, (c,), jnp.float32)
    running_mean = 0.1 * jax.random.normal(k3, (c,), jnp.float32)
    running_var = jax.random.uniform(k4, (c,), jnp.float32, 0.5, 1.5)
    scale = gamma / jnp.sqrt(running_var + eps)
    shift = beta - running_mean * scale
    return scale, shift


def _fold(w, b, scale, shift):
    """Fold eval-mode BN + bias into a (Cin, Cout) weight and a (1, Cout) shift."""
    w_f = (w * scale[:, None]).T
    s_f = (b * scale + shift)[None, :]
    return w_f, s_f


def init_params(key):
    # TODO(synk): BatchNorm is eval-mode only (running stats folded); training-mode
    # batch statistics are not implemented.
    ks = iter(jax.random.split(key, 24))
    p = {}

    def folded(cin, cout, dtype):
        w, b = _init_conv_or_linear(next(ks), cin, cout)
        s, t = _init_bn(next(ks), cout)
        wf, sf = _fold(w, b, s, t)
        return wf.astype(dtype), sf

    # ---- STN3d ----
    p["stn_w1"], p["stn_s1"] = folded(3, 64, jnp.float32)        # layer 1 stays f32 (VPU)
    p["stn_w2"], p["stn_s2"] = folded(64, 128, jnp.bfloat16)
    p["stn_w3"], p["stn_s3"] = folded(128, 1024, jnp.bfloat16)
    p["stn_fc1_w"], p["stn_fc1_s"] = folded(1024, 512, jnp.bfloat16)
    p["stn_fc2_w"], p["stn_fc2_s"] = folded(512, 256, jnp.bfloat16)
    w, b = _init_conv_or_linear(next(ks), 256, 9)                # fc3: no BN
    fc3_w = jnp.zeros((256, 128), jnp.float32).at[:, :9].set(w.T)   # pad to 128 lanes
    fc3_s = jnp.zeros((1, 128), jnp.float32).at[:, :9].set(b[None, :])
    p["stn_fc3_w"], p["stn_fc3_s"] = fc3_w.astype(jnp.bfloat16), fc3_s

    # ---- PointNetfeat trunk ----
    p["w1"], p["s1"] = folded(3, 64, jnp.float32)                # f32; trans folded per batch
    p["w2"], p["s2"] = folded(64, 128, jnp.bfloat16)
    p["w3"], p["s3"] = folded(128, 1024, jnp.bfloat16)
    return p


# ---------------------------------------------------------------------------
# Forward pass: PointNetfeat(global_feat=True, feature_transform=False)
# ---------------------------------------------------------------------------

def pointnetfeat_forward(x, p):
    """x: (B, 3, N) f32 -> (global_feat (B, 1024) f32, trans (B, 3, 3) f32, None)."""
    B, _, N = x.shape
    tile = _choose_tile(N)
    x_nc = _pad_points(jnp.transpose(x, (0, 2, 1)).astype(jnp.float32), tile)  # (B, Np, 3)

    # --- STN3d: single fused pallas_call (conv chain + max + FC head) ---
    fc_out = stn_chain(x_nc, p, tile=tile)                                      # (B, 9)
    trans = (fc_out + jnp.eye(3, dtype=jnp.float32).reshape(1, 9)).reshape(B, 3, 3)

    # --- Fold the 3x3 transform into the trunk conv1 weight (f32, ~576 FLOP/batch) ---
    # x_nc @ trans @ W1  ==  x_nc @ (trans @ W1)
    w1_eff = jnp.einsum("bij,jk->bik", trans, p["w1"])                           # (B, 3, 64)

    # --- Trunk: single fused pallas_call (conv chain + max) ---
    g = trunk_chain(x_nc, w1_eff, p, tile=tile)                                  # (B, 1024)
    return g, trans, None


# ---------------------------------------------------------------------------

if __name__ == "__main__":
    key = jax.random.PRNGKey(0)
    k_param, k_data = jax.random.split(key)

    params = init_params(k_param)

    B, N = 2, 16
    x = jax.random.normal(k_data, (B, 3, N), jnp.float32)

    fwd = jax.jit(pointnetfeat_forward)
    global_feat, trans, trans_feat = fwd(x, params)
    jax.block_until_ready(global_feat)
    jax.block_until_ready(trans)

    assert global_feat.shape == (B, 1024) and global_feat.dtype == jnp.float32
    assert trans.shape == (B, 3, 3)
    assert trans_feat is None
    assert bool(jnp.all(jnp.isfinite(global_feat)))
    assert bool(jnp.all(jnp.isfinite(trans)))
    print("KERNEL_OK")
</pallas_src>

<mosaic_0001>
module attributes {stable_mosaic.version = 11 : i64} {
  func.func @_stn_chain_kernel(%arg0: i32, %arg1: i32, %arg2: memref<1x16x3xf32, #tpu.memory_space<vmem>>, %arg3: memref<3x64xf32, #tpu.memory_space<vmem>>, %arg4: memref<1x64xf32, #tpu.memory_space<vmem>>, %arg5: memref<64x128xbf16, #tpu.memory_space<vmem>>, %arg6: memref<1x128xf32, #tpu.memory_space<vmem>>, %arg7: memref<128x1024xbf16, #tpu.memory_space<vmem>>, %arg8: memref<1x1024xf32, #tpu.memory_space<vmem>>, %arg9: memref<1024x512xbf16, #tpu.memory_space<vmem>>, %arg10: memref<1x512xf32, #tpu.memory_space<vmem>>, %arg11: memref<512x256xbf16, #tpu.memory_space<vmem>>, %arg12: memref<1x256xf32, #tpu.memory_space<vmem>>, %arg13: memref<256x128xbf16, #tpu.memory_space<vmem>>, %arg14: memref<1x128xf32, #tpu.memory_space<vmem>>, %arg15: memref<1x1x128xf32, #tpu.memory_space<vmem>>, %arg16: memref<1x1024xf32, #tpu.memory_space<vmem>>) attributes {dimension_semantics = [#tpu.dimension_semantics<parallel>, #tpu.dimension_semantics<arbitrary>], iteration_bounds = array<i64: 2, 1>, scalar_prefetch = 0 : i64, scratch_operands = 1 : i64, tpu.core_type = #tpu.core_type<tc>, window_params = [{transform_indices = @transform_0, window_bounds = array<i64: 1, 16, 3>}, {pipeline_mode = #tpu.pipeline_mode<synchronous>, transform_indices = @transform_1, window_bounds = array<i64: 3, 64>}, {pipeline_mode = #tpu.pipeline_mode<synchronous>, transform_indices = @transform_2, window_bounds = array<i64: 1, 64>}, {pipeline_mode = #tpu.pipeline_mode<synchronous>, transform_indices = @transform_3, window_bounds = array<i64: 64, 128>}, {pipeline_mode = #tpu.pipeline_mode<synchronous>, transform_indices = @transform_4, window_bounds = array<i64: 1, 128>}, {pipeline_mode = #tpu.pipeline_mode<synchronous>, transform_indices = @transform_5, window_bounds = array<i64: 128, 1024>}, {pipeline_mode = #tpu.pipeline_mode<synchronous>, transform_indices = @transform_6, window_bounds = array<i64: 1, 1024>}, {pipeline_mode = #tpu.pipeline_mode<synchronous>, transform_indices = @transform_7, window_bounds = array<i64: 1024, 512>}, {pipeline_mode = #tpu.pipeline_mode<synchronous>, transform_indices = @transform_8, window_bounds = array<i64: 1, 512>}, {pipeline_mode = #tpu.pipeline_mode<synchronous>, transform_indices = @transform_9, window_bounds = array<i64: 512, 256>}, {pipeline_mode = #tpu.pipeline_mode<synchronous>, transform_indices = @transform_10, window_bounds = array<i64: 1, 256>}, {pipeline_mode = #tpu.pipeline_mode<synchronous>, transform_indices = @transform_11, window_bounds = array<i64: 256, 128>}, {pipeline_mode = #tpu.pipeline_mode<synchronous>, transform_indices = @transform_12, window_bounds = array<i64: 1, 128>}, {transform_indices = @transform_13, window_bounds = array<i64: 1, 1, 128>}]} {
    %c0 = arith.constant 0 : index
    %c0_0 = arith.constant 0 : index
    %c0_1 = arith.constant 0 : index
    %0 = vector.load %arg2[%c0, %c0_0, %c0_1] : memref<1x16x3xf32, #tpu.memory_space<vmem>>, vector<1x16x3xf32>
    %1 = vector.shape_cast %0 : vector<1x16x3xf32> to vector<16x3xf32>
    %c0_2 = arith.constant 0 : index
    %c0_3 = arith.constant 0 : index
    %2 = vector.load %arg3[%c0_2, %c0_3] : memref<3x64xf32, #tpu.memory_space<vmem>>, vector<3x64xf32>
    %3 = vector.extract_strided_slice %1 {offsets = [0, 0], sizes = [16, 1], strides = [1, 1]} : vector<16x3xf32> to vector<16x1xf32>
    %4 = vector.extract_strided_slice %2 {offsets = [0, 0], sizes = [1, 64], strides = [1, 1]} : vector<3x64xf32> to vector<1x64xf32>
    %5 = vector.broadcast %3 : vector<16x1xf32> to vector<16x64xf32>
    %6 = vector.broadcast %4 : vector<1x64xf32> to vector<16x64xf32>
    %7 = arith.mulf %5, %6 : vector<16x64xf32>
    %8 = vector.extract_strided_slice %1 {offsets = [0, 1], sizes = [16, 1], strides = [1, 1]} : vector<16x3xf32> to vector<16x1xf32>
    %9 = vector.extract_strided_slice %2 {offsets = [1, 0], sizes = [1, 64], strides = [1, 1]} : vector<3x64xf32> to vector<1x64xf32>
    %10 = vector.broadcast %8 : vector<16x1xf32> to vector<16x64xf32>
    %11 = vector.broadcast %9 : vector<1x64xf32> to vector<16x64xf32>
    %12 = arith.mulf %10, %11 : vector<16x64xf32>
    %13 = arith.addf %7, %12 : vector<16x64xf32>
    %14 = vector.extract_strided_slice %1 {offsets = [0, 2], sizes = [16, 1], strides = [1, 1]} : vector<16x3xf32> to vector<16x1xf32>
    %15 = vector.extract_strided_slice %2 {offsets = [2, 0], sizes = [1, 64], strides = [1, 1]} : vector<3x64xf32> to vector<1x64xf32>
    %16 = vector.broadcast %14 : vector<16x1xf32> to vector<16x64xf32>
    %17 = vector.broadcast %15 : vector<1x64xf32> to vector<16x64xf32>
    %18 = arith.mulf %16, %17 : vector<16x64xf32>
    %19 = arith.addf %13, %18 : vector<16x64xf32>
    %c0_4 = arith.constant 0 : index
    %c0_5 = arith.constant 0 : index
    %20 = vector.load %arg4[%c0_4, %c0_5] : memref<1x64xf32, #tpu.memory_space<vmem>>, vector<1x64xf32>
    %21 = vector.broadcast %20 : vector<1x64xf32> to vector<16x64xf32>
    %22 = arith.addf %19, %21 : vector<16x64xf32>
    %cst = arith.constant 0.000000e+00 : f32
    %23 = vector.broadcast %cst : f32 to vector<16x64xf32>
    %24 = arith.maximumf %22, %23 : vector<16x64xf32>
    %25 = arith.truncf %24 : vector<16x64xf32> to vector<16x64xbf16>
    %c0_6 = arith.constant 0 : index
    %c0_7 = arith.constant 0 : index
    %26 = vector.load %arg5[%c0_6, %c0_7] : memref<64x128xbf16, #tpu.memory_space<vmem>>, vector<64x128xbf16>
    %cst_8 = arith.constant dense<0.000000e+00> : vector<16x128xf32>
    %27 = tpu.matmul %25, %26, %cst_8 {dimension_numbers = #tpu.dot_dimension_numbers<[1], [0], [0], [1], [0, 0, 1, 1], [], []>} : vector<16x64xbf16>, vector<64x128xbf16>, vector<16x128xf32> -> vector<16x128xf32>
    %c0_9 = arith.constant 0 : index
    %c0_10 = arith.constant 0 : index
    %28 = vector.load %arg6[%c0_9, %c0_10] : memref<1x128xf32, #tpu.memory_space<vmem>>, vector<1x128xf32>
    %29 = vector.broadcast %28 : vector<1x128xf32> to vector<16x128xf32>
    %30 = arith.addf %27, %29 : vector<16x128xf32>
    %cst_11 = arith.constant 0.000000e+00 : f32
    %31 = vector.broadcast %cst_11 : f32 to vector<16x128xf32>
    %32 = arith.maximumf %30, %31 : vector<16x128xf32>
    %33 = arith.truncf %32 : vector<16x128xf32> to vector<16x128xbf16>
    %c0_12 = arith.constant 0 : index
    %c0_13 = arith.constant 0 : index
    %34 = vector.load %arg7[%c0_12, %c0_13] : memref<128x1024xbf16, #tpu.memory_space<vmem>>, vector<128x1024xbf16>
    %cst_14 = arith.constant dense<0.000000e+00> : vector<16x1024xf32>
    %35 = tpu.matmul %33, %34, %cst_14 {dimension_numbers = #tpu.dot_dimension_numbers<[1], [0], [0], [1], [0, 0, 1, 1], [], []>} : vector<16x128xbf16>, vector<128x1024xbf16>, vector<16x1024xf32> -> vector<16x1024xf32>
    %cst_15 = arith.constant dense<0xFF800000> : vector<1024xf32>
    %36 = vector.multi_reduction <maximumf>, %35, %cst_15 [0] : vector<16x1024xf32> to vector<1024xf32>
    %37 = vector.shape_cast %36 : vector<1024xf32> to vector<1x1024xf32>
    %c0_i32 = arith.constant 0 : i32
    %38 = arith.cmpi eq, %arg1, %c0_i32 : i32
    %39 = arith.extui %38 : i1 to i32
    %c0_i32_16 = arith.constant 0 : i32
    %40 = arith.cmpi ne, %39, %c0_i32_16 : i32
    scf.if %40 {
      %c0_21 = arith.constant 0 : index
      %c0_22 = arith.constant 0 : index
      %47 = vector.load %arg16[%c0_21, %c0_22] : memref<1x1024xf32, #tpu.memory_space<vmem>>, vector<1x1024xf32>
      tpu.vector_store %arg16[%c0_21, %c0_22], %37 {strides = array<i32>} : memref<1x1024xf32, #tpu.memory_space<vmem>>, vector<1x1024xf32>,
    } else {
    }
    %c0_i32_17 = arith.constant 0 : i32
    %41 = arith.cmpi sgt, %arg1, %c0_i32_17 : i32
    %42 = arith.extui %41 : i1 to i32
    %c0_i32_18 = arith.constant 0 : i32
    %43 = arith.cmpi ne, %42, %c0_i32_18 : i32
    scf.if %43 {
      %c0_21 = arith.constant 0 : index
      %c0_22 = arith.constant 0 : index
      %47 = vector.load %arg16[%c0_21, %c0_22] : memref<1x1024xf32, #tpu.memory_space<vmem>>, vector<1x1024xf32>
      %48 = arith.maximumf %47, %37 : vector<1x1024xf32>
      %c0_23 = arith.constant 0 : index
      %c0_24 = arith.constant 0 : index
      %49 = vector.load %arg16[%c0_23, %c0_24] : memref<1x1024xf32, #tpu.memory_space<vmem>>, vector<1x1024xf32>
      tpu.vector_store %arg16[%c0_23, %c0_24], %48 {strides = array<i32>} : memref<1x1024xf32, #tpu.memory_space<vmem>>, vector<1x1024xf32>,
    } else {
    }
    %c0_i32_19 = arith.constant 0 : i32
    %44 = arith.cmpi eq, %arg1, %c0_i32_19 : i32
    %45 = arith.extui %44 : i1 to i32
    %c0_i32_20 = arith.constant 0 : i32
    %46 = arith.cmpi ne, %45, %c0_i32_20 : i32
    scf.if %46 {
      %c0_21 = arith.constant 0 : index
      %c0_22 = arith.constant 0 : index
      %47 = vector.load %arg16[%c0_21, %c0_22] : memref<1x1024xf32, #tpu.memory_space<vmem>>, vector<1x1024xf32>
      %c0_23 = arith.constant 0 : index
      %c0_24 = arith.constant 0 : index
      %48 = vector.load %arg8[%c0_23, %c0_24] : memref<1x1024xf32, #tpu.memory_space<vmem>>, vector<1x1024xf32>
      %49 = arith.addf %47, %48 : vector<1x1024xf32>
      %cst_25 = arith.constant 0.000000e+00 : f32
      %50 = vector.broadcast %cst_25 : f32 to vector<1x1024xf32>
      %51 = arith.maximumf %49, %50 : vector<1x1024xf32>
      %52 = arith.truncf %51 : vector<1x1024xf32> to vector<1x1024xbf16>
      %c0_26 = arith.constant 0 : index
      %c0_27 = arith.constant 0 : index
      %53 = vector.load %arg9[%c0_26, %c0_27] : memref<1024x512xbf16, #tpu.memory_space<vmem>>, vector<1024x512xbf16>
      %cst_28 = arith.constant dense<0.000000e+00> : vector<1x512xf32>
      %54 = tpu.matmul %52, %53, %cst_28 {dimension_numbers = #tpu.dot_dimension_numbers<[1], [0], [0], [1], [0, 0, 1, 1], [], []>} : vector<1x1024xbf16>, vector<1024x512xbf16>, vector<1x512xf32> -> vector<1x512xf32>
      %c0_29 = arith.constant 0 : index
      %c0_30 = arith.constant 0 : index
      %55 = vector.load %arg10[%c0_29, %c0_30] : memref<1x512xf32, #tpu.memory_space<vmem>>, vector<1x512xf32>
      %56 = arith.addf %54, %55 : vector<1x512xf32>
      %cst_31 = arith.constant 0.000000e+00 : f32
      %57 = vector.broadcast %cst_31 : f32 to vector<1x512xf32>
      %58 = arith.maximumf %56, %57 : vector<1x512xf32>
      %59 = arith.truncf %58 : vector<1x512xf32> to vector<1x512xbf16>
      %c0_32 = arith.constant 0 : index
      %c0_33 = arith.constant 0 : index
      %60 = vector.load %arg11[%c0_32, %c0_33] : memref<512x256xbf16, #tpu.memory_space<vmem>>, vector<512x256xbf16>
      %cst_34 = arith.constant dense<0.000000e+00> : vector<1x256xf32>
      %61 = tpu.matmul %59, %60, %cst_34 {dimension_numbers = #tpu.dot_dimension_numbers<[1], [0], [0], [1], [0, 0, 1, 1], [], []>} : vector<1x512xbf16>, vector<512x256xbf16>, vector<1x256xf32> -> vector<1x256xf32>
      %c0_35 = arith.constant 0 : index
      %c0_36 = arith.constant 0 : index
      %62 = vector.load %arg12[%c0_35, %c0_36] : memref<1x256xf32, #tpu.memory_space<vmem>>, vector<1x256xf32>
      %63 = arith.addf %61, %62 : vector<1x256xf32>
      %cst_37 = arith.constant 0.000000e+00 : f32
      %64 = vector.broadcast %cst_37 : f32 to vector<1x256xf32>
      %65 = arith.maximumf %63, %64 : vector<1x256xf32>
      %66 = arith.truncf %65 : vector<1x256xf32> to vector<1x256xbf16>
      %c0_38 = arith.constant 0 : index
      %c0_39 = arith.constant 0 : index
      %67 = vector.load %arg13[%c0_38, %c0_39] : memref<256x128xbf16, #tpu.memory_space<vmem>>, vector<256x128xbf16>
      %cst_40 = arith.constant dense<0.000000e+00> : vector<1x128xf32>
      %68 = tpu.matmul %66, %67, %cst_40 {dimension_numbers = #tpu.dot_dimension_numbers<[1], [0], [0], [1], [0, 0, 1, 1], [], []>} : vector<1x256xbf16>, vector<256x128xbf16>, vector<1x128xf32> -> vector<1x128xf32>
      %c0_41 = arith.constant 0 : index
      %c0_42 = arith.constant 0 : index
      %69 = vector.load %arg14[%c0_41, %c0_42] : memref<1x128xf32, #tpu.memory_space<vmem>>, vector<1x128xf32>
      %70 = arith.addf %68, %69 : vector<1x128xf32>
      %c0_43 = arith.constant 0 : index
      %c0_44 = arith.constant 0 : index
      %c0_45 = arith.constant 0 : index
      %71 = vector.load %arg15[%c0_43, %c0_44, %c0_45] : memref<1x1x128xf32, #tpu.memory_space<vmem>>, vector<1x1x128xf32>
      %72 = vector.shape_cast %71 : vector<1x1x128xf32> to vector<1x128xf32>
      %73 = vector.shape_cast %70 : vector<1x128xf32> to vector<1x1x128xf32>
      tpu.vector_store %arg15[%c0_43, %c0_44, %c0_45], %73 {strides = array<i32>} : memref<1x1x128xf32, #tpu.memory_space<vmem>>, vector<1x1x128xf32>,
    } else {
    }
    return
  }
  func.func @transform_0(%arg0: i32, %arg1: i32) -> (i32, i32, i32) {
    %c0_i32 = arith.constant 0 : i32
    %c0_i32_0 = arith.constant 0 : i32
    return %arg0, %arg1, %c0_i32 : i32, i32, i32
  }
  func.func @transform_1(%arg0: i32, %arg1: i32) -> (i32, i32) {
    %c0_i32 = arith.constant 0 : i32
    %c0_i32_0 = arith.constant 0 : i32
    %c0_i32_1 = arith.constant 0 : i32
    return %c0_i32, %c0_i32_0 : i32, i32
  }
  func.func @transform_2(%arg0: i32, %arg1: i32) -> (i32, i32) {
    %c0_i32 = arith.constant 0 : i32
    %c0_i32_0 = arith.constant 0 : i32
    %c0_i32_1 = arith.constant 0 : i32
    return %c0_i32, %c0_i32_0 : i32, i32
  }
  func.func @transform_3(%arg0: i32, %arg1: i32) -> (i32, i32) {
    %c0_i32 = arith.constant 0 : i32
    %c0_i32_0 = arith.constant 0 : i32
    %c0_i32_1 = arith.constant 0 : i32
    return %c0_i32, %c0_i32_0 : i32, i32
  }
  func.func @transform_4(%arg0: i32, %arg1: i32) -> (i32, i32) {
    %c0_i32 = arith.constant 0 : i32
    %c0_i32_0 = arith.constant 0 : i32
    %c0_i32_1 = arith.constant 0 : i32
    return %c0_i32, %c0_i32_0 : i32, i32
  }
  func.func @transform_5(%arg0: i32, %arg1: i32) -> (i32, i32) {
    %c0_i32 = arith.constant 0 : i32
    %c0_i32_0 = arith.constant 0 : i32
    %c0_i32_1 = arith.constant 0 : i32
    return %c0_i32, %c0_i32_0 : i32, i32
  }
  func.func @transform_6(%arg0: i32, %arg1: i32) -> (i32, i32) {
    %c0_i32 = arith.constant 0 : i32
    %c0_i32_0 = arith.constant 0 : i32
    %c0_i32_1 = arith.constant 0 : i32
    return %c0_i32, %c0_i32_0 : i32, i32
  }
  func.func @transform_7(%arg0: i32, %arg1: i32) -> (i32, i32) {
    %c0_i32 = arith.constant 0 : i32
    %c0_i32_0 = arith.constant 0 : i32
    %c0_i32_1 = arith.constant 0 : i32
    return %c0_i32, %c0_i32_0 : i32, i32
  }
  func.func @transform_8(%arg0: i32, %arg1: i32) -> (i32, i32) {
    %c0_i32 = arith.constant 0 : i32
    %c0_i32_0 = arith.constant 0 : i32
    %c0_i32_1 = arith.constant 0 : i32
    return %c0_i32, %c0_i32_0 : i32, i32
  }
  func.func @transform_9(%arg0: i32, %arg1: i32) -> (i32, i32) {
    %c0_i32 = arith.constant 0 : i32
    %c0_i32_0 = arith.constant 0 : i32
    %c0_i32_1 = arith.constant 0 : i32
    return %c0_i32, %c0_i32_0 : i32, i32
  }
  func.func @transform_10(%arg0: i32, %arg1: i32) -> (i32, i32) {
    %c0_i32 = arith.constant 0 : i32
    %c0_i32_0 = arith.constant 0 : i32
    %c0_i32_1 = arith.constant 0 : i32
    return %c0_i32, %c0_i32_0 : i32, i32
  }
  func.func @transform_11(%arg0: i32, %arg1: i32) -> (i32, i32) {
    %c0_i32 = arith.constant 0 : i32
    %c0_i32_0 = arith.constant 0 : i32
    %c0_i32_1 = arith.constant 0 : i32
    return %c0_i32, %c0_i32_0 : i32, i32
  }
  func.func @transform_12(%arg0: i32, %arg1: i32) -> (i32, i32) {
    %c0_i32 = arith.constant 0 : i32
    %c0_i32_0 = arith.constant 0 : i32
    %c0_i32_1 = arith.constant 0 : i32
    return %c0_i32, %c0_i32_0 : i32, i32
  }
  func.func @transform_13(%arg0: i32, %arg1: i32) -> (i32, i32, i32) {
    %c0_i32 = arith.constant 0 : i32
    %c0_i32_0 = arith.constant 0 : i32
    %c0_i32_1 = arith.constant 0 : i32
    return %arg0, %c0_i32, %c0_i32_0 : i32, i32, i32
  }
}

module attributes {stable_mosaic.version = 11 : i64} {
  func.func @_trunk_chain_kernel(%arg0: i32, %arg1: i32, %arg2: memref<1x16x3xf32, #tpu.memory_space<vmem>>, %arg3: memref<1x3x64xf32, #tpu.memory_space<vmem>>, %arg4: memref<1x64xf32, #tpu.memory_space<vmem>>, %arg5: memref<64x128xbf16, #tpu.memory_space<vmem>>, %arg6: memref<1x128xf32, #tpu.memory_space<vmem>>, %arg7: memref<128x1024xbf16, #tpu.memory_space<vmem>>, %arg8: memref<1x1024xf32, #tpu.memory_space<vmem>>, %arg9: memref<1x1x1024xf32, #tpu.memory_space<vmem>>, %arg10: memref<1x1024xf32, #tpu.memory_space<vmem>>) attributes {dimension_semantics = [#tpu.dimension_semantics<parallel>, #tpu.dimension_semantics<arbitrary>], iteration_bounds = array<i64: 2, 1>, scalar_prefetch = 0 : i64, scratch_operands = 1 : i64, tpu.core_type = #tpu.core_type<tc>, window_params = [{transform_indices = @transform_0, window_bounds = array<i64: 1, 16, 3>}, {transform_indices = @transform_1, window_bounds = array<i64: 1, 3, 64>}, {pipeline_mode = #tpu.pipeline_mode<synchronous>, transform_indices = @transform_2, window_bounds = array<i64: 1, 64>}, {pipeline_mode = #tpu.pipeline_mode<synchronous>, transform_indices = @transform_3, window_bounds = array<i64: 64, 128>}, {pipeline_mode = #tpu.pipeline_mode<synchronous>, transform_indices = @transform_4, window_bounds = array<i64: 1, 128>}, {pipeline_mode = #tpu.pipeline_mode<synchronous>, transform_indices = @transform_5, window_bounds = array<i64: 128, 1024>}, {pipeline_mode = #tpu.pipeline_mode<synchronous>, transform_indices = @transform_6, window_bounds = array<i64: 1, 1024>}, {transform_indices = @transform_7, window_bounds = array<i64: 1, 1, 1024>}]} {
    %c0 = arith.constant 0 : index
    %c0_0 = arith.constant 0 : index
    %c0_1 = arith.constant 0 : index
    %0 = vector.load %arg2[%c0, %c0_0, %c0_1] : memref<1x16x3xf32, #tpu.memory_space<vmem>>, vector<1x16x3xf32>
    %1 = vector.shape_cast %0 : vector<1x16x3xf32> to vector<16x3xf32>
    %c0_2 = arith.constant 0 : index
    %c0_3 = arith.constant 0 : index
    %c0_4 = arith.constant 0 : index
    %2 = vector.load %arg3[%c0_2, %c0_3, %c0_4] : memref<1x3x64xf32, #tpu.memory_space<vmem>>, vector<1x3x64xf32>
    %3 = vector.shape_cast %2 : vector<1x3x64xf32> to vector<3x64xf32>
    %4 = vector.extract_strided_slice %1 {offsets = [0, 0], sizes = [16, 1], strides = [1, 1]} : vector<16x3xf32> to vector<16x1xf32>
    %5 = vector.extract_strided_slice %3 {offsets = [0, 0], sizes = [1, 64], strides = [1, 1]} : vector<3x64xf32> to vector<1x64xf32>
    %6 = vector.broadcast %4 : vector<16x1xf32> to vector<16x64xf32>
    %7 = vector.broadcast %5 : vector<1x64xf32> to vector<16x64xf32>
    %8 = arith.mulf %6, %7 : vector<16x64xf32>
    %9 = vector.extract_strided_slice %1 {offsets = [0, 1], sizes = [16, 1], strides = [1, 1]} : vector<16x3xf32> to vector<16x1xf32>
    %10 = vector.extract_strided_slice %3 {offsets = [1, 0], sizes = [1, 64], strides = [1, 1]} : vector<3x64xf32> to vector<1x64xf32>
    %11 = vector.broadcast %9 : vector<16x1xf32> to vector<16x64xf32>
    %12 = vector.broadcast %10 : vector<1x64xf32> to vector<16x64xf32>
    %13 = arith.mulf %11, %12 : vector<16x64xf32>
    %14 = arith.addf %8, %13 : vector<16x64xf32>
    %15 = vector.extract_strided_slice %1 {offsets = [0, 2], sizes = [16, 1], strides = [1, 1]} : vector<16x3xf32> to vector<16x1xf32>
    %16 = vector.extract_strided_slice %3 {offsets = [2, 0], sizes = [1, 64], strides = [1, 1]} : vector<3x64xf32> to vector<1x64xf32>
    %17 = vector.broadcast %15 : vector<16x1xf32> to vector<16x64xf32>
    %18 = vector.broadcast %16 : vector<1x64xf32> to vector<16x64xf32>
    %19 = arith.mulf %17, %18 : vector<16x64xf32>
    %20 = arith.addf %14, %19 : vector<16x64xf32>
    %c0_5 = arith.constant 0 : index
    %c0_6 = arith.constant 0 : index
    %21 = vector.load %arg4[%c0_5, %c0_6] : memref<1x64xf32, #tpu.memory_space<vmem>>, vector<1x64xf32>
    %22 = vector.broadcast %21 : vector<1x64xf32> to vector<16x64xf32>
    %23 = arith.addf %20, %22 : vector<16x64xf32>
    %cst = arith.constant 0.000000e+00 : f32
    %24 = vector.broadcast %cst : f32 to vector<16x64xf32>
    %25 = arith.maximumf %23, %24 : vector<16x64xf32>
    %26 = arith.truncf %25 : vector<16x64xf32> to vector<16x64xbf16>
    %c0_7 = arith.constant 0 : index
    %c0_8 = arith.constant 0 : index
    %27 = vector.load %arg5[%c0_7, %c0_8] : memref<64x128xbf16, #tpu.memory_space<vmem>>, vector<64x128xbf16>
    %cst_9 = arith.constant dense<0.000000e+00> : vector<16x128xf32>
    %28 = tpu.matmul %26, %27, %cst_9 {dimension_numbers = #tpu.dot_dimension_numbers<[1], [0], [0], [1], [0, 0, 1, 1], [], []>} : vector<16x64xbf16>, vector<64x128xbf16>, vector<16x128xf32> -> vector<16x128xf32>
    %c0_10 = arith.constant 0 : index
    %c0_11 = arith.constant 0 : index
    %29 = vector.load %arg6[%c0_10, %c0_11] : memref<1x128xf32, #tpu.memory_space<vmem>>, vector<1x128xf32>
    %30 = vector.broadcast %29 : vector<1x128xf32> to vector<16x128xf32>
    %31 = arith.addf %28, %30 : vector<16x128xf32>
    %cst_12 = arith.constant 0.000000e+00 : f32
    %32 = vector.broadcast %cst_12 : f32 to vector<16x128xf32>
    %33 = arith.maximumf %31, %32 : vector<16x128xf32>
    %34 = arith.truncf %33 : vector<16x128xf32> to vector<16x128xbf16>
    %c0_13 = arith.constant 0 : index
    %c0_14 = arith.constant 0 : index
    %35 = vector.load %arg7[%c0_13, %c0_14] : memref<128x1024xbf16, #tpu.memory_space<vmem>>, vector<128x1024xbf16>
    %cst_15 = arith.constant dense<0.000000e+00> : vector<16x1024xf32>
    %36 = tpu.matmul %34, %35, %cst_15 {dimension_numbers = #tpu.dot_dimension_numbers<[1], [0], [0], [1], [0, 0, 1, 1], [], []>} : vector<16x128xbf16>, vector<128x1024xbf16>, vector<16x1024xf32> -> vector<16x1024xf32>
    %cst_16 = arith.constant dense<0xFF800000> : vector<1024xf32>
    %37 = vector.multi_reduction <maximumf>, %36, %cst_16 [0] : vector<16x1024xf32> to vector<1024xf32>
    %38 = vector.shape_cast %37 : vector<1024xf32> to vector<1x1024xf32>
    %c0_i32 = arith.constant 0 : i32
    %39 = arith.cmpi eq, %arg1, %c0_i32 : i32
    %40 = arith.extui %39 : i1 to i32
    %c0_i32_17 = arith.constant 0 : i32
    %41 = arith.cmpi ne, %40, %c0_i32_17 : i32
    scf.if %41 {
      %c0_22 = arith.constant 0 : index
      %c0_23 = arith.constant 0 : index
      %48 = vector.load %arg10[%c0_22, %c0_23] : memref<1x1024xf32, #tpu.memory_space<vmem>>, vector<1x1024xf32>
      tpu.vector_store %arg10[%c0_22, %c0_23], %38 {strides = array<i32>} : memref<1x1024xf32, #tpu.memory_space<vmem>>, vector<1x1024xf32>,
    } else {
    }
    %c0_i32_18 = arith.constant 0 : i32
    %42 = arith.cmpi sgt, %arg1, %c0_i32_18 : i32
    %43 = arith.extui %42 : i1 to i32
    %c0_i32_19 = arith.constant 0 : i32
    %44 = arith.cmpi ne, %43, %c0_i32_19 : i32
    scf.if %44 {
      %c0_22 = arith.constant 0 : index
      %c0_23 = arith.constant 0 : index
      %48 = vector.load %arg10[%c0_22, %c0_23] : memref<1x1024xf32, #tpu.memory_space<vmem>>, vector<1x1024xf32>
      %49 = arith.maximumf %48, %38 : vector<1x1024xf32>
      %c0_24 = arith.constant 0 : index
      %c0_25 = arith.constant 0 : index
      %50 = vector.load %arg10[%c0_24, %c0_25] : memref<1x1024xf32, #tpu.memory_space<vmem>>, vector<1x1024xf32>
      tpu.vector_store %arg10[%c0_24, %c0_25], %49 {strides = array<i32>} : memref<1x1024xf32, #tpu.memory_space<vmem>>, vector<1x1024xf32>,
    } else {
    }
    %c0_i32_20 = arith.constant 0 : i32
    %45 = arith.cmpi eq, %arg1, %c0_i32_20 : i32
    %46 = arith.extui %45 : i1 to i32
    %c0_i32_21 = arith.constant 0 : i32
    %47 = arith.cmpi ne, %46, %c0_i32_21 : i32
    scf.if %47 {
      %c0_22 = arith.constant 0 : index
      %c0_23 = arith.constant 0 : index
      %48 = vector.load %arg10[%c0_22, %c0_23] : memref<1x1024xf32, #tpu.memory_space<vmem>>, vector<1x1024xf32>
      %c0_24 = arith.constant 0 : index
      %c0_25 = arith.constant 0 : index
      %49 = vector.load %arg8[%c0_24, %c0_25] : memref<1x1024xf32, #tpu.memory_space<vmem>>, vector<1x1024xf32>
      %50 = arith.addf %48, %49 : vector<1x1024xf32>
      %c0_26 = arith.constant 0 : index
      %c0_27 = arith.constant 0 : index
      %c0_28 = arith.constant 0 : index
      %51 = vector.load %arg9[%c0_26, %c0_27, %c0_28] : memref<1x1x1024xf32, #tpu.memory_space<vmem>>, vector<1x1x1024xf32>
      %52 = vector.shape_cast %51 : vector<1x1x1024xf32> to vector<1x1024xf32>
      %53 = vector.shape_cast %50 : vector<1x1024xf32> to vector<1x1x1024xf32>
      tpu.vector_store %arg9[%c0_26, %c0_27, %c0_28], %53 {strides = array<i32>} : memref<1x1x1024xf32, #tpu.memory_space<vmem>>, vector<1x1x1024xf32>,
    } else {
    }
    return
  }
  func.func @transform_0(%arg0: i32, %arg1: i32) -> (i32, i32, i32) {
    %c0_i32 = arith.constant 0 : i32
    %c0_i32_0 = arith.constant 0 : i32
    return %arg0, %arg1, %c0_i32 : i32, i32, i32
  }
  func.func @transform_1(%arg0: i32, %arg1: i32) -> (i32, i32, i32) {
    %c0_i32 = arith.constant 0 : i32
    %c0_i32_0 = arith.constant 0 : i32
    %c0_i32_1 = arith.constant 0 : i32
    return %arg0, %c0_i32, %c0_i32_0 : i32, i32, i32
  }
  func.func @transform_2(%arg0: i32, %arg1: i32) -> (i32, i32) {
    %c0_i32 = arith.constant 0 : i32
    %c0_i32_0 = arith.constant 0 : i32
    %c0_i32_1 = arith.constant 0 : i32
    return %c0_i32, %c0_i32_0 : i32, i32
  }
  func.func @transform_3(%arg0: i32, %arg1: i32) -> (i32, i32) {
    %c0_i32 = arith.constant 0 : i32
    %c0_i32_0 = arith.constant 0 : i32
    %c0_i32_1 = arith.constant 0 : i32
    return %c0_i32, %c0_i32_0 : i32, i32
  }
  func.func @transform_4(%arg0: i32, %arg1: i32) -> (i32, i32) {
    %c0_i32 = arith.constant 0 : i32
    %c0_i32_0 = arith.constant 0 : i32
    %c0_i32_1 = arith.constant 0 : i32
    return %c0_i32, %c0_i32_0 : i32, i32
  }
  func.func @transform_5(%arg0: i32, %arg1: i32) -> (i32, i32) {
    %c0_i32 = arith.constant 0 : i32
    %c0_i32_0 = arith.constant 0 : i32
    %c0_i32_1 = arith.constant 0 : i32
    return %c0_i32, %c0_i32_0 : i32, i32
  }
  func.func @transform_6(%arg0: i32, %arg1: i32) -> (i32, i32) {
    %c0_i32 = arith.constant 0 : i32
    %c0_i32_0 = arith.constant 0 : i32
    %c0_i32_1 = arith.constant 0 : i32
    return %c0_i32, %c0_i32_0 : i32, i32
  }
  func.func @transform_7(%arg0: i32, %arg1: i32) -> (i32, i32, i32) {
    %c0_i32 = arith.constant 0 : i32
    %c0_i32_0 = arith.constant 0 : i32
    %c0_i32_1 = arith.constant 0 : i32
    return %arg0, %c0_i32, %c0_i32_0 : i32, i32, i32
  }
}

</mosaic_0001>

<llo_original>
// kernel: pointnetfeat_forward.3
$region0: #{pointnetfeat_forward.3}
  #allocation0 [shape = 'u32[]', space=smem, size = 0x4, offset = 0x4, fixed_abs, tag = 'smem constant byte address 0x4 - core index']
  #allocation1 [shape = 'u32[144,128]{1,0:T(1,128)}', space=vmem, size = 0x12000, scoped, tag = 'internal scratch']
  #allocation2 [shape = 'f32[1,1024]{1,0:T(1,128)}', space=vmem, size = 0x1000, scoped, tag = 'scratch operand']
  %s0 = inlined_call_operand.vmem [shape: f32[2,16,3], index: 0, kind: input, shape index: {}]
  %s1 = inlined_call_operand.vmem [shape: f32[2,3,64], index: 1, kind: input, shape index: {}]
  %s2 = inlined_call_operand.vmem [shape: f32[1,64], index: 2, kind: input, shape index: {}]
  %s3 = inlined_call_operand.vmem [shape: bf16[64,128], index: 3, kind: input, shape index: {}]
  %s4 = inlined_call_operand.vmem [shape: f32[1,128], index: 4, kind: input, shape index: {}]
  %s5 = inlined_call_operand.vmem [shape: bf16[128,1024], index: 5, kind: input, shape index: {}]
  %s6 = inlined_call_operand.vmem [shape: f32[1,1024], index: 6, kind: input, shape index: {}]
  %s7 = inlined_call_operand.vmem [shape: f32[2,1,1024], index: 7, kind: output, shape index: {}]
  %s8 = sld [smem:[#allocation0]]
  $region73: #{pointnetfeat_forward.3} parent=0
    _
  %s10 = ssub.s32 1, %s8
  %s11 = scalar_select 0, %s10, %s8
  loop: start=0, step=1, limit=4
  $region2: #{pointnetfeat_forward.3} parent=0 // loop_pre_header
    _
  $region3: #{pointnetfeat_forward.3} parent=0 // loop_header
    %s13 = sphi 0, %s17
    %p14 = scmp.ge.s32.totalorder %s13, 4
    %s20 = sphi 0, %s32
    %s21 = sphi 0, %s28
    %s22 = sphi 0, %s20
    %s23 = sphi 0, %s21
    %s24 = sphi 0, %s22
    %s25 = sphi 0, %s23
    %s37 = sphi 0, %s39
    %s40 = sphi 0, %s37
    %s41 = sphi 0, %s40
    %s57 = sphi 0, %s41
    %s63 = sphi 0, %s65
    %s66 = sphi 0, %s63
    %s67 = sphi 0, %s66
    %s83 = sphi 0, %s67
    %s87 = sphi 0, %s87
    %s89 = sphi 0, %s87
    %s90 = sphi 0, %s89
    %s104 = sphi 0, %s90
    %s108 = sphi 0, %s108
    %s110 = sphi 0, %s108
    %s111 = sphi 0, %s110
    %s125 = sphi 0, %s111
    %s129 = sphi 0, %s129
    %s131 = sphi 0, %s129
    %s132 = sphi 0, %s131
    %s146 = sphi 0, %s132
    %s150 = sphi 0, %s150
    %s152 = sphi 0, %s150
    %s153 = sphi 0, %s152
    %s167 = sphi 0, %s153
    %s171 = sphi 0, %s171
    %s173 = sphi 0, %s171
    %s174 = sphi 0, %s173
    %s188 = sphi 0, %s174
    %s194 = sphi 0, %s196
    %s197 = sphi 0, %s194
    %s198 = sphi 0, %s197
    %s214 = sphi 0, %s198
  $region4: #{pointnetfeat_forward.3} parent=0 // loop_header_branch
    %16 = sbr.rel (%p14) target = $region8
  $region5: #{pointnetfeat_forward.3} parent=0 // loop_body
    %s18 = ssub.s32 %s13, 1
    %s19 = ssub.s32 %s13, 2
    %s26 = sadd.s32 1, %s21
    %p27 = scmp.ge.s32.totalorder %s26, 1
    %s28 = scalar_select %p27, 0, %s26
    %s29 = sadd.s32 1, %s20
    %s30 = scalar_select %p27, %s29, %s20
    %p31 = scmp.ge.s32.totalorder %s30, 2
    %s32 = scalar_select %p31, 0, %s30
    %s33 = ssub.s32 %s20, %s32
    %s34 = ssub.s32 %s21, %s28
    %s35 = sor.u32 %s33, %s34
    %p36 = scmp.eq.s32.totalorder %s35, 0
    %s38 = sadd.s32 %s37, 1
    %s39 = scalar_select %p36, %s37, %s38
    %p42 = pneg %p36
    %p43 = scmp.eq.s32.totalorder %s13, 1
    %p44 = por %p42, %p43
    %p45 = scmp.ne.s32.totalorder %s37, %s40
    %p46 = scmp.eq.s32.totalorder %s13, 0
    %p47 = por %p45, %p46
    %p48 = scmp.ne.s32.totalorder %s37, %s40
    %p49 = scmp.eq.s32.totalorder %s18, 1
    %p50 = por %p48, %p49
    %p51 = scmp.ne.s32.totalorder %s40, %s41
    %p52 = scmp.eq.s32.totalorder %s18, 0
    %p53 = por %p51, %p52
    %p54 = scmp.ne.s32.totalorder %s40, %s41
    %p55 = scmp.eq.s32.totalorder %s19, 1
    %p56 = por %p54, %p55
    %p58 = scmp.ne.s32.totalorder %s41, %s57
    %p59 = scmp.eq.s32.totalorder %s19, 0
    %p60 = por %p58, %p59
    %s61 = ssub.s32 %s20, %s32
    %p62 = scmp.eq.s32.totalorder %s61, 0
    %s64 = sadd.s32 %s63, 1
    %s65 = scalar_select %p62, %s63, %s64
    %p68 = pneg %p62
    %p69 = scmp.eq.s32.totalorder %s13, 1
    %p70 = por %p68, %p69
    %p71 = scmp.ne.s32.totalorder %s63, %s66
    %p72 = scmp.eq.s32.totalorder %s13, 0
    %p73 = por %p71, %p72
    %p74 = scmp.ne.s32.totalorder %s63, %s66
    %p75 = scmp.eq.s32.totalorder %s18, 1
    %p76 = por %p74, %p75
    %p77 = scmp.ne.s32.totalorder %s66, %s67
    %p78 = scmp.eq.s32.totalorder %s18, 0
    %p79 = por %p77, %p78
    %p80 = scmp.ne.s32.totalorder %s66, %s67
    %p81 = scmp.eq.s32.totalorder %s19, 1
    %p82 = por %p80, %p81
    %p84 = scmp.ne.s32.totalorder %s67, %s83
    %p85 = scmp.eq.s32.totalorder %s19, 0
    %p86 = por %p84, %p85
    %s88 = sadd.s32 %s87, 1
    %p91 = scmp.eq.s32.totalorder %s13, 1
    %p92 = scmp.ne.s32.totalorder %s87, %s89
    %p93 = scmp.eq.s32.totalorder %s13, 0
    %p94 = por %p92, %p93
    %p95 = scmp.ne.s32.totalorder %s87, %s89
    %p96 = scmp.eq.s32.totalorder %s18, 1
    %p97 = por %p95, %p96
    %p98 = scmp.ne.s32.totalorder %s89, %s90
    %p99 = scmp.eq.s32.totalorder %s18, 0
    %p100 = por %p98, %p99
    %p101 = scmp.ne.s32.totalorder %s89, %s90
    %p102 = scmp.eq.s32.totalorder %s19, 1
    %p103 = por %p101, %p102
    %p105 = scmp.ne.s32.totalorder %s90, %s104
    %p106 = scmp.eq.s32.totalorder %s19, 0
    %p107 = por %p105, %p106
    %s109 = sadd.s32 %s108, 1
    %p112 = scmp.eq.s32.totalorder %s13, 1
    %p113 = scmp.ne.s32.totalorder %s108, %s110
    %p114 = scmp.eq.s32.totalorder %s13, 0
    %p115 = por %p113, %p114
    %p116 = scmp.ne.s32.totalorder %s108, %s110
    %p117 = scmp.eq.s32.totalorder %s18, 1
    %p118 = por %p116, %p117
    %p119 = scmp.ne.s32.totalorder %s110, %s111
    %p120 = scmp.eq.s32.totalorder %s18, 0
    %p121 = por %p119, %p120
    %p122 = scmp.ne.s32.totalorder %s110, %s111
    %p123 = scmp.eq.s32.totalorder %s19, 1
    %p124 = por %p122, %p123
    %p126 = scmp.ne.s32.totalorder %s111, %s125
    %p127 = scmp.eq.s32.totalorder %s19, 0
    %p128 = por %p126, %p127
    %s130 = sadd.s32 %s129, 1
    %p133 = scmp.eq.s32.totalorder %s13, 1
    %p134 = scmp.ne.s32.totalorder %s129, %s131
    %p135 = scmp.eq.s32.totalorder %s13, 0
    %p136 = por %p134, %p135
    %p137 = scmp.ne.s32.totalorder %s129, %s131
    %p138 = scmp.eq.s32.totalorder %s18, 1
    %p139 = por %p137, %p138
    %p140 = scmp.ne.s32.totalorder %s131, %s132
    %p141 = scmp.eq.s32.totalorder %s18, 0
    %p142 = por %p140, %p141
    %p143 = scmp.ne.s32.totalorder %s131, %s132
    %p144 = scmp.eq.s32.totalorder %s19, 1
    %p145 = por %p143, %p144
    %p147 = scmp.ne.s32.totalorder %s132, %s146
    %p148 = scmp.eq.s32.totalorder %s19, 0
    %p149 = por %p147, %p148
    %s151 = sadd.s32 %s150, 1
    %p154 = scmp.eq.s32.totalorder %s13, 1
    %p155 = scmp.ne.s32.totalorder %s150, %s152
    %p156 = scmp.eq.s32.totalorder %s13, 0
    %p157 = por %p155, %p156
    %p158 = scmp.ne.s32.totalorder %s150, %s152
    %p159 = scmp.eq.s32.totalorder %s18, 1
    %p160 = por %p158, %p159
    %p161 = scmp.ne.s32.totalorder %s152, %s153
    %p162 = scmp.eq.s32.totalorder %s18, 0
    %p163 = por %p161, %p162
    %p164 = scmp.ne.s32.totalorder %s152, %s153
    %p165 = scmp.eq.s32.totalorder %s19, 1
    %p166 = por %p164, %p165
    %p168 = scmp.ne.s32.totalorder %s153, %s167
    %p169 = scmp.eq.s32.totalorder %s19, 0
    %p170 = por %p168, %p169
    %s172 = sadd.s32 %s171, 1
    %p175 = scmp.eq.s32.totalorder %s13, 1
    %p176 = scmp.ne.s32.totalorder %s171, %s173
    %p177 = scmp.eq.s32.totalorder %s13, 0
    %p178 = por %p176, %p177
    %p179 = scmp.ne.s32.totalorder %s171, %s173
    %p180 = scmp.eq.s32.totalorder %s18, 1
    %p181 = por %p179, %p180
    %p182 = scmp.ne.s32.totalorder %s173, %s174
    %p183 = scmp.eq.s32.totalorder %s18, 0
    %p184 = por %p182, %p183
    %p185 = scmp.ne.s32.totalorder %s173, %s174
    %p186 = scmp.eq.s32.totalorder %s19, 1
    %p187 = por %p185, %p186
    %p189 = scmp.ne.s32.totalorder %s174, %s188
    %p190 = scmp.eq.s32.totalorder %s19, 0
    %p191 = por %p189, %p190
    %s192 = ssub.s32 %s20, %s32
    %p193 = scmp.eq.s32.totalorder %s192, 0
    %s195 = sadd.s32 %s194, 1
    %s196 = scalar_select %p193, %s194, %s195
    %p199 = pneg %p193
    %p200 = scmp.eq.s32.totalorder %s13, 1
    %p201 = por %p199, %p200
    %p202 = scmp.ne.s32.totalorder %s194, %s197
    %p203 = scmp.eq.s32.totalorder %s13, 0
    %p204 = por %p202, %p203
    %p205 = scmp.ne.s32.totalorder %s194, %s197
    %p206 = scmp.eq.s32.totalorder %s18, 1
    %p207 = por %p205, %p206
    %p208 = scmp.ne.s32.totalorder %s197, %s198
    %p209 = scmp.eq.s32.totalorder %s18, 0
    %p210 = por %p208, %p209
    %p211 = scmp.ne.s32.totalorder %s197, %s198
    %p212 = scmp.eq.s32.totalorder %s19, 1
    %p213 = por %p211, %p212
    %p215 = scmp.ne.s32.totalorder %s198, %s214
    %p216 = scmp.eq.s32.totalorder %s19, 0
    %p217 = por %p215, %p216
    %p218 = scmp.le.s32.totalorder 1, %s13
    %p219 = scmp.lt.s32.totalorder %s13, 3
    %p220 = pnand %p218, %p219
    %p221 = pneg %p220
    // Predicated region
    $region9: #{pointnetfeat_forward.3} parent=5 // pred_check
      _
    $region10: #{pointnetfeat_forward.3} parent=5 // pred_check_branch
      %223 = sbr.rel (%p220) target = $region12
    $region11: #{pointnetfeat_forward.3} parent=5 // pred_region
      %s224 = ssub.s32 %s13, 1
      // Predicated region
      $region13: #{pointnetfeat_forward.3} parent=11 // pred_check
        %p225 = pneg %p100
      $region14: #{pointnetfeat_forward.3} parent=11 // pred_check_branch
        %227 = sbr.rel (%p225) target = $region16
      $region15: #{pointnetfeat_forward.3} parent=11 // pred_region
        _
      $region16: #{pointnetfeat_forward.3} parent=11 // pred_fallthru
        _
      // Predicated region
      $region17: #{pointnetfeat_forward.3} parent=11 // pred_check
        %p228 = pneg %p121
      $region18: #{pointnetfeat_forward.3} parent=11 // pred_check_branch
        %230 = sbr.rel (%p228) target = $region20
      $region19: #{pointnetfeat_forward.3} parent=11 // pred_region
        _
      $region20: #{pointnetfeat_forward.3} parent=11 // pred_fallthru
        _
      // Predicated region
      $region21: #{pointnetfeat_forward.3} parent=11 // pred_check
        %p231 = pneg %p142
      $region22: #{pointnetfeat_forward.3} parent=11 // pred_check_branch
        %233 = sbr.rel (%p231) target = $region24
      $region23: #{pointnetfeat_forward.3} parent=11 // pred_region
        _
      $region24: #{pointnetfeat_forward.3} parent=11 // pred_fallthru
        _
      // Predicated region
      $region25: #{pointnetfeat_forward.3} parent=11 // pred_check
        %p234 = pneg %p163
      $region26: #{pointnetfeat_forward.3} parent=11 // pred_check_branch
        %236 = sbr.rel (%p234) target = $region28
      $region27: #{pointnetfeat_forward.3} parent=11 // pred_region
        _
      $region28: #{pointnetfeat_forward.3} parent=11 // pred_fallthru
        _
      // Predicated region
      $region29: #{pointnetfeat_forward.3} parent=11 // pred_check
        %p237 = pneg %p184
      $region30: #{pointnetfeat_forward.3} parent=11 // pred_check_branch
        %239 = sbr.rel (%p237) target = $region32
      $region31: #{pointnetfeat_forward.3} parent=11 // pred_region
        _
      $region32: #{pointnetfeat_forward.3} parent=11 // pred_fallthru
        _
    $region12: #{pointnetfeat_forward.3} parent=5 // pred_fallthru
      _
    %p240 = scmp.lt.s32.totalorder %s13, 2
    // Predicated region
    $region33: #{pointnetfeat_forward.3} parent=5 // pred_check
      %p241 = pneg %p240
    $region34: #{pointnetfeat_forward.3} parent=5 // pred_check_branch
      %243 = sbr.rel (%p241) target = $region36
    $region35: #{pointnetfeat_forward.3} parent=5 // pred_region
      // Predicated region
      $region37: #{pointnetfeat_forward.3} parent=35 // pred_check
        %p244 = pneg %p47
      $region38: #{pointnetfeat_forward.3} parent=35 // pred_check_branch
        %246 = sbr.rel (%p244) target = $region40
      $region39: #{pointnetfeat_forward.3} parent=35 // pred_region
        %s247 = smul.u32 2, %s21
        %p248 = scmp.lt.s32.totalorder %s20, 1
        %s249 = scalar_select %p248, %s20, 1
        %p250 = scmp.lt.s32.totalorder %s247, 1
        %s251 = scalar_select %p250, %s247, 1
        %s252 = smul.addr %s249, 2
        %s253 = sadd.s32 %s251, %s252
        %s254 = smul.addr %s253, 8
        %s255 = scalar_lea.vmem %s0, %s254
        %s256 = smul.u32 2, %s21
      $region40: #{pointnetfeat_forward.3} parent=35 // pred_fallthru
        _
      // Predicated region
      $region41: #{pointnetfeat_forward.3} parent=35 // pred_check
        %p257 = pneg %p73
      $region42: #{pointnetfeat_forward.3} parent=35 // pred_check_branch
        %259 = sbr.rel (%p257) target = $region44
      $region43: #{pointnetfeat_forward.3} parent=35 // pred_region
        %p260 = scmp.lt.s32.totalorder %s20, 1
        %s261 = scalar_select %p260, %s20, 1
        %s262 = smul.addr %s261, 4
        %s263 = scalar_lea.vmem %s1, %s262
      $region44: #{pointnetfeat_forward.3} parent=35 // pred_fallthru
        _
    $region36: #{pointnetfeat_forward.3} parent=5 // pred_fallthru
      _
    %p264 = scmp.le.s32.totalorder 1, %s13
    %p265 = scmp.lt.s32.totalorder %s13, 3
    %p266 = pnand %p264, %p265
    %p267 = pneg %p266
    // Predicated region
    $region45: #{pointnetfeat_forward.3} parent=5 // pred_check
      _
    $region46: #{pointnetfeat_forward.3} parent=5 // pred_check_branch
      %269 = sbr.rel (%p266) target = $region48
    $region47: #{pointnetfeat_forward.3} parent=5 // pred_region
      %s270 = ssub.s32 %s13, 1
      %s271 = smul.u32 2, %s23
      %p272 = scmp.lt.s32.totalorder %s22, 1
      %s273 = scalar_select %p272, %s22, 1
      %p274 = scmp.lt.s32.totalorder %s271, 1
      %s275 = scalar_select %p274, %s271, 1
      %s276 = smul.addr %s273, 2
      %s277 = sadd.s32 %s275, %s276
      %s278 = smul.addr %s277, 8
      %s279 = scalar_lea.vmem %s0, %s278
      %p280 = pneg %p53
      %p281 = pneg %p50
      %p282 = scmp.lt.s32.totalorder %s22, 1
      %s283 = scalar_select %p282, %s22, 1
      %s284 = smul.addr %s283, 4
      %s285 = scalar_lea.vmem %s1, %s284
      %p286 = pneg %p79
      %p287 = pneg %p76
      %p288 = pneg %p100
      %p289 = pneg %p97
      %p290 = pneg %p121
      %p291 = pneg %p118
      %p292 = pneg %p142
      %p293 = pneg %p139
      %p294 = pneg %p163
      %p295 = pneg %p160
      %p296 = pneg %p184
      %p297 = pneg %p181
      %p298 = pneg %p210
      %p299 = pneg %p207
      %p300 = scmp.lt.s32.totalorder %s22, 1
      %s301 = scalar_select %p300, %s22, 1
      %s302 = smul.addr %s301, 8
      %s303 = scalar_lea.vmem %s7, %s302
      %s304 = smul.u32 2, %s23
      %p305 = scmp.lt.s32.totalorder %s22, 1
      %s306 = scalar_select %p305, %s22, 1
      %p307 = scmp.lt.s32.totalorder %s304, 1
      %s308 = scalar_select %p307, %s304, 1
      %s309 = smul.addr %s306, 2
      %s310 = sadd.s32 %s308, %s309
      %s311 = smul.addr %s310, 8
      %s312 = scalar_lea.vmem %s0, %s311
      %s313 = smul.u32 2, %s23
      %p314 = scmp.lt.s32.totalorder %s22, 1
      %s315 = scalar_select %p314, %s22, 1
      %s316 = smul.addr %s315, 4
      %s317 = scalar_lea.vmem %s1, %s316
      %p318 = scmp.lt.s32.totalorder %s22, 1
      %s319 = scalar_select %p318, %s22, 1
      %s320 = smul.addr %s319, 8
      %s321 = scalar_lea.vmem %s7, %s320
      %v323 = vld [vmem:[%s312] sm:$0xff]
      %v324 = vld [vmem:[%s312 + $0x8] sm:$0xff]
      %v325 = vld [vmem:[%s317] sm:$0x7]
      %327 = vset.pattern.permute.xlu0 0
      %328 = vperm.xlu0 %327, %v323
      %v329 = vpop.permute.xlu0 %328
      %332 = vset.pattern.permute.xlu0 0
      %333 = vperm.xlu0 %332, %v324
      %v334 = vpop.permute.xlu0 %333
      %v336 = vlaneseq
      %v337 = vshrl.u32 %v336, 7
      %v338 = vsub.s32 0, %v337
      %v339 = vrot.slane %v325, %v338
      %v340 = vmul.f32 %v329, %v339
      %v341 = vmul.f32 %v334, %v339
      %342 = vset.pattern.permute.xlu0 1
      %343 = vperm.xlu0 %342, %v323
      %v344 = vpop.permute.xlu0 %343
      %346 = vset.pattern.permute.xlu0 1
      %347 = vperm.xlu0 %346, %v324
      %v348 = vpop.permute.xlu0 %347
      %v350 = vlaneseq
      %v351 = vshrl.u32 %v350, 7
      %v352 = vsub.s32 1, %v351
      %v353 = vrot.slane %v325, %v352
      %v354 = vmul.f32 %v344, %v353
      %v355 = vmul.f32 %v348, %v353
      %v356 = vadd.f32 %v340, %v354
      %v357 = vadd.f32 %v341, %v355
      %358 = vset.pattern.permute.xlu0 2
      %359 = vperm.xlu0 %358, %v323
      %v360 = vpop.permute.xlu0 %359
      %362 = vset.pattern.permute.xlu0 2
      %363 = vperm.xlu0 %362, %v324
      %v364 = vpop.permute.xlu0 %363
      %v366 = vlaneseq
      %v367 = vshrl.u32 %v366, 7
      %v368 = vsub.s32 2, %v367
      %v369 = vrot.slane %v325, %v368
      %v370 = vmul.f32 %v360, %v369
      %v371 = vmul.f32 %v364, %v369
      %v372 = vadd.f32 %v356, %v370
      %v373 = vadd.f32 %v357, %v371
      %v374 = vld [vmem:[%s2] sm:$0x1]
      %v376 = vlaneseq
      %v377 = vshrl.u32 %v376, 7
      %v378 = vsub.s32 0, %v377
      %v379 = vrot.slane %v374, %v378
      %v381 = vadd.f32 %v372, %v379
      %v382 = vadd.f32 %v373, %v379
      %v383 = vmax.f32 %v381, 0.0
      %v384 = vmax.f32 %v382, 0.0
      %v385 = vpack.c.bf16 %v384, %v383
      %v386 = vld [vmem:[%s3] sm:$0xf]
      %v387 = vld [vmem:[%s3 + $0x4] sm:$0xf]
      %v388 = vld [vmem:[%s3 + $0x8] sm:$0xf]
      %v389 = vld [vmem:[%s3 + $0xc] sm:$0xf]
      %v390 = vld [vmem:[%s3 + $0x10] sm:$0xf]
      %v391 = vld [vmem:[%s3 + $0x14] sm:$0xf]
      %v392 = vld [vmem:[%s3 + $0x18] sm:$0xf]
      %v393 = vld [vmem:[%s3 + $0x1c] sm:$0xf]
      %v394 = vld [vmem:[%s4] sm:$0x1]
      %v396 = vlaneseq
      %v397 = vshrl.u32 %v396, 7
      %v398 = vsub.s32 0, %v397
      %v399 = vrot.slane %v394, %v398
      %v409 = vunpack.c.l.b16 %v386
      %v410 = vunpack.c.l.b16 %v387
      %v411 = vunpack.c.l.b16 %v388
      %v412 = vunpack.c.l.b16 %v389
      %v413 = vunpack.c.l.b16 %v390
      %v414 = vunpack.c.l.b16 %v391
      %v415 = vunpack.c.l.b16 %v392
      %v416 = vunpack.c.l.b16 %v393
      %v417 = vpack.c.b16 %v410, %v409
      %v418 = vpack.c.b16 %v412, %v411
      %v419 = vpack.c.b16 %v414, %v413
      %v420 = vpack.c.b16 %v416, %v415
      %vm425 = vcmask 523264
      %v427 = vsel %vm425, %v385, 0
      %429 = vmatprep.subr.bf16.mxu0 0
      %430 = vmatpush1.bf16.msra.mxu0 0
      %431 = vmatprep.subr.bf16.mxu0 0
      %432 = vmatpush1.bf16.msra.mxu0 0
      %433 = vmatprep.subr.bf16.mxu0 0
      %434 = vmatpush1.bf16.msra.mxu0 0
      %435 = vmatprep.subr.bf16.mxu0 0
      %436 = vmatpush1.bf16.msra.mxu0 0
      %437 = vmatprep.subr.bf16.mxu0 0
      %438 = vmatpush1.bf16.msra.mxu0 %v420
      %439 = vmatprep.subr.bf16.mxu0 0
      %440 = vmatpush1.bf16.msra.mxu0 %v419
      %441 = vmatprep.subr.bf16.mxu0 0
      %442 = vmatpush1.bf16.msra.mxu0 %v418
      %443 = vmatprep.subr.bf16.mxu0 0
      %444 = vmatpush1.bf16.msra.mxu0 %v417
      %445 = vmatprep.subr.bf16.mxu0 0
      %446 = vmatpush2.bf16.msra.mxu0 0
      %447 = vmatprep.subr.bf16.mxu0 0
      %448 = vmatpush2.bf16.msra.mxu0 0
      %449 = vmatprep.subr.bf16.mxu0 0
      %450 = vmatpush2.bf16.msra.mxu0 0
      %451 = vmatprep.subr.bf16.mxu0 0
      %452 = vmatpush2.bf16.msra.mxu0 0
      %453 = vmatprep.subr.bf16.mxu0 0
      %454 = vmatpush2.bf16.msra.mxu0 0
      %455 = vmatprep.subr.bf16.mxu0 0
      %456 = vmatpush2.bf16.msra.mxu0 0
      %457 = vmatprep.subr.bf16.mxu0 0
      %458 = vmatpush2.bf16.msra.mxu0 0
      %459 = vmatprep.subr.bf16.mxu0 0
      %460 = vmatpush2.bf16.msra.mxu0 0
      %461 = vmatprep.mubr.bf16.mxu0 0
      %462 = vmatmul.mubr.bf16.gmra.mxu0 %v427
      %v463 = vpop.f32.mrf.mxu0
      %v464 = vadd.f32 %v399, %v463
      %v465 = vpop.f32.mrf.mxu0
      %v466 = vpop.f32.mrf.mxu0
      %v467 = vadd.f32 %v399, %v466
      %v468 = vpop.f32.mrf.mxu0
      %469 = vdwg.mxu0
      %v470 = vmax.f32 %v464, 0.0
      %v471 = vmax.f32 %v467, 0.0
      %v472 = vpack.c.bf16 %v471, %v470
      %v473 = vld [vmem:[%s5] sm:$0xff]
      %v474 = vld [vmem:[%s5 + $0x8] sm:$0xff]
      %v475 = vld [vmem:[%s5 + $0x10] sm:$0xff]
      %v476 = vld [vmem:[%s5 + $0x18] sm:$0xff]
      %v477 = vld [vmem:[%s5 + $0x20] sm:$0xff]
      %v478 = vld [vmem:[%s5 + $0x28] sm:$0xff]
      %v479 = vld [vmem:[%s5 + $0x30] sm:$0xff]
      %v480 = vld [vmem:[%s5 + $0x38] sm:$0xff]
      %v481 = vld [vmem:[%s5 + $0x40] sm:$0xff]
      %v482 = vld [vmem:[%s5 + $0x48] sm:$0xff]
      %v483 = vld [vmem:[%s5 + $0x50] sm:$0xff]
      %v484 = vld [vmem:[%s5 + $0x58] sm:$0xff]
      %v485 = vld [vmem:[%s5 + $0x60] sm:$0xff]
      %v486 = vld [vmem:[%s5 + $0x68] sm:$0xff]
      %v487 = vld [vmem:[%s5 + $0x70] sm:$0xff]
      %v488 = vld [vmem:[%s5 + $0x78] sm:$0xff]
      %v489 = vld [vmem:[%s5 + $0x80] sm:$0xff]
      %v490 = vld [vmem:[%s5 + $0x88] sm:$0xff]
      %v491 = vld [vmem:[%s5 + $0x90] sm:$0xff]
      %v492 = vld [vmem:[%s5 + $0x98] sm:$0xff]
      %v493 = vld [vmem:[%s5 + $0xa0] sm:$0xff]
      %v494 = vld [vmem:[%s5 + $0xa8] sm:$0xff]
      %v495 = vld [vmem:[%s5 + $0xb0] sm:$0xff]
      %v496 = vld [vmem:[%s5 + $0xb8] sm:$0xff]
      %v497 = vld [vmem:[%s5 + $0xc0] sm:$0xff]
      %v498 = vld [vmem:[%s5 + $0xc8] sm:$0xff]
      %v499 = vld [vmem:[%s5 + $0xd0] sm:$0xff]
      %v500 = vld [vmem:[%s5 + $0xd8] sm:$0xff]
      %v501 = vld [vmem:[%s5 + $0xe0] sm:$0xff]
      %v502 = vld [vmem:[%s5 + $0xe8] sm:$0xff]
      %v503 = vld [vmem:[%s5 + $0xf0] sm:$0xff]
      %v504 = vld [vmem:[%s5 + $0xf8] sm:$0xff]
      %v505 = vld [vmem:[%s5 + $0x100] sm:$0xff]
      %v506 = vld [vmem:[%s5 + $0x108] sm:$0xff]
      %v507 = vld [vmem:[%s5 + $0x110] sm:$0xff]
      %v508 = vld [vmem:[%s5 + $0x118] sm:$0xff]
      %v509 = vld [vmem:[%s5 + $0x120] sm:$0xff]
      %v510 = vld [vmem:[%s5 + $0x128] sm:$0xff]
      %v511 = vld [vmem:[%s5 + $0x130] sm:$0xff]
      %v512 = vld [vmem:[%s5 + $0x138] sm:$0xff]
      %v513 = vld [vmem:[%s5 + $0x140] sm:$0xff]
      %v514 = vld [vmem:[%s5 + $0x148] sm:$0xff]
      %v515 = vld [vmem:[%s5 + $0x150] sm:$0xff]
      %v516 = vld [vmem:[%s5 + $0x158] sm:$0xff]
      %v517 = vld [vmem:[%s5 + $0x160] sm:$0xff]
      %v518 = vld [vmem:[%s5 + $0x168] sm:$0xff]
      %v519 = vld [vmem:[%s5 + $0x170] sm:$0xff]
      %v520 = vld [vmem:[%s5 + $0x178] sm:$0xff]
      %v521 = vld [vmem:[%s5 + $0x180] sm:$0xff]
      %v522 = vld [vmem:[%s5 + $0x188] sm:$0xff]
      %v523 = vld [vmem:[%s5 + $0x190] sm:$0xff]
      %v524 = vld [vmem:[%s5 + $0x198] sm:$0xff]
      %v525 = vld [vmem:[%s5 + $0x1a0] sm:$0xff]
      %v526 = vld [vmem:[%s5 + $0x1a8] sm:$0xff]
      %v527 = vld [vmem:[%s5 + $0x1b0] sm:$0xff]
      %v528 = vld [vmem:[%s5 + $0x1b8] sm:$0xff]
      %v529 = vld [vmem:[%s5 + $0x1c0] sm:$0xff]
      %v530 = vld [vmem:[%s5 + $0x1c8] sm:$0xff]
      %v531 = vld [vmem:[%s5 + $0x1d0] sm:$0xff]
      %v532 = vld [vmem:[%s5 + $0x1d8] sm:$0xff]
      %v533 = vld [vmem:[%s5 + $0x1e0] sm:$0xff]
      %v534 = vld [vmem:[%s5 + $0x1e8] sm:$0xff]
      %v535 = vld [vmem:[%s5 + $0x1f0] sm:$0xff]
      %v536 = vld [vmem:[%s5 + $0x1f8] sm:$0xff]
      %v601 = vunpack.c.l.b16 %v473
      %v602 = vunpack.c.h.b16 %v473
      %v603 = vunpack.c.l.b16 %v474
      %v604 = vunpack.c.h.b16 %v474
      %v605 = vunpack.c.l.b16 %v475
      %v606 = vunpack.c.h.b16 %v475
      %v607 = vunpack.c.l.b16 %v476
      %v608 = vunpack.c.h.b16 %v476
      %v609 = vunpack.c.l.b16 %v477
      %v610 = vunpack.c.h.b16 %v477
      %v611 = vunpack.c.l.b16 %v478
      %v612 = vunpack.c.h.b16 %v478
      %v613 = vunpack.c.l.b16 %v479
      %v614 = vunpack.c.h.b16 %v479
      %v615 = vunpack.c.l.b16 %v480
      %v616 = vunpack.c.h.b16 %v480
      %v617 = vunpack.c.l.b16 %v481
      %v618 = vunpack.c.h.b16 %v481
      %v619 = vunpack.c.l.b16 %v482
      %v620 = vunpack.c.h.b16 %v482
      %v621 = vunpack.c.l.b16 %v483
      %v622 = vunpack.c.h.b16 %v483
      %v623 = vunpack.c.l.b16 %v484
      %v624 = vunpack.c.h.b16 %v484
      %v625 = vunpack.c.l.b16 %v485
      %v626 = vunpack.c.h.b16 %v485
      %v627 = vunpack.c.l.b16 %v486
      %v628 = vunpack.c.h.b16 %v486
      %v629 = vunpack.c.l.b16 %v487
      %v630 = vunpack.c.h.b16 %v487
      %v631 = vunpack.c.l.b16 %v488
      %v632 = vunpack.c.h.b16 %v488
      %v633 = vunpack.c.l.b16 %v489
      %v634 = vunpack.c.h.b16 %v489
      %v635 = vunpack.c.l.b16 %v490
      %v636 = vunpack.c.h.b16 %v490
      %v637 = vunpack.c.l.b16 %v491
      %v638 = vunpack.c.h.b16 %v491
      %v639 = vunpack.c.l.b16 %v492
      %v640 = vunpack.c.h.b16 %v492
      %v641 = vunpack.c.l.b16 %v493
      %v642 = vunpack.c.h.b16 %v493
      %v643 = vunpack.c.l.b16 %v494
      %v644 = vunpack.c.h.b16 %v494
      %v645 = vunpack.c.l.b16 %v495
      %v646 = vunpack.c.h.b16 %v495
      %v647 = vunpack.c.l.b16 %v496
      %v648 = vunpack.c.h.b16 %v496
      %v649 = vunpack.c.l.b16 %v497
      %v650 = vunpack.c.h.b16 %v497
      %v651 = vunpack.c.l.b16 %v498
      %v652 = vunpack.c.h.b16 %v498
      %v653 = vunpack.c.l.b16 %v499
      %v654 = vunpack.c.h.b16 %v499
      %v655 = vunpack.c.l.b16 %v500
      %v656 = vunpack.c.h.b16 %v500
      %v657 = vunpack.c.l.b16 %v501
      %v658 = vunpack.c.h.b16 %v501
      %v659 = vunpack.c.l.b16 %v502
      %v660 = vunpack.c.h.b16 %v502
      %v661 = vunpack.c.l.b16 %v503
      %v662 = vunpack.c.h.b16 %v503
      %v663 = vunpack.c.l.b16 %v504
      %v664 = vunpack.c.h.b16 %v504
      %v665 = vunpack.c.l.b16 %v505
      %v666 = vunpack.c.h.b16 %v505
      %v667 = vunpack.c.l.b16 %v506
      %v668 = vunpack.c.h.b16 %v506
      %v669 = vunpack.c.l.b16 %v507
      %v670 = vunpack.c.h.b16 %v507
      %v671 = vunpack.c.l.b16 %v508
      %v672 = vunpack.c.h.b16 %v508
      %v673 = vunpack.c.l.b16 %v509
      %v674 = vunpack.c.h.b16 %v509
      %v675 = vunpack.c.l.b16 %v510
      %v676 = vunpack.c.h.b16 %v510
      %v677 = vunpack.c.l.b16 %v511
      %v678 = vunpack.c.h.b16 %v511
      %v679 = vunpack.c.l.b16 %v512
      %v680 = vunpack.c.h.b16 %v512
      %v681 = vunpack.c.l.b16 %v513
      %v682 = vunpack.c.h.b16 %v513
      %v683 = vunpack.c.l.b16 %v514
      %v684 = vunpack.c.h.b16 %v514
      %v685 = vunpack.c.l.b16 %v515
      %v686 = vunpack.c.h.b16 %v515
      %v687 = vunpack.c.l.b16 %v516
      %v688 = vunpack.c.h.b16 %v516
      %v689 = vunpack.c.l.b16 %v517
      %v690 = vunpack.c.h.b16 %v517
      %v691 = vunpack.c.l.b16 %v518
      %v692 = vunpack.c.h.b16 %v518
      %v693 = vunpack.c.l.b16 %v519
      %v694 = vunpack.c.h.b16 %v519
      %v695 = vunpack.c.l.b16 %v520
      %v696 = vunpack.c.h.b16 %v520
      %v697 = vunpack.c.l.b16 %v521
      %v698 = vunpack.c.h.b16 %v521
      %v699 = vunpack.c.l.b16 %v522
      %v700 = vunpack.c.h.b16 %v522
      %v701 = vunpack.c.l.b16 %v523
      %v702 = vunpack.c.h.b16 %v523
      %v703 = vunpack.c.l.b16 %v524
      %v704 = vunpack.c.h.b16 %v524
      %v705 = vunpack.c.l.b16 %v525
      %v706 = vunpack.c.h.b16 %v525
      %v707 = vunpack.c.l.b16 %v526
      %v708 = vunpack.c.h.b16 %v526
      %v709 = vunpack.c.l.b16 %v527
      %v710 = vunpack.c.h.b16 %v527
      %v711 = vunpack.c.l.b16 %v528
      %v712 = vunpack.c.h.b16 %v528
      %v713 = vunpack.c.l.b16 %v529
      %v714 = vunpack.c.h.b16 %v529
      %v715 = vunpack.c.l.b16 %v530
      %v716 = vunpack.c.h.b16 %v530
      %v717 = vunpack.c.l.b16 %v531
      %v718 = vunpack.c.h.b16 %v531
      %v719 = vunpack.c.l.b16 %v532
      %v720 = vunpack.c.h.b16 %v532
      %v721 = vunpack.c.l.b16 %v533
      %v722 = vunpack.c.h.b16 %v533
      %v723 = vunpack.c.l.b16 %v534
      %v724 = vunpack.c.h.b16 %v534
      %v725 = vunpack.c.l.b16 %v535
      %v726 = vunpack.c.h.b16 %v535
      %v727 = vunpack.c.l.b16 %v536
      %v728 = vunpack.c.h.b16 %v536
      %v729 = vpack.c.b16 %v609, %v601
      %v730 = vpack.c.b16 %v610, %v602
      %v731 = vpack.c.b16 %v611, %v603
      %v732 = vpack.c.b16 %v612, %v604
      %v733 = vpack.c.b16 %v613, %v605
      %v734 = vpack.c.b16 %v614, %v606
      %v735 = vpack.c.b16 %v615, %v607
      %v736 = vpack.c.b16 %v616, %v608
      %v737 = vpack.c.b16 %v625, %v617
      %v738 = vpack.c.b16 %v626, %v618
      %v739 = vpack.c.b16 %v627, %v619
      %v740 = vpack.c.b16 %v628, %v620
      %v741 = vpack.c.b16 %v629, %v621
      %v742 = vpack.c.b16 %v630, %v622
      %v743 = vpack.c.b16 %v631, %v623
      %v744 = vpack.c.b16 %v632, %v624
      %v745 = vpack.c.b16 %v641, %v633
      %v746 = vpack.c.b16 %v642, %v634
      %v747 = vpack.c.b16 %v643, %v635
      %v748 = vpack.c.b16 %v644, %v636
      %v749 = vpack.c.b16 %v645, %v637
      %v750 = vpack.c.b16 %v646, %v638
      %v751 = vpack.c.b16 %v647, %v639
      %v752 = vpack.c.b16 %v648, %v640
      %v753 = vpack.c.b16 %v657, %v649
      %v754 = vpack.c.b16 %v658, %v650
      %v755 = vpack.c.b16 %v659, %v651
      %v756 = vpack.c.b16 %v660, %v652
      %v757 = vpack.c.b16 %v661, %v653
      %v758 = vpack.c.b16 %v662, %v654
      %v759 = vpack.c.b16 %v663, %v655
      %v760 = vpack.c.b16 %v664, %v656
      %v761 = vpack.c.b16 %v673, %v665
      %v762 = vpack.c.b16 %v674, %v666
      %v763 = vpack.c.b16 %v675, %v667
      %v764 = vpack.c.b16 %v676, %v668
      %v765 = vpack.c.b16 %v677, %v669
      %v766 = vpack.c.b16 %v678, %v670
      %v767 = vpack.c.b16 %v679, %v671
      %v768 = vpack.c.b16 %v680, %v672
      %v769 = vpack.c.b16 %v689, %v681
      %v770 = vpack.c.b16 %v690, %v682
      %v771 = vpack.c.b16 %v691, %v683
      %v772 = vpack.c.b16 %v692, %v684
      %v773 = vpack.c.b16 %v693, %v685
      %v774 = vpack.c.b16 %v694, %v686
      %v775 = vpack.c.b16 %v695, %v687
      %v776 = vpack.c.b16 %v696, %v688
      %v777 = vpack.c.b16 %v705, %v697
      %v778 = vpack.c.b16 %v706, %v698
      %v779 = vpack.c.b16 %v707, %v699
      %v780 = vpack.c.b16 %v708, %v700
      %v781 = vpack.c.b16 %v709, %v701
      %v782 = vpack.c.b16 %v710, %v702
      %v783 = vpack.c.b16 %v711, %v703
      %v784 = vpack.c.b16 %v712, %v704
      %v785 = vpack.c.b16 %v721, %v713
      %v786 = vpack.c.b16 %v722, %v714
      %v787 = vpack.c.b16 %v723, %v715
      %v788 = vpack.c.b16 %v724, %v716
      %v789 = vpack.c.b16 %v725, %v717
      %v790 = vpack.c.b16 %v726, %v718
      %v791 = vpack.c.b16 %v727, %v719
      %v792 = vpack.c.b16 %v728, %v720
      %857 = vmatprep.subr.bf16.mxu0 %v786
      %858 = vmatpush1.bf16.msra.mxu0 %v785
      %859 = vmatprep.subr.bf16.mxu0 %v778
      %860 = vmatpush1.bf16.msra.mxu0 %v777
      %861 = vmatprep.subr.bf16.mxu0 %v770
      %862 = vmatpush1.bf16.msra.mxu0 %v769
      %863 = vmatprep.subr.bf16.mxu0 %v762
      %864 = vmatpush1.bf16.msra.mxu0 %v761
      %865 = vmatprep.subr.bf16.mxu0 %v754
      %866 = vmatpush1.bf16.msra.mxu0 %v753
      %867 = vmatprep.subr.bf16.mxu0 %v746
      %868 = vmatpush1.bf16.msra.mxu0 %v745
      %869 = vmatprep.subr.bf16.mxu0 %v738
      %870 = vmatpush1.bf16.msra.mxu0 %v737
      %871 = vmatprep.subr.bf16.mxu0 %v730
      %872 = vmatpush1.bf16.msra.mxu0 %v729
      %873 = vmatprep.subr.bf16.mxu0 0
      %874 = vmatpush2.bf16.msra.mxu0 0
      %875 = vmatprep.subr.bf16.mxu0 0
      %876 = vmatpush2.bf16.msra.mxu0 0
      %877 = vmatprep.subr.bf16.mxu0 0
      %878 = vmatpush2.bf16.msra.mxu0 0
      %879 = vmatprep.subr.bf16.mxu0 0
      %880 = vmatpush2.bf16.msra.mxu0 0
      %881 = vmatprep.subr.bf16.mxu0 0
      %882 = vmatpush2.bf16.msra.mxu0 0
      %883 = vmatprep.subr.bf16.mxu0 0
      %884 = vmatpush2.bf16.msra.mxu0 0
      %885 = vmatprep.subr.bf16.mxu0 0
      %886 = vmatpush2.bf16.msra.mxu0 0
      %887 = vmatprep.subr.bf16.mxu0 0
      %888 = vmatpush2.bf16.msra.mxu0 0
      %889 = vmatprep.mubr.bf16.mxu0 0
      %890 = vmatmul.mubr.bf16.gmra.mxu0 %v472
      %v891 = vpop.f32.mrf.mxu0
      %v892 = vadd.f32 0.0, %v891
      %v893 = vpop.f32.mrf.mxu0
      %v894 = vadd.f32 0.0, %v893
      %v895 = vpop.f32.mrf.mxu0
      %v896 = vadd.f32 0.0, %v895
      %v897 = vpop.f32.mrf.mxu0
      %v898 = vadd.f32 0.0, %v897
      %899 = vdwg.mxu0
      %900 = vmatprep.subr.bf16.mxu0 %v788
      %901 = vmatpush1.bf16.msra.mxu0 %v787
      %902 = vmatprep.subr.bf16.mxu0 %v780
      %903 = vmatpush1.bf16.msra.mxu0 %v779
      %904 = vmatprep.subr.bf16.mxu0 %v772
      %905 = vmatpush1.bf16.msra.mxu0 %v771
      %906 = vmatprep.subr.bf16.mxu0 %v764
      %907 = vmatpush1.bf16.msra.mxu0 %v763
      %908 = vmatprep.subr.bf16.mxu0 %v756
      %909 = vmatpush1.bf16.msra.mxu0 %v755
      %910 = vmatprep.subr.bf16.mxu0 %v748
      %911 = vmatpush1.bf16.msra.mxu0 %v747
      %912 = vmatprep.subr.bf16.mxu0 %v740
      %913 = vmatpush1.bf16.msra.mxu0 %v739
      %914 = vmatprep.subr.bf16.mxu0 %v732
      %915 = vmatpush1.bf16.msra.mxu0 %v731
      %916 = vmatprep.subr.bf16.mxu0 0
      %917 = vmatpush2.bf16.msra.mxu0 0
      %918 = vmatprep.subr.bf16.mxu0 0
      %919 = vmatpush2.bf16.msra.mxu0 0
      %920 = vmatprep.subr.bf16.mxu0 0
      %921 = vmatpush2.bf16.msra.mxu0 0
      %922 = vmatprep.subr.bf16.mxu0 0
      %923 = vmatpush2.bf16.msra.mxu0 0
      %924 = vmatprep.subr.bf16.mxu0 0
      %925 = vmatpush2.bf16.msra.mxu0 0
      %926 = vmatprep.subr.bf16.mxu0 0
      %927 = vmatpush2.bf16.msra.mxu0 0
      %928 = vmatprep.subr.bf16.mxu0 0
      %929 = vmatpush2.bf16.msra.mxu0 0
      %930 = vmatprep.subr.bf16.mxu0 0
      %931 = vmatpush2.bf16.msra.mxu0 0
      %932 = vmatprep.mubr.bf16.mxu0 0
      %933 = vmatmul.mubr.bf16.gmra.mxu0 %v472
      %v934 = vpop.f32.mrf.mxu0
      %v935 = vadd.f32 0.0, %v934
      %v936 = vpop.f32.mrf.mxu0
      %v937 = vadd.f32 0.0, %v936
      %v938 = vpop.f32.mrf.mxu0
      %v939 = vadd.f32 0.0, %v938
      %v940 = vpop.f32.mrf.mxu0
      %v941 = vadd.f32 0.0, %v940
      %942 = vdwg.mxu0
      %943 = vmatprep.subr.bf16.mxu0 %v790
      %944 = vmatpush1.bf16.msra.mxu0 %v789
      %945 = vmatprep.subr.bf16.mxu0 %v782
      %946 = vmatpush1.bf16.msra.mxu0 %v781
      %947 = vmatprep.subr.bf16.mxu0 %v774
      %948 = vmatpush1.bf16.msra.mxu0 %v773
      %949 = vmatprep.subr.bf16.mxu0 %v766
      %950 = vmatpush1.bf16.msra.mxu0 %v765
      %951 = vmatprep.subr.bf16.mxu0 %v758
      %952 = vmatpush1.bf16.msra.mxu0 %v757
      %953 = vmatprep.subr.bf16.mxu0 %v750
      %954 = vmatpush1.bf16.msra.mxu0 %v749
      %955 = vmatprep.subr.bf16.mxu0 %v742
      %956 = vmatpush1.bf16.msra.mxu0 %v741
      %957 = vmatprep.subr.bf16.mxu0 %v734
      %958 = vmatpush1.bf16.msra.mxu0 %v733
      %959 = vmatprep.subr.bf16.mxu0 0
      %960 = vmatpush2.bf16.msra.mxu0 0
      %961 = vmatprep.subr.bf16.mxu0 0
      %962 = vmatpush2.bf16.msra.mxu0 0
      %963 = vmatprep.subr.bf16.mxu0 0
      %964 = vmatpush2.bf16.msra.mxu0 0
      %965 = vmatprep.subr.bf16.mxu0 0
      %966 = vmatpush2.bf16.msra.mxu0 0
      %967 = vmatprep.subr.bf16.mxu0 0
      %968 = vmatpush2.bf16.msra.mxu0 0
      %969 = vmatprep.subr.bf16.mxu0 0
      %970 = vmatpush2.bf16.msra.mxu0 0
      %971 = vmatprep.subr.bf16.mxu0 0
      %972 = vmatpush2.bf16.msra.mxu0 0
      %973 = vmatprep.subr.bf16.mxu0 0
      %974 = vmatpush2.bf16.msra.mxu0 0
      %975 = vmatprep.mubr.bf16.mxu0 0
      %976 = vmatmul.mubr.bf16.gmra.mxu0 %v472
      %v977 = vpop.f32.mrf.mxu0
      %v978 = vadd.f32 0.0, %v977
      %v979 = vpop.f32.mrf.mxu0
      %v980 = vadd.f32 0.0, %v979
      %v981 = vpop.f32.mrf.mxu0
      %v982 = vadd.f32 0.0, %v981
      %v983 = vpop.f32.mrf.mxu0
      %v984 = vadd.f32 0.0, %v983
      %985 = vdwg.mxu0
      %986 = vmatprep.subr.bf16.mxu0 %v792
      %987 = vmatpush1.bf16.msra.mxu0 %v791
      %988 = vmatprep.subr.bf16.mxu0 %v784
      %989 = vmatpush1.bf16.msra.mxu0 %v783
      %990 = vmatprep.subr.bf16.mxu0 %v776
      %991 = vmatpush1.bf16.msra.mxu0 %v775
      %992 = vmatprep.subr.bf16.mxu0 %v768
      %993 = vmatpush1.bf16.msra.mxu0 %v767
      %994 = vmatprep.subr.bf16.mxu0 %v760
      %995 = vmatpush1.bf16.msra.mxu0 %v759
      %996 = vmatprep.subr.bf16.mxu0 %v752
      %997 = vmatpush1.bf16.msra.mxu0 %v751
      %998 = vmatprep.subr.bf16.mxu0 %v744
      %999 = vmatpush1.bf16.msra.mxu0 %v743
      %1000 = vmatprep.subr.bf16.mxu0 %v736
      %1001 = vmatpush1.bf16.msra.mxu0 %v735
      %1002 = vmatprep.subr.bf16.mxu0 0
      %1003 = vmatpush2.bf16.msra.mxu0 0
      %1004 = vmatprep.subr.bf16.mxu0 0
      %1005 = vmatpush2.bf16.msra.mxu0 0
      %1006 = vmatprep.subr.bf16.mxu0 0
      %1007 = vmatpush2.bf16.msra.mxu0 0
      %1008 = vmatprep.subr.bf16.mxu0 0
      %1009 = vmatpush2.bf16.msra.mxu0 0
      %1010 = vmatprep.subr.bf16.mxu0 0
      %1011 = vmatpush2.bf16.msra.mxu0 0
      %1012 = vmatprep.subr.bf16.mxu0 0
      %1013 = vmatpush2.bf16.msra.mxu0 0
      %1014 = vmatprep.subr.bf16.mxu0 0
      %1015 = vmatpush2.bf16.msra.mxu0 0
      %1016 = vmatprep.subr.bf16.mxu0 0
      %1017 = vmatpush2.bf16.msra.mxu0 0
      %1018 = vmatprep.mubr.bf16.mxu0 0
      %1019 = vmatmul.mubr.bf16.gmra.mxu0 %v472
      %v1020 = vpop.f32.mrf.mxu0
      %v1021 = vadd.f32 0.0, %v1020
      %v1022 = vpop.f32.mrf.mxu0
      %v1023 = vadd.f32 0.0, %v1022
      %v1024 = vpop.f32.mrf.mxu0
      %v1025 = vadd.f32 0.0, %v1024
      %v1026 = vpop.f32.mrf.mxu0
      %v1027 = vadd.f32 0.0, %v1026
      %1028 = vdwg.mxu0
      %v1029 = vmax.f32 %v892, %v896
      %v1030 = vrot.slane %v1029, 4
      %v1031 = vmax.f32 %v1029, %v1030
      %v1032 = vrot.slane %v1031, 2
      %v1033 = vmax.f32 %v1031, %v1032
      %v1034 = vrot.slane %v1033, 1
      %v1035 = vmax.f32 %v1033, %v1034
      %v1036 = vmax.f32 %v894, %v898
      %v1037 = vrot.slane %v1036, 4
      %v1038 = vmax.f32 %v1036, %v1037
      %v1039 = vrot.slane %v1038, 2
      %v1040 = vmax.f32 %v1038, %v1039
      %v1041 = vrot.slane %v1040, 1
      %v1042 = vmax.f32 %v1040, %v1041
      %v1043 = vmax.f32 %v935, %v939
      %v1044 = vrot.slane %v1043, 4
      %v1045 = vmax.f32 %v1043, %v1044
      %v1046 = vrot.slane %v1045, 2
      %v1047 = vmax.f32 %v1045, %v1046
      %v1048 = vrot.slane %v1047, 1
      %v1049 = vmax.f32 %v1047, %v1048
      %v1050 = vmax.f32 %v937, %v941
      %v1051 = vrot.slane %v1050, 4
      %v1052 = vmax.f32 %v1050, %v1051
      %v1053 = vrot.slane %v1052, 2
      %v1054 = vmax.f32 %v1052, %v1053
      %v1055 = vrot.slane %v1054, 1
      %v1056 = vmax.f32 %v1054, %v1055
      %v1057 = vmax.f32 %v978, %v982
      %v1058 = vrot.slane %v1057, 4
      %v1059 = vmax.f32 %v1057, %v1058
      %v1060 = vrot.slane %v1059, 2
      %v1061 = vmax.f32 %v1059, %v1060
      %v1062 = vrot.slane %v1061, 1
      %v1063 = vmax.f32 %v1061, %v1062
      %v1064 = vmax.f32 %v980, %v984
      %v1065 = vrot.slane %v1064, 4
      %v1066 = vmax.f32 %v1064, %v1065
      %v1067 = vrot.slane %v1066, 2
      %v1068 = vmax.f32 %v1066, %v1067
      %v1069 = vrot.slane %v1068, 1
      %v1070 = vmax.f32 %v1068, %v1069
      %v1071 = vmax.f32 %v1021, %v1025
      %v1072 = vrot.slane %v1071, 4
      %v1073 = vmax.f32 %v1071, %v1072
      %v1074 = vrot.slane %v1073, 2
      %v1075 = vmax.f32 %v1073, %v1074
      %v1076 = vrot.slane %v1075, 1
      %v1077 = vmax.f32 %v1075, %v1076
      %v1078 = vmax.f32 %v1023, %v1027
      %v1079 = vrot.slane %v1078, 4
      %v1080 = vmax.f32 %v1078, %v1079
      %v1081 = vrot.slane %v1080, 2
      %v1082 = vmax.f32 %v1080, %v1081
      %v1083 = vrot.slane %v1082, 1
      %v1084 = vmax.f32 %v1082, %v1083
      %p1085 = scmp.eq.s32.totalorder %s23, 0
      // Predicated region
      $region49: #{pointnetfeat_forward.3} parent=47 // pred_check
        %p1086 = pneg %p1085
      $region50: #{pointnetfeat_forward.3} parent=47 // pred_check_branch
        %1088 = sbr.rel (%p1086) target = $region52
      $region51: #{pointnetfeat_forward.3} parent=47 // pred_region
        %v1097 = vcombine.low %v1035, %v1042
        %v1098 = vcombine.low %v1049, %v1056
        %v1099 = vcombine.low %v1063, %v1070
        %v1100 = vcombine.low %v1077, %v1084
        %v1102 = vunpack.c.l.s4 1966171168
        %v1103 = vunpack.c.0.s8 %v1102
        %v1104 = vlaneseq
        %v1105 = vshrl.u32 %v1104, 7
        %v1106 = vsub.s32 %v1103, %v1105
        %v1107 = vrot.slane %v1097, %v1106
        %v1109 = vunpack.c.l.s4 1966171168
        %v1110 = vunpack.c.0.s8 %v1109
        %v1111 = vlaneseq
        %v1112 = vshrl.u32 %v1111, 7
        %v1113 = vsub.s32 %v1110, %v1112
        %v1114 = vrot.slane %v1098, %v1113
        %v1116 = vunpack.c.l.s4 1966171168
        %v1117 = vunpack.c.0.s8 %v1116
        %v1118 = vlaneseq
        %v1119 = vshrl.u32 %v1118, 7
        %v1120 = vsub.s32 %v1117, %v1119
        %v1121 = vrot.slane %v1099, %v1120
        %v1123 = vunpack.c.l.s4 1966171168
        %v1124 = vunpack.c.0.s8 %v1123
        %v1125 = vlaneseq
        %v1126 = vshrl.u32 %v1125, 7
        %v1127 = vsub.s32 %v1124, %v1126
        %v1128 = vrot.slane %v1100, %v1127
        %v1129 = vcombine.low %v1107, %v1114
        %v1130 = vcombine.low %v1121, %v1128
        %v1132 = vunpack.c.l.s4 1966171168
        %v1133 = vunpack.c.0.s8 %v1132
        %v1134 = vlaneseq
        %v1135 = vshrl.u32 %v1134, 7
        %v1136 = vsub.s32 %v1133, %v1135
        %v1137 = vrot.slane %v1129, %v1136
        %v1139 = vunpack.c.l.s4 1966171168
        %v1140 = vunpack.c.0.s8 %v1139
        %v1141 = vlaneseq
        %v1142 = vshrl.u32 %v1141, 7
        %v1143 = vsub.s32 %v1140, %v1142
        %v1144 = vrot.slane %v1130, %v1143
        %v1145 = vcombine.low %v1137, %v1144
        %1147 = vst [vmem:[#allocation2] sm:$0xff] %v1145
      $region52: #{pointnetfeat_forward.3} parent=47 // pred_fallthru
        _
      %p1148 = scmp.gt.s32.totalorder %s23, 0
      // Predicated region
      $region53: #{pointnetfeat_forward.3} parent=47 // pred_check
        %p1149 = pneg %p1148
      $region54: #{pointnetfeat_forward.3} parent=47 // pred_check_branch
        %1151 = sbr.rel (%p1149) target = $region56
      $region55: #{pointnetfeat_forward.3} parent=47 // pred_region
        %v1152 = vld [vmem:[#allocation2] sm:$0xff]
        %v1161 = vcombine.low %v1035, %v1042
        %v1162 = vcombine.low %v1049, %v1056
        %v1163 = vcombine.low %v1063, %v1070
        %v1164 = vcombine.low %v1077, %v1084
        %v1166 = vunpack.c.l.s4 1966171168
        %v1167 = vunpack.c.0.s8 %v1166
        %v1168 = vlaneseq
        %v1169 = vshrl.u32 %v1168, 7
        %v1170 = vsub.s32 %v1167, %v1169
        %v1171 = vrot.slane %v1161, %v1170
        %v1173 = vunpack.c.l.s4 1966171168
        %v1174 = vunpack.c.0.s8 %v1173
        %v1175 = vlaneseq
        %v1176 = vshrl.u32 %v1175, 7
        %v1177 = vsub.s32 %v1174, %v1176
        %v1178 = vrot.slane %v1162, %v1177
        %v1180 = vunpack.c.l.s4 1966171168
        %v1181 = vunpack.c.0.s8 %v1180
        %v1182 = vlaneseq
        %v1183 = vshrl.u32 %v1182, 7
        %v1184 = vsub.s32 %v1181, %v1183
        %v1185 = vrot.slane %v1163, %v1184
        %v1187 = vunpack.c.l.s4 1966171168
        %v1188 = vunpack.c.0.s8 %v1187
        %v1189 = vlaneseq
        %v1190 = vshrl.u32 %v1189, 7
        %v1191 = vsub.s32 %v1188, %v1190
        %v1192 = vrot.slane %v1164, %v1191
        %v1193 = vcombine.low %v1171, %v1178
        %v1194 = vcombine.low %v1185, %v1192
        %v1196 = vunpack.c.l.s4 1966171168
        %v1197 = vunpack.c.0.s8 %v1196
        %v1198 = vlaneseq
        %v1199 = vshrl.u32 %v1198, 7
        %v1200 = vsub.s32 %v1197, %v1199
        %v1201 = vrot.slane %v1193, %v1200
        %v1203 = vunpack.c.l.s4 1966171168
        %v1204 = vunpack.c.0.s8 %v1203
        %v1205 = vlaneseq
        %v1206 = vshrl.u32 %v1205, 7
        %v1207 = vsub.s32 %v1204, %v1206
        %v1208 = vrot.slane %v1194, %v1207
        %v1209 = vcombine.low %v1201, %v1208
        %v1211 = vmax.f32 %v1152, %v1209
        %1212 = vst [vmem:[#allocation2] sm:$0xff] %v1211
      $region56: #{pointnetfeat_forward.3} parent=47 // pred_fallthru
        _
      // Predicated region
      $region57: #{pointnetfeat_forward.3} parent=47 // pred_check
        %p1213 = pneg %p1085
      $region58: #{pointnetfeat_forward.3} parent=47 // pred_check_branch
        %1215 = sbr.rel (%p1213) target = $region60
      $region59: #{pointnetfeat_forward.3} parent=47 // pred_region
        %v1216 = vld [vmem:[#allocation2] sm:$0xff]
        %v1217 = vld [vmem:[%s6] sm:$0xff]
        %v1218 = vadd.f32 %v1216, %v1217
        %1219 = vst [vmem:[%s321] sm:$0xff] %v1218
      $region60: #{pointnetfeat_forward.3} parent=47 // pred_fallthru
        _
      %p1220 = scmp.lt.s32.totalorder %s22, 1
      %s1221 = scalar_select %p1220, %s22, 1
      %s1222 = smul.addr %s1221, 8
      %s1223 = scalar_lea.vmem %s7, %s1222
      // Predicated region
      $region61: #{pointnetfeat_forward.3} parent=47 // pred_check
        %p1224 = pneg %p207
      $region62: #{pointnetfeat_forward.3} parent=47 // pred_check_branch
        %1226 = sbr.rel (%p1224) target = $region64
      $region63: #{pointnetfeat_forward.3} parent=47 // pred_region
        _
      $region64: #{pointnetfeat_forward.3} parent=47 // pred_fallthru
        _
    $region48: #{pointnetfeat_forward.3} parent=5 // pred_fallthru
      _
    %p1227 = scmp.le.s32.totalorder 2, %s13
    // Predicated region
    $region65: #{pointnetfeat_forward.3} parent=5 // pred_check
      %p1228 = pneg %p1227
    $region66: #{pointnetfeat_forward.3} parent=5 // pred_check_branch
      %1230 = sbr.rel (%p1228) target = $region68
    $region67: #{pointnetfeat_forward.3} parent=5 // pred_region
      %s1231 = ssub.s32 %s13, 2
      // Predicated region
      $region69: #{pointnetfeat_forward.3} parent=67 // pred_check
        %p1232 = pneg %p213
      $region70: #{pointnetfeat_forward.3} parent=67 // pred_check_branch
        %1234 = sbr.rel (%p1232) target = $region72
      $region71: #{pointnetfeat_forward.3} parent=67 // pred_region
        %p1235 = scmp.lt.s32.totalorder %s24, 1
        %s1236 = scalar_select %p1235, %s24, 1
        %s1237 = smul.addr %s1236, 8
        %s1238 = scalar_lea.vmem %s7, %s1237
      $region72: #{pointnetfeat_forward.3} parent=67 // pred_fallthru
        _
    $region68: #{pointnetfeat_forward.3} parent=5 // pred_fallthru
      _
  $region6: #{pointnetfeat_forward.3} parent=0 // loop_footer
    %s17 = sadd.s32 1, %s13
  $region7: #{pointnetfeat_forward.3} parent=0 // loop_footer_branch
    %12 = sbr.rel target = $region3
  $region8: #{pointnetfeat_forward.3} parent=0 // loop_exit
    _

// kernel: pointnetfeat_forward.2
$region0: #{pointnetfeat_forward.2}
  #allocation0 [shape = 'u32[]', space=smem, size = 0x4, offset = 0x4, fixed_abs, tag = 'smem constant byte address 0x4 - core index']
  #allocation1 [shape = 'u32[144,128]{1,0:T(1,128)}', space=vmem, size = 0x12000, scoped, tag = 'internal scratch']
  #allocation2 [shape = 'f32[1,1024]{1,0:T(1,128)}', space=vmem, size = 0x1000, scoped, tag = 'scratch operand']
  %s0 = inlined_call_operand.vmem [shape: f32[2,16,3], index: 0, kind: input, shape index: {}]
  %s1 = inlined_call_operand.vmem [shape: f32[3,64], index: 1, kind: input, shape index: {}]
  %s2 = inlined_call_operand.vmem [shape: f32[1,64], index: 2, kind: input, shape index: {}]
  %s3 = inlined_call_operand.vmem [shape: bf16[64,128], index: 3, kind: input, shape index: {}]
  %s4 = inlined_call_operand.vmem [shape: f32[1,128], index: 4, kind: input, shape index: {}]
  %s5 = inlined_call_operand.hbm [shape: bf16[128,1024], index: 5, kind: input, shape index: {}]
  %s6 = inlined_call_operand.vmem [shape: f32[1,1024], index: 6, kind: input, shape index: {}]
  %s7 = inlined_call_operand.hbm [shape: bf16[1024,512], index: 7, kind: input, shape index: {}]
  %s8 = inlined_call_operand.vmem [shape: f32[1,512], index: 8, kind: input, shape index: {}]
  %s9 = inlined_call_operand.hbm [shape: bf16[512,256], index: 9, kind: input, shape index: {}]
  %s10 = inlined_call_operand.vmem [shape: f32[1,256], index: 10, kind: input, shape index: {}]
  %s11 = inlined_call_operand.hbm [shape: bf16[256,128], index: 11, kind: input, shape index: {}]
  %s12 = inlined_call_operand.vmem [shape: f32[1,128], index: 12, kind: input, shape index: {}]
  %s13 = inlined_call_operand.vmem [shape: f32[2,1,128], index: 13, kind: output, shape index: {}]
  %s14 = sld [smem:[#allocation0]]
  $region113: #{pointnetfeat_forward.2} parent=0
    _
  %s16 = ssub.s32 1, %s14
  %s17 = scalar_select 0, %s16, %s14
  $region1: #{pointnetfeat_forward.2} parent=0
    #allocation3 [shape = 'u8[262144]{0}', space=vmem, size = 0x40000, scoped, tag = 'input window, operand 5, single buffered']
    #allocation4 [shape = 's32[2]{0}', space=sflag, size = 0x8, scoped, tag = 'scoped memory for pointnetfeat_forward.2']
    #allocation5 [shape = 'u8[1048576]{0}', space=vmem, size = 0x100000, scoped, tag = 'input window, operand 7, single buffered']
    #allocation6 [shape = 's32[1]{0}', space=sflag, size = 0x4, scoped, tag = 'scoped memory for pointnetfeat_forward.2']
    #allocation7 [shape = 'u8[262144]{0}', space=vmem, size = 0x40000, scoped, tag = 'input window, operand 9, single buffered']
    #allocation8 [shape = 'u8[65536]{0}', space=vmem, size = 0x10000, scoped, tag = 'input window, operand 11, single buffered']
    #allocation9 [shape = 's32[1]{0}', space=sflag, size = 0x4, scoped, tag = 'scoped memory for pointnetfeat_forward.2']
    %18 = vsyncpa [#allocation4], 0
    %19 = vsyncpa [#allocation6], 0
    %20 = vsyncpa [#allocation9], 0
    loop: start=0, step=1, limit=4
    $region2: #{pointnetfeat_forward.2} parent=1 // loop_pre_header
      _
    $region3: #{pointnetfeat_forward.2} parent=1 // loop_header
      %s22 = sphi 0, %s26
      %p23 = scmp.ge.s32.totalorder %s22, 4
      %s29 = sphi 0, %s41
      %s30 = sphi 0, %s37
      %s31 = sphi 0, %s29
      %s32 = sphi 0, %s30
      %s33 = sphi 0, %s31
      %s34 = sphi 0, %s32
      %s46 = sphi 0, %s48
      %s49 = sphi 0, %s46
      %s50 = sphi 0, %s49
      %s66 = sphi 0, %s50
      %s70 = sphi 0, %s70
      %s72 = sphi 0, %s70
      %s73 = sphi 0, %s72
      %s87 = sphi 0, %s73
      %s91 = sphi 0, %s91
      %s93 = sphi 0, %s91
      %s94 = sphi 0, %s93
      %s108 = sphi 0, %s94
      %s112 = sphi 0, %s112
      %s114 = sphi 0, %s112
      %s115 = sphi 0, %s114
      %s129 = sphi 0, %s115
      %s133 = sphi 0, %s133
      %s135 = sphi 0, %s133
      %s136 = sphi 0, %s135
      %s150 = sphi 0, %s136
      %s154 = sphi 0, %s154
      %s156 = sphi 0, %s154
      %s157 = sphi 0, %s156
      %s171 = sphi 0, %s157
      %s175 = sphi 0, %s175
      %s177 = sphi 0, %s175
      %s178 = sphi 0, %s177
      %s192 = sphi 0, %s178
      %s196 = sphi 0, %s196
      %s198 = sphi 0, %s196
      %s199 = sphi 0, %s198
      %s213 = sphi 0, %s199
      %s217 = sphi 0, %s217
      %s219 = sphi 0, %s217
      %s220 = sphi 0, %s219
      %s234 = sphi 0, %s220
      %s238 = sphi 0, %s238
      %s240 = sphi 0, %s238
      %s241 = sphi 0, %s240
      %s255 = sphi 0, %s241
      %s259 = sphi 0, %s259
      %s261 = sphi 0, %s259
      %s262 = sphi 0, %s261
      %s276 = sphi 0, %s262
      %s280 = sphi 0, %s280
      %s282 = sphi 0, %s280
      %s283 = sphi 0, %s282
      %s297 = sphi 0, %s283
      %s301 = sphi 0, %s301
      %s303 = sphi 0, %s301
      %s304 = sphi 0, %s303
      %s318 = sphi 0, %s304
      %s324 = sphi 0, %s326
      %s327 = sphi 0, %s324
      %s328 = sphi 0, %s327
      %s344 = sphi 0, %s328
    $region4: #{pointnetfeat_forward.2} parent=1 // loop_header_branch
      %25 = sbr.rel (%p23) target = $region8
    $region5: #{pointnetfeat_forward.2} parent=1 // loop_body
      %s27 = ssub.s32 %s22, 1
      %s28 = ssub.s32 %s22, 2
      %s35 = sadd.s32 1, %s30
      %p36 = scmp.ge.s32.totalorder %s35, 1
      %s37 = scalar_select %p36, 0, %s35
      %s38 = sadd.s32 1, %s29
      %s39 = scalar_select %p36, %s38, %s29
      %p40 = scmp.ge.s32.totalorder %s39, 2
      %s41 = scalar_select %p40, 0, %s39
      %s42 = ssub.s32 %s29, %s41
      %s43 = ssub.s32 %s30, %s37
      %s44 = sor.u32 %s42, %s43
      %p45 = scmp.eq.s32.totalorder %s44, 0
      %s47 = sadd.s32 %s46, 1
      %s48 = scalar_select %p45, %s46, %s47
      %p51 = pneg %p45
      %p52 = scmp.eq.s32.totalorder %s22, 1
      %p53 = por %p51, %p52
      %p54 = scmp.ne.s32.totalorder %s46, %s49
      %p55 = scmp.eq.s32.totalorder %s22, 0
      %p56 = por %p54, %p55
      %p57 = scmp.ne.s32.totalorder %s46, %s49
      %p58 = scmp.eq.s32.totalorder %s27, 1
      %p59 = por %p57, %p58
      %p60 = scmp.ne.s32.totalorder %s49, %s50
      %p61 = scmp.eq.s32.totalorder %s27, 0
      %p62 = por %p60, %p61
      %p63 = scmp.ne.s32.totalorder %s49, %s50
      %p64 = scmp.eq.s32.totalorder %s28, 1
      %p65 = por %p63, %p64
      %p67 = scmp.ne.s32.totalorder %s50, %s66
      %p68 = scmp.eq.s32.totalorder %s28, 0
      %p69 = por %p67, %p68
      %s71 = sadd.s32 %s70, 1
      %p74 = scmp.eq.s32.totalorder %s22, 1
      %p75 = scmp.ne.s32.totalorder %s70, %s72
      %p76 = scmp.eq.s32.totalorder %s22, 0
      %p77 = por %p75, %p76
      %p78 = scmp.ne.s32.totalorder %s70, %s72
      %p79 = scmp.eq.s32.totalorder %s27, 1
      %p80 = por %p78, %p79
      %p81 = scmp.ne.s32.totalorder %s72, %s73
      %p82 = scmp.eq.s32.totalorder %s27, 0
      %p83 = por %p81, %p82
      %p84 = scmp.ne.s32.totalorder %s72, %s73
      %p85 = scmp.eq.s32.totalorder %s28, 1
      %p86 = por %p84, %p85
      %p88 = scmp.ne.s32.totalorder %s73, %s87
      %p89 = scmp.eq.s32.totalorder %s28, 0
      %p90 = por %p88, %p89
      %s92 = sadd.s32 %s91, 1
      %p95 = scmp.eq.s32.totalorder %s22, 1
      %p96 = scmp.ne.s32.totalorder %s91, %s93
      %p97 = scmp.eq.s32.totalorder %s22, 0
      %p98 = por %p96, %p97
      %p99 = scmp.ne.s32.totalorder %s91, %s93
      %p100 = scmp.eq.s32.totalorder %s27, 1
      %p101 = por %p99, %p100
      %p102 = scmp.ne.s32.totalorder %s93, %s94
      %p103 = scmp.eq.s32.totalorder %s27, 0
      %p104 = por %p102, %p103
      %p105 = scmp.ne.s32.totalorder %s93, %s94
      %p106 = scmp.eq.s32.totalorder %s28, 1
      %p107 = por %p105, %p106
      %p109 = scmp.ne.s32.totalorder %s94, %s108
      %p110 = scmp.eq.s32.totalorder %s28, 0
      %p111 = por %p109, %p110
      %s113 = sadd.s32 %s112, 1
      %p116 = scmp.eq.s32.totalorder %s22, 1
      %p117 = scmp.ne.s32.totalorder %s112, %s114
      %p118 = scmp.eq.s32.totalorder %s22, 0
      %p119 = por %p117, %p118
      %p120 = scmp.ne.s32.totalorder %s112, %s114
      %p121 = scmp.eq.s32.totalorder %s27, 1
      %p122 = por %p120, %p121
      %p123 = scmp.ne.s32.totalorder %s114, %s115
      %p124 = scmp.eq.s32.totalorder %s27, 0
      %p125 = por %p123, %p124
      %p126 = scmp.ne.s32.totalorder %s114, %s115
      %p127 = scmp.eq.s32.totalorder %s28, 1
      %p128 = por %p126, %p127
      %p130 = scmp.ne.s32.totalorder %s115, %s129
      %p131 = scmp.eq.s32.totalorder %s28, 0
      %p132 = por %p130, %p131
      %s134 = sadd.s32 %s133, 1
      %p137 = scmp.eq.s32.totalorder %s22, 1
      %p138 = scmp.ne.s32.totalorder %s133, %s135
      %p139 = scmp.eq.s32.totalorder %s22, 0
      %p140 = por %p138, %p139
      %p141 = scmp.ne.s32.totalorder %s133, %s135
      %p142 = scmp.eq.s32.totalorder %s27, 1
      %p143 = por %p141, %p142
      %p144 = scmp.ne.s32.totalorder %s135, %s136
      %p145 = scmp.eq.s32.totalorder %s27, 0
      %p146 = por %p144, %p145
      %p147 = scmp.ne.s32.totalorder %s135, %s136
      %p148 = scmp.eq.s32.totalorder %s28, 1
      %p149 = por %p147, %p148
      %p151 = scmp.ne.s32.totalorder %s136, %s150
      %p152 = scmp.eq.s32.totalorder %s28, 0
      %p153 = por %p151, %p152
      %s155 = sadd.s32 %s154, 1
      %p158 = scmp.eq.s32.totalorder %s22, 1
      %p159 = scmp.ne.s32.totalorder %s154, %s156
      %p160 = scmp.eq.s32.totalorder %s22, 0
      %p161 = por %p159, %p160
      %p162 = scmp.ne.s32.totalorder %s154, %s156
      %p163 = scmp.eq.s32.totalorder %s27, 1
      %p164 = por %p162, %p163
      %p165 = scmp.ne.s32.totalorder %s156, %s157
      %p166 = scmp.eq.s32.totalorder %s27, 0
      %p167 = por %p165, %p166
      %p168 = scmp.ne.s32.totalorder %s156, %s157
      %p169 = scmp.eq.s32.totalorder %s28, 1
      %p170 = por %p168, %p169
      %p172 = scmp.ne.s32.totalorder %s157, %s171
      %p173 = scmp.eq.s32.totalorder %s28, 0
      %p174 = por %p172, %p173
      %s176 = sadd.s32 %s175, 1
      %p179 = scmp.eq.s32.totalorder %s22, 1
      %p180 = scmp.ne.s32.totalorder %s175, %s177
      %p181 = scmp.eq.s32.totalorder %s22, 0
      %p182 = por %p180, %p181
      %p183 = scmp.ne.s32.totalorder %s175, %s177
      %p184 = scmp.eq.s32.totalorder %s27, 1
      %p185 = por %p183, %p184
      %p186 = scmp.ne.s32.totalorder %s177, %s178
      %p187 = scmp.eq.s32.totalorder %s27, 0
      %p188 = por %p186, %p187
      %p189 = scmp.ne.s32.totalorder %s177, %s178
      %p190 = scmp.eq.s32.totalorder %s28, 1
      %p191 = por %p189, %p190
      %p193 = scmp.ne.s32.totalorder %s178, %s192
      %p194 = scmp.eq.s32.totalorder %s28, 0
      %p195 = por %p193, %p194
      %s197 = sadd.s32 %s196, 1
      %p200 = scmp.eq.s32.totalorder %s22, 1
      %p201 = scmp.ne.s32.totalorder %s196, %s198
      %p202 = scmp.eq.s32.totalorder %s22, 0
      %p203 = por %p201, %p202
      %p204 = scmp.ne.s32.totalorder %s196, %s198
      %p205 = scmp.eq.s32.totalorder %s27, 1
      %p206 = por %p204, %p205
      %p207 = scmp.ne.s32.totalorder %s198, %s199
      %p208 = scmp.eq.s32.totalorder %s27, 0
      %p209 = por %p207, %p208
      %p210 = scmp.ne.s32.totalorder %s198, %s199
      %p211 = scmp.eq.s32.totalorder %s28, 1
      %p212 = por %p210, %p211
      %p214 = scmp.ne.s32.totalorder %s199, %s213
      %p215 = scmp.eq.s32.totalorder %s28, 0
      %p216 = por %p214, %p215
      %s218 = sadd.s32 %s217, 1
      %p221 = scmp.eq.s32.totalorder %s22, 1
      %p222 = scmp.ne.s32.totalorder %s217, %s219
      %p223 = scmp.eq.s32.totalorder %s22, 0
      %p224 = por %p222, %p223
      %p225 = scmp.ne.s32.totalorder %s217, %s219
      %p226 = scmp.eq.s32.totalorder %s27, 1
      %p227 = por %p225, %p226
      %p228 = scmp.ne.s32.totalorder %s219, %s220
      %p229 = scmp.eq.s32.totalorder %s27, 0
      %p230 = por %p228, %p229
      %p231 = scmp.ne.s32.totalorder %s219, %s220
      %p232 = scmp.eq.s32.totalorder %s28, 1
      %p233 = por %p231, %p232
      %p235 = scmp.ne.s32.totalorder %s220, %s234
      %p236 = scmp.eq.s32.totalorder %s28, 0
      %p237 = por %p235, %p236
      %s239 = sadd.s32 %s238, 1
      %p242 = scmp.eq.s32.totalorder %s22, 1
      %p243 = scmp.ne.s32.totalorder %s238, %s240
      %p244 = scmp.eq.s32.totalorder %s22, 0
      %p245 = por %p243, %p244
      %p246 = scmp.ne.s32.totalorder %s238, %s240
      %p247 = scmp.eq.s32.totalorder %s27, 1
      %p248 = por %p246, %p247
      %p249 = scmp.ne.s32.totalorder %s240, %s241
      %p250 = scmp.eq.s32.totalorder %s27, 0
      %p251 = por %p249, %p250
      %p252 = scmp.ne.s32.totalorder %s240, %s241
      %p253 = scmp.eq.s32.totalorder %s28, 1
      %p254 = por %p252, %p253
      %p256 = scmp.ne.s32.totalorder %s241, %s255
      %p257 = scmp.eq.s32.totalorder %s28, 0
      %p258 = por %p256, %p257
      %s260 = sadd.s32 %s259, 1
      %p263 = scmp.eq.s32.totalorder %s22, 1
      %p264 = scmp.ne.s32.totalorder %s259, %s261
      %p265 = scmp.eq.s32.totalorder %s22, 0
      %p266 = por %p264, %p265
      %p267 = scmp.ne.s32.totalorder %s259, %s261
      %p268 = scmp.eq.s32.totalorder %s27, 1
      %p269 = por %p267, %p268
      %p270 = scmp.ne.s32.totalorder %s261, %s262
      %p271 = scmp.eq.s32.totalorder %s27, 0
      %p272 = por %p270, %p271
      %p273 = scmp.ne.s32.totalorder %s261, %s262
      %p274 = scmp.eq.s32.totalorder %s28, 1
      %p275 = por %p273, %p274
      %p277 = scmp.ne.s32.totalorder %s262, %s276
      %p278 = scmp.eq.s32.totalorder %s28, 0
      %p279 = por %p277, %p278
      %s281 = sadd.s32 %s280, 1
      %p284 = scmp.eq.s32.totalorder %s22, 1
      %p285 = scmp.ne.s32.totalorder %s280, %s282
      %p286 = scmp.eq.s32.totalorder %s22, 0
      %p287 = por %p285, %p286
      %p288 = scmp.ne.s32.totalorder %s280, %s282
      %p289 = scmp.eq.s32.totalorder %s27, 1
      %p290 = por %p288, %p289
      %p291 = scmp.ne.s32.totalorder %s282, %s283
      %p292 = scmp.eq.s32.totalorder %s27, 0
      %p293 = por %p291, %p292
      %p294 = scmp.ne.s32.totalorder %s282, %s283
      %p295 = scmp.eq.s32.totalorder %s28, 1
      %p296 = por %p294, %p295
      %p298 = scmp.ne.s32.totalorder %s283, %s297
      %p299 = scmp.eq.s32.totalorder %s28, 0
      %p300 = por %p298, %p299
      %s302 = sadd.s32 %s301, 1
      %p305 = scmp.eq.s32.totalorder %s22, 1
      %p306 = scmp.ne.s32.totalorder %s301, %s303
      %p307 = scmp.eq.s32.totalorder %s22, 0
      %p308 = por %p306, %p307
      %p309 = scmp.ne.s32.totalorder %s301, %s303
      %p310 = scmp.eq.s32.totalorder %s27, 1
      %p311 = por %p309, %p310
      %p312 = scmp.ne.s32.totalorder %s303, %s304
      %p313 = scmp.eq.s32.totalorder %s27, 0
      %p314 = por %p312, %p313
      %p315 = scmp.ne.s32.totalorder %s303, %s304
      %p316 = scmp.eq.s32.totalorder %s28, 1
      %p317 = por %p315, %p316
      %p319 = scmp.ne.s32.totalorder %s304, %s318
      %p320 = scmp.eq.s32.totalorder %s28, 0
      %p321 = por %p319, %p320
      %s322 = ssub.s32 %s29, %s41
      %p323 = scmp.eq.s32.totalorder %s322, 0
      %s325 = sadd.s32 %s324, 1
      %s326 = scalar_select %p323, %s324, %s325
      %p329 = pneg %p323
      %p330 = scmp.eq.s32.totalorder %s22, 1
      %p331 = por %p329, %p330
      %p332 = scmp.ne.s32.totalorder %s324, %s327
      %p333 = scmp.eq.s32.totalorder %s22, 0
      %p334 = por %p332, %p333
      %p335 = scmp.ne.s32.totalorder %s324, %s327
      %p336 = scmp.eq.s32.totalorder %s27, 1
      %p337 = por %p335, %p336
      %p338 = scmp.ne.s32.totalorder %s327, %s328
      %p339 = scmp.eq.s32.totalorder %s27, 0
      %p340 = por %p338, %p339
      %p341 = scmp.ne.s32.totalorder %s327, %s328
      %p342 = scmp.eq.s32.totalorder %s28, 1
      %p343 = por %p341, %p342
      %p345 = scmp.ne.s32.totalorder %s328, %s344
      %p346 = scmp.eq.s32.totalorder %s28, 0
      %p347 = por %p345, %p346
      %p348 = scmp.le.s32.totalorder 1, %s22
      %p349 = scmp.lt.s32.totalorder %s22, 3
      %p350 = pnand %p348, %p349
      %p351 = pneg %p350
      // Predicated region
      $region9: #{pointnetfeat_forward.2} parent=5 // pred_check
        _
      $region10: #{pointnetfeat_forward.2} parent=5 // pred_check_branch
        %353 = sbr.rel (%p350) target = $region12
      $region11: #{pointnetfeat_forward.2} parent=5 // pred_region
        %s354 = ssub.s32 %s22, 1
        // Predicated region
        $region13: #{pointnetfeat_forward.2} parent=11 // pred_check
          %p355 = pneg %p83
        $region14: #{pointnetfeat_forward.2} parent=11 // pred_check_branch
          %357 = sbr.rel (%p355) target = $region16
        $region15: #{pointnetfeat_forward.2} parent=11 // pred_region
          _
        $region16: #{pointnetfeat_forward.2} parent=11 // pred_fallthru
          _
        // Predicated region
        $region17: #{pointnetfeat_forward.2} parent=11 // pred_check
          %p358 = pneg %p104
        $region18: #{pointnetfeat_forward.2} parent=11 // pred_check_branch
          %360 = sbr.rel (%p358) target = $region20
        $region19: #{pointnetfeat_forward.2} parent=11 // pred_region
          _
        $region20: #{pointnetfeat_forward.2} parent=11 // pred_fallthru
          _
        // Predicated region
        $region21: #{pointnetfeat_forward.2} parent=11 // pred_check
          %p361 = pneg %p125
        $region22: #{pointnetfeat_forward.2} parent=11 // pred_check_branch
          %363 = sbr.rel (%p361) target = $region24
        $region23: #{pointnetfeat_forward.2} parent=11 // pred_region
          _
        $region24: #{pointnetfeat_forward.2} parent=11 // pred_fallthru
          _
        // Predicated region
        $region25: #{pointnetfeat_forward.2} parent=11 // pred_check
          %p364 = pneg %p146
        $region26: #{pointnetfeat_forward.2} parent=11 // pred_check_branch
          %366 = sbr.rel (%p364) target = $region28
        $region27: #{pointnetfeat_forward.2} parent=11 // pred_region
          _
        $region28: #{pointnetfeat_forward.2} parent=11 // pred_fallthru
          _
        // Predicated region
        $region29: #{pointnetfeat_forward.2} parent=11 // pred_check
          %p367 = pneg %p167
        $region30: #{pointnetfeat_forward.2} parent=11 // pred_check_branch
          %369 = sbr.rel (%p367) target = $region32
        $region31: #{pointnetfeat_forward.2} parent=11 // pred_region
          %s371 = ssub.s32 8192, 8192
          %372 = vsyncadd [#allocation4], %s371
          %s373 = sshll.u32 [#allocation3], 4
          %s374 = int_to_ptr.vmem [resolvable:$true] %s373
          %379 = dma.hbm_to_vmem [thread:$0]  %s5, 8192, %s374, [#allocation4], 512, 512, 32
        $region32: #{pointnetfeat_forward.2} parent=11 // pred_fallthru
          _
        // Predicated region
        $region33: #{pointnetfeat_forward.2} parent=11 // pred_check
          %p380 = pneg %p188
        $region34: #{pointnetfeat_forward.2} parent=11 // pred_check_branch
          %382 = sbr.rel (%p380) target = $region36
        $region35: #{pointnetfeat_forward.2} parent=11 // pred_region
          _
        $region36: #{pointnetfeat_forward.2} parent=11 // pred_fallthru
          _
        // Predicated region
        $region37: #{pointnetfeat_forward.2} parent=11 // pred_check
          %p383 = pneg %p209
        $region38: #{pointnetfeat_forward.2} parent=11 // pred_check_branch
          %385 = sbr.rel (%p383) target = $region40
        $region39: #{pointnetfeat_forward.2} parent=11 // pred_region
          %s387 = ssub.s32 32768, 32768
          %388 = vsyncadd [#allocation6], %s387
          %s389 = sshll.u32 [#allocation5], 4
          %s390 = int_to_ptr.vmem [resolvable:$true] %s389
          %395 = dma.hbm_to_vmem [thread:$0]  %s7, 32768, %s390, [#allocation6], 256, 256, 16
        $region40: #{pointnetfeat_forward.2} parent=11 // pred_fallthru
          _
        // Predicated region
        $region41: #{pointnetfeat_forward.2} parent=11 // pred_check
          %p396 = pneg %p230
        $region42: #{pointnetfeat_forward.2} parent=11 // pred_check_branch
          %398 = sbr.rel (%p396) target = $region44
        $region43: #{pointnetfeat_forward.2} parent=11 // pred_region
          _
        $region44: #{pointnetfeat_forward.2} parent=11 // pred_fallthru
          _
        // Predicated region
        $region45: #{pointnetfeat_forward.2} parent=11 // pred_check
          %p399 = pneg %p251
        $region46: #{pointnetfeat_forward.2} parent=11 // pred_check_branch
          %401 = sbr.rel (%p399) target = $region48
        $region47: #{pointnetfeat_forward.2} parent=11 // pred_region
          %s403 = ssub.s32 8192, 8192
          %404 = vsyncadd [#allocation6], %s403
          %s405 = sshll.u32 [#allocation7], 4
          %s406 = int_to_ptr.vmem [resolvable:$true] %s405
          %411 = dma.hbm_to_vmem [thread:$0]  %s9, 8192, %s406, [#allocation6], 128, 128, 8
        $region48: #{pointnetfeat_forward.2} parent=11 // pred_fallthru
          _
        // Predicated region
        $region49: #{pointnetfeat_forward.2} parent=11 // pred_check
          %p412 = pneg %p272
        $region50: #{pointnetfeat_forward.2} parent=11 // pred_check_branch
          %414 = sbr.rel (%p412) target = $region52
        $region51: #{pointnetfeat_forward.2} parent=11 // pred_region
          _
        $region52: #{pointnetfeat_forward.2} parent=11 // pred_fallthru
          _
        // Predicated region
        $region53: #{pointnetfeat_forward.2} parent=11 // pred_check
          %p415 = pneg %p293
        $region54: #{pointnetfeat_forward.2} parent=11 // pred_check_branch
          %417 = sbr.rel (%p415) target = $region56
        $region55: #{pointnetfeat_forward.2} parent=11 // pred_region
          %s419 = ssub.s32 2048, 2048
          %420 = vsyncadd [#allocation9], %s419
          %s421 = sshll.u32 [#allocation8], 4
          %s422 = int_to_ptr.vmem [resolvable:$true] %s421
          %427 = dma.hbm_to_vmem [thread:$0]  %s11, 2048, %s422, [#allocation9], 64, 64, 4
        $region56: #{pointnetfeat_forward.2} parent=11 // pred_fallthru
          _
        // Predicated region
        $region57: #{pointnetfeat_forward.2} parent=11 // pred_check
          %p428 = pneg %p314
        $region58: #{pointnetfeat_forward.2} parent=11 // pred_check_branch
          %430 = sbr.rel (%p428) target = $region60
        $region59: #{pointnetfeat_forward.2} parent=11 // pred_region
          _
        $region60: #{pointnetfeat_forward.2} parent=11 // pred_fallthru
          _
      $region12: #{pointnetfeat_forward.2} parent=5 // pred_fallthru
        _
      %p431 = scmp.lt.s32.totalorder %s22, 2
      // Predicated region
      $region61: #{pointnetfeat_forward.2} parent=5 // pred_check
        %p432 = pneg %p431
      $region62: #{pointnetfeat_forward.2} parent=5 // pred_check_branch
        %434 = sbr.rel (%p432) target = $region64
      $region63: #{pointnetfeat_forward.2} parent=5 // pred_region
        // Predicated region
        $region65: #{pointnetfeat_forward.2} parent=63 // pred_check
          %p435 = pneg %p56
        $region66: #{pointnetfeat_forward.2} parent=63 // pred_check_branch
          %437 = sbr.rel (%p435) target = $region68
        $region67: #{pointnetfeat_forward.2} parent=63 // pred_region
          %s438 = smul.u32 2, %s30
          %p439 = scmp.lt.s32.totalorder %s29, 1
          %s440 = scalar_select %p439, %s29, 1
          %p441 = scmp.lt.s32.totalorder %s438, 1
          %s442 = scalar_select %p441, %s438, 1
          %s443 = smul.addr %s440, 2
          %s444 = sadd.s32 %s442, %s443
          %s445 = smul.addr %s444, 8
          %s446 = scalar_lea.vmem %s0, %s445
          %s447 = smul.u32 2, %s30
        $region68: #{pointnetfeat_forward.2} parent=63 // pred_fallthru
          _
      $region64: #{pointnetfeat_forward.2} parent=5 // pred_fallthru
        _
      %p448 = scmp.le.s32.totalorder 1, %s22
      %p449 = scmp.lt.s32.totalorder %s22, 3
      %p450 = pnand %p448, %p449
      %p451 = pneg %p450
      // Predicated region
      $region69: #{pointnetfeat_forward.2} parent=5 // pred_check
        _
      $region70: #{pointnetfeat_forward.2} parent=5 // pred_check_branch
        %453 = sbr.rel (%p450) target = $region72
      $region71: #{pointnetfeat_forward.2} parent=5 // pred_region
        %s454 = ssub.s32 %s22, 1
        // Predicated region
        $region73: #{pointnetfeat_forward.2} parent=71 // pred_check
          %p455 = pneg %p167
        $region74: #{pointnetfeat_forward.2} parent=71 // pred_check_branch
          %457 = sbr.rel (%p455) target = $region76
        $region75: #{pointnetfeat_forward.2} parent=71 // pred_region
          %458 = dma.done [#allocation4], 8192
        $region76: #{pointnetfeat_forward.2} parent=71 // pred_fallthru
          _
        // Predicated region
        $region77: #{pointnetfeat_forward.2} parent=71 // pred_check
          %p459 = pneg %p209
        $region78: #{pointnetfeat_forward.2} parent=71 // pred_check_branch
          %461 = sbr.rel (%p459) target = $region80
        $region79: #{pointnetfeat_forward.2} parent=71 // pred_region
          %462 = dma.done [#allocation6], 32768
        $region80: #{pointnetfeat_forward.2} parent=71 // pred_fallthru
          _
        // Predicated region
        $region81: #{pointnetfeat_forward.2} parent=71 // pred_check
          %p463 = pneg %p251
        $region82: #{pointnetfeat_forward.2} parent=71 // pred_check_branch
          %465 = sbr.rel (%p463) target = $region84
        $region83: #{pointnetfeat_forward.2} parent=71 // pred_region
          %466 = dma.done [#allocation6], 8192
        $region84: #{pointnetfeat_forward.2} parent=71 // pred_fallthru
          _
        // Predicated region
        $region85: #{pointnetfeat_forward.2} parent=71 // pred_check
          %p467 = pneg %p293
        $region86: #{pointnetfeat_forward.2} parent=71 // pred_check_branch
          %469 = sbr.rel (%p467) target = $region88
        $region87: #{pointnetfeat_forward.2} parent=71 // pred_region
          %470 = dma.done [#allocation9], 2048
        $region88: #{pointnetfeat_forward.2} parent=71 // pred_fallthru
          _
        %s471 = smul.u32 2, %s32
        %p472 = scmp.lt.s32.totalorder %s31, 1
        %s473 = scalar_select %p472, %s31, 1
        %p474 = scmp.lt.s32.totalorder %s471, 1
        %s475 = scalar_select %p474, %s471, 1
        %s476 = smul.addr %s473, 2
        %s477 = sadd.s32 %s475, %s476
        %s478 = smul.addr %s477, 8
        %s479 = scalar_lea.vmem %s0, %s478
        %p480 = pneg %p62
        %p481 = pneg %p59
        %p482 = pneg %p83
        %p483 = pneg %p80
        %p484 = pneg %p104
        %p485 = pneg %p101
        %p486 = pneg %p125
        %p487 = pneg %p122
        %p488 = pneg %p146
        %p489 = pneg %p143
        %p490 = pneg %p167
        %p491 = pneg %p164
        %p492 = pneg %p188
        %p493 = pneg %p185
        %p494 = pneg %p209
        %p495 = pneg %p206
        %p496 = pneg %p230
        %p497 = pneg %p227
        %p498 = pneg %p251
        %p499 = pneg %p248
        %p500 = pneg %p272
        %p501 = pneg %p269
        %p502 = pneg %p293
        %p503 = pneg %p290
        %p504 = pneg %p314
        %p505 = pneg %p311
        %p506 = pneg %p340
        %p507 = pneg %p337
        %p508 = scmp.lt.s32.totalorder %s31, 1
        %s509 = scalar_select %p508, %s31, 1
        %s510 = scalar_lea.vmem %s13, %s509
        %s511 = smul.u32 2, %s32
        %p512 = scmp.lt.s32.totalorder %s31, 1
        %s513 = scalar_select %p512, %s31, 1
        %p514 = scmp.lt.s32.totalorder %s511, 1
        %s515 = scalar_select %p514, %s511, 1
        %s516 = smul.addr %s513, 2
        %s517 = sadd.s32 %s515, %s516
        %s518 = smul.addr %s517, 8
        %s519 = scalar_lea.vmem %s0, %s518
        %s520 = smul.u32 2, %s32
        %p521 = scmp.lt.s32.totalorder %s31, 1
        %s522 = scalar_select %p521, %s31, 1
        %s523 = scalar_lea.vmem %s13, %s522
        %v525 = vld [vmem:[%s519] sm:$0xff]
        %v526 = vld [vmem:[%s519 + $0x8] sm:$0xff]
        %v527 = vld [vmem:[%s1] sm:$0x7]
        %529 = vset.pattern.permute.xlu0 0
        %530 = vperm.xlu0 %529, %v525
        %v531 = vpop.permute.xlu0 %530
        %534 = vset.pattern.permute.xlu0 0
        %535 = vperm.xlu0 %534, %v526
        %v536 = vpop.permute.xlu0 %535
        %v538 = vlaneseq
        %v539 = vshrl.u32 %v538, 7
        %v540 = vsub.s32 0, %v539
        %v541 = vrot.slane %v527, %v540
        %v542 = vmul.f32 %v531, %v541
        %v543 = vmul.f32 %v536, %v541
        %544 = vset.pattern.permute.xlu0 1
        %545 = vperm.xlu0 %544, %v525
        %v546 = vpop.permute.xlu0 %545
        %548 = vset.pattern.permute.xlu0 1
        %549 = vperm.xlu0 %548, %v526
        %v550 = vpop.permute.xlu0 %549
        %v552 = vlaneseq
        %v553 = vshrl.u32 %v552, 7
        %v554 = vsub.s32 1, %v553
        %v555 = vrot.slane %v527, %v554
        %v556 = vmul.f32 %v546, %v555
        %v557 = vmul.f32 %v550, %v555
        %v558 = vadd.f32 %v542, %v556
        %v559 = vadd.f32 %v543, %v557
        %560 = vset.pattern.permute.xlu0 2
        %561 = vperm.xlu0 %560, %v525
        %v562 = vpop.permute.xlu0 %561
        %564 = vset.pattern.permute.xlu0 2
        %565 = vperm.xlu0 %564, %v526
        %v566 = vpop.permute.xlu0 %565
        %v568 = vlaneseq
        %v569 = vshrl.u32 %v568, 7
        %v570 = vsub.s32 2, %v569
        %v571 = vrot.slane %v527, %v570
        %v572 = vmul.f32 %v562, %v571
        %v573 = vmul.f32 %v566, %v571
        %v574 = vadd.f32 %v558, %v572
        %v575 = vadd.f32 %v559, %v573
        %v576 = vld [vmem:[%s2] sm:$0x1]
        %v578 = vlaneseq
        %v579 = vshrl.u32 %v578, 7
        %v580 = vsub.s32 0, %v579
        %v581 = vrot.slane %v576, %v580
        %v583 = vadd.f32 %v574, %v581
        %v584 = vadd.f32 %v575, %v581
        %v585 = vmax.f32 %v583, 0.0
        %v586 = vmax.f32 %v584, 0.0
        %v587 = vpack.c.bf16 %v586, %v585
        %v588 = vld [vmem:[%s3] sm:$0xf]
        %v589 = vld [vmem:[%s3 + $0x4] sm:$0xf]
        %v590 = vld [vmem:[%s3 + $0x8] sm:$0xf]
        %v591 = vld [vmem:[%s3 + $0xc] sm:$0xf]
        %v592 = vld [vmem:[%s3 + $0x10] sm:$0xf]
        %v593 = vld [vmem:[%s3 + $0x14] sm:$0xf]
        %v594 = vld [vmem:[%s3 + $0x18] sm:$0xf]
        %v595 = vld [vmem:[%s3 + $0x1c] sm:$0xf]
        %v596 = vld [vmem:[%s4] sm:$0x1]
        %v598 = vlaneseq
        %v599 = vshrl.u32 %v598, 7
        %v600 = vsub.s32 0, %v599
        %v601 = vrot.slane %v596, %v600
        %v611 = vunpack.c.l.b16 %v588
        %v612 = vunpack.c.l.b16 %v589
        %v613 = vunpack.c.l.b16 %v590
        %v614 = vunpack.c.l.b16 %v591
        %v615 = vunpack.c.l.b16 %v592
        %v616 = vunpack.c.l.b16 %v593
        %v617 = vunpack.c.l.b16 %v594
        %v618 = vunpack.c.l.b16 %v595
        %v619 = vpack.c.b16 %v612, %v611
        %v620 = vpack.c.b16 %v614, %v613
        %v621 = vpack.c.b16 %v616, %v615
        %v622 = vpack.c.b16 %v618, %v617
        %vm627 = vcmask 523264
        %v629 = vsel %vm627, %v587, 0
        %631 = vmatprep.subr.bf16.mxu0 0
        %632 = vmatpush1.bf16.msra.mxu0 0
        %633 = vmatprep.subr.bf16.mxu0 0
        %634 = vmatpush1.bf16.msra.mxu0 0
        %635 = vmatprep.subr.bf16.mxu0 0
        %636 = vmatpush1.bf16.msra.mxu0 0
        %637 = vmatprep.subr.bf16.mxu0 0
        %638 = vmatpush1.bf16.msra.mxu0 0
        %639 = vmatprep.subr.bf16.mxu0 0
        %640 = vmatpush1.bf16.msra.mxu0 %v622
        %641 = vmatprep.subr.bf16.mxu0 0
        %642 = vmatpush1.bf16.msra.mxu0 %v621
        %643 = vmatprep.subr.bf16.mxu0 0
        %644 = vmatpush1.bf16.msra.mxu0 %v620
        %645 = vmatprep.subr.bf16.mxu0 0
        %646 = vmatpush1.bf16.msra.mxu0 %v619
        %647 = vmatprep.subr.bf16.mxu0 0
        %648 = vmatpush2.bf16.msra.mxu0 0
        %649 = vmatprep.subr.bf16.mxu0 0
        %650 = vmatpush2.bf16.msra.mxu0 0
        %651 = vmatprep.subr.bf16.mxu0 0
        %652 = vmatpush2.bf16.msra.mxu0 0
        %653 = vmatprep.subr.bf16.mxu0 0
        %654 = vmatpush2.bf16.msra.mxu0 0
        %655 = vmatprep.subr.bf16.mxu0 0
        %656 = vmatpush2.bf16.msra.mxu0 0
        %657 = vmatprep.subr.bf16.mxu0 0
        %658 = vmatpush2.bf16.msra.mxu0 0
        %659 = vmatprep.subr.bf16.mxu0 0
        %660 = vmatpush2.bf16.msra.mxu0 0
        %661 = vmatprep.subr.bf16.mxu0 0
        %662 = vmatpush2.bf16.msra.mxu0 0
        %663 = vmatprep.mubr.bf16.mxu0 0
        %664 = vmatmul.mubr.bf16.gmra.mxu0 %v629
        %v665 = vpop.f32.mrf.mxu0
        %v666 = vadd.f32 %v601, %v665
        %v667 = vpop.f32.mrf.mxu0
        %v668 = vpop.f32.mrf.mxu0
        %v669 = vadd.f32 %v601, %v668
        %v670 = vpop.f32.mrf.mxu0
        %671 = vdwg.mxu0
        %v672 = vmax.f32 %v666, 0.0
        %v673 = vmax.f32 %v669, 0.0
        %v674 = vpack.c.bf16 %v673, %v672
        %v675 = vld [vmem:[#allocation3] sm:$0xff]
        %v676 = vld [vmem:[#allocation3 + $0x8] sm:$0xff]
        %v677 = vld [vmem:[#allocation3 + $0x10] sm:$0xff]
        %v678 = vld [vmem:[#allocation3 + $0x18] sm:$0xff]
        %v679 = vld [vmem:[#allocation3 + $0x20] sm:$0xff]
        %v680 = vld [vmem:[#allocation3 + $0x28] sm:$0xff]
        %v681 = vld [vmem:[#allocation3 + $0x30] sm:$0xff]
        %v682 = vld [vmem:[#allocation3 + $0x38] sm:$0xff]
        %v683 = vld [vmem:[#allocation3 + $0x40] sm:$0xff]
        %v684 = vld [vmem:[#allocation3 + $0x48] sm:$0xff]
        %v685 = vld [vmem:[#allocation3 + $0x50] sm:$0xff]
        %v686 = vld [vmem:[#allocation3 + $0x58] sm:$0xff]
        %v687 = vld [vmem:[#allocation3 + $0x60] sm:$0xff]
        %v688 = vld [vmem:[#allocation3 + $0x68] sm:$0xff]
        %v689 = vld [vmem:[#allocation3 + $0x70] sm:$0xff]
        %v690 = vld [vmem:[#allocation3 + $0x78] sm:$0xff]
        %v691 = vld [vmem:[#allocation3 + $0x80] sm:$0xff]
        %v692 = vld [vmem:[#allocation3 + $0x88] sm:$0xff]
        %v693 = vld [vmem:[#allocation3 + $0x90] sm:$0xff]
        %v694 = vld [vmem:[#allocation3 + $0x98] sm:$0xff]
        %v695 = vld [vmem:[#allocation3 + $0xa0] sm:$0xff]
        %v696 = vld [vmem:[#allocation3 + $0xa8] sm:$0xff]
        %v697 = vld [vmem:[#allocation3 + $0xb0] sm:$0xff]
        %v698 = vld [vmem:[#allocation3 + $0xb8] sm:$0xff]
        %v699 = vld [vmem:[#allocation3 + $0xc0] sm:$0xff]
        %v700 = vld [vmem:[#allocation3 + $0xc8] sm:$0xff]
        %v701 = vld [vmem:[#allocation3 + $0xd0] sm:$0xff]
        %v702 = vld [vmem:[#allocation3 + $0xd8] sm:$0xff]
        %v703 = vld [vmem:[#allocation3 + $0xe0] sm:$0xff]
        %v704 = vld [vmem:[#allocation3 + $0xe8] sm:$0xff]
        %v705 = vld [vmem:[#allocation3 + $0xf0] sm:$0xff]
        %v706 = vld [vmem:[#allocation3 + $0xf8] sm:$0xff]
        %v707 = vld [vmem:[#allocation3 + $0x100] sm:$0xff]
        %v708 = vld [vmem:[#allocation3 + $0x108] sm:$0xff]
        %v709 = vld [vmem:[#allocation3 + $0x110] sm:$0xff]
        %v710 = vld [vmem:[#allocation3 + $0x118] sm:$0xff]
        %v711 = vld [vmem:[#allocation3 + $0x120] sm:$0xff]
        %v712 = vld [vmem:[#allocation3 + $0x128] sm:$0xff]
        %v713 = vld [vmem:[#allocation3 + $0x130] sm:$0xff]
        %v714 = vld [vmem:[#allocation3 + $0x138] sm:$0xff]
        %v715 = vld [vmem:[#allocation3 + $0x140] sm:$0xff]
        %v716 = vld [vmem:[#allocation3 + $0x148] sm:$0xff]
        %v717 = vld [vmem:[#allocation3 + $0x150] sm:$0xff]
        %v718 = vld [vmem:[#allocation3 + $0x158] sm:$0xff]
        %v719 = vld [vmem:[#allocation3 + $0x160] sm:$0xff]
        %v720 = vld [vmem:[#allocation3 + $0x168] sm:$0xff]
        %v721 = vld [vmem:[#allocation3 + $0x170] sm:$0xff]
        %v722 = vld [vmem:[#allocation3 + $0x178] sm:$0xff]
        %v723 = vld [vmem:[#allocation3 + $0x180] sm:$0xff]
        %v724 = vld [vmem:[#allocation3 + $0x188] sm:$0xff]
        %v725 = vld [vmem:[#allocation3 + $0x190] sm:$0xff]
        %v726 = vld [vmem:[#allocation3 + $0x198] sm:$0xff]
        %v727 = vld [vmem:[#allocation3 + $0x1a0] sm:$0xff]
        %v728 = vld [vmem:[#allocation3 + $0x1a8] sm:$0xff]
        %v729 = vld [vmem:[#allocation3 + $0x1b0] sm:$0xff]
        %v730 = vld [vmem:[#allocation3 + $0x1b8] sm:$0xff]
        %v731 = vld [vmem:[#allocation3 + $0x1c0] sm:$0xff]
        %v732 = vld [vmem:[#allocation3 + $0x1c8] sm:$0xff]
        %v733 = vld [vmem:[#allocation3 + $0x1d0] sm:$0xff]
        %v734 = vld [vmem:[#allocation3 + $0x1d8] sm:$0xff]
        %v735 = vld [vmem:[#allocation3 + $0x1e0] sm:$0xff]
        %v736 = vld [vmem:[#allocation3 + $0x1e8] sm:$0xff]
        %v737 = vld [vmem:[#allocation3 + $0x1f0] sm:$0xff]
        %v738 = vld [vmem:[#allocation3 + $0x1f8] sm:$0xff]
        %v803 = vunpack.c.l.b16 %v675
        %v804 = vunpack.c.h.b16 %v675
        %v805 = vunpack.c.l.b16 %v676
        %v806 = vunpack.c.h.b16 %v676
        %v807 = vunpack.c.l.b16 %v677
        %v808 = vunpack.c.h.b16 %v677
        %v809 = vunpack.c.l.b16 %v678
        %v810 = vunpack.c.h.b16 %v678
        %v811 = vunpack.c.l.b16 %v679
        %v812 = vunpack.c.h.b16 %v679
        %v813 = vunpack.c.l.b16 %v680
        %v814 = vunpack.c.h.b16 %v680
        %v815 = vunpack.c.l.b16 %v681
        %v816 = vunpack.c.h.b16 %v681
        %v817 = vunpack.c.l.b16 %v682
        %v818 = vunpack.c.h.b16 %v682
        %v819 = vunpack.c.l.b16 %v683
        %v820 = vunpack.c.h.b16 %v683
        %v821 = vunpack.c.l.b16 %v684
        %v822 = vunpack.c.h.b16 %v684
        %v823 = vunpack.c.l.b16 %v685
        %v824 = vunpack.c.h.b16 %v685
        %v825 = vunpack.c.l.b16 %v686
        %v826 = vunpack.c.h.b16 %v686
        %v827 = vunpack.c.l.b16 %v687
        %v828 = vunpack.c.h.b16 %v687
        %v829 = vunpack.c.l.b16 %v688
        %v830 = vunpack.c.h.b16 %v688
        %v831 = vunpack.c.l.b16 %v689
        %v832 = vunpack.c.h.b16 %v689
        %v833 = vunpack.c.l.b16 %v690
        %v834 = vunpack.c.h.b16 %v690
        %v835 = vunpack.c.l.b16 %v691
        %v836 = vunpack.c.h.b16 %v691
        %v837 = vunpack.c.l.b16 %v692
        %v838 = vunpack.c.h.b16 %v692
        %v839 = vunpack.c.l.b16 %v693
        %v840 = vunpack.c.h.b16 %v693
        %v841 = vunpack.c.l.b16 %v694
        %v842 = vunpack.c.h.b16 %v694
        %v843 = vunpack.c.l.b16 %v695
        %v844 = vunpack.c.h.b16 %v695
        %v845 = vunpack.c.l.b16 %v696
        %v846 = vunpack.c.h.b16 %v696
        %v847 = vunpack.c.l.b16 %v697
        %v848 = vunpack.c.h.b16 %v697
        %v849 = vunpack.c.l.b16 %v698
        %v850 = vunpack.c.h.b16 %v698
        %v851 = vunpack.c.l.b16 %v699
        %v852 = vunpack.c.h.b16 %v699
        %v853 = vunpack.c.l.b16 %v700
        %v854 = vunpack.c.h.b16 %v700
        %v855 = vunpack.c.l.b16 %v701
        %v856 = vunpack.c.h.b16 %v701
        %v857 = vunpack.c.l.b16 %v702
        %v858 = vunpack.c.h.b16 %v702
        %v859 = vunpack.c.l.b16 %v703
        %v860 = vunpack.c.h.b16 %v703
        %v861 = vunpack.c.l.b16 %v704
        %v862 = vunpack.c.h.b16 %v704
        %v863 = vunpack.c.l.b16 %v705
        %v864 = vunpack.c.h.b16 %v705
        %v865 = vunpack.c.l.b16 %v706
        %v866 = vunpack.c.h.b16 %v706
        %v867 = vunpack.c.l.b16 %v707
        %v868 = vunpack.c.h.b16 %v707
        %v869 = vunpack.c.l.b16 %v708
        %v870 = vunpack.c.h.b16 %v708
        %v871 = vunpack.c.l.b16 %v709
        %v872 = vunpack.c.h.b16 %v709
        %v873 = vunpack.c.l.b16 %v710
        %v874 = vunpack.c.h.b16 %v710
        %v875 = vunpack.c.l.b16 %v711
        %v876 = vunpack.c.h.b16 %v711
        %v877 = vunpack.c.l.b16 %v712
        %v878 = vunpack.c.h.b16 %v712
        %v879 = vunpack.c.l.b16 %v713
        %v880 = vunpack.c.h.b16 %v713
        %v881 = vunpack.c.l.b16 %v714
        %v882 = vunpack.c.h.b16 %v714
        %v883 = vunpack.c.l.b16 %v715
        %v884 = vunpack.c.h.b16 %v715
        %v885 = vunpack.c.l.b16 %v716
        %v886 = vunpack.c.h.b16 %v716
        %v887 = vunpack.c.l.b16 %v717
        %v888 = vunpack.c.h.b16 %v717
        %v889 = vunpack.c.l.b16 %v718
        %v890 = vunpack.c.h.b16 %v718
        %v891 = vunpack.c.l.b16 %v719
        %v892 = vunpack.c.h.b16 %v719
        %v893 = vunpack.c.l.b16 %v720
        %v894 = vunpack.c.h.b16 %v720
        %v895 = vunpack.c.l.b16 %v721
        %v896 = vunpack.c.h.b16 %v721
        %v897 = vunpack.c.l.b16 %v722
        %v898 = vunpack.c.h.b16 %v722
        %v899 = vunpack.c.l.b16 %v723
        %v900 = vunpack.c.h.b16 %v723
        %v901 = vunpack.c.l.b16 %v724
        %v902 = vunpack.c.h.b16 %v724
        %v903 = vunpack.c.l.b16 %v725
        %v904 = vunpack.c.h.b16 %v725
        %v905 = vunpack.c.l.b16 %v726
        %v906 = vunpack.c.h.b16 %v726
        %v907 = vunpack.c.l.b16 %v727
        %v908 = vunpack.c.h.b16 %v727
        %v909 = vunpack.c.l.b16 %v728
        %v910 = vunpack.c.h.b16 %v728
        %v911 = vunpack.c.l.b16 %v729
        %v912 = vunpack.c.h.b16 %v729
        %v913 = vunpack.c.l.b16 %v730
        %v914 = vunpack.c.h.b16 %v730
        %v915 = vunpack.c.l.b16 %v731
        %v916 = vunpack.c.h.b16 %v731
        %v917 = vunpack.c.l.b16 %v732
        %v918 = vunpack.c.h.b16 %v732
        %v919 = vunpack.c.l.b16 %v733
        %v920 = vunpack.c.h.b16 %v733
        %v921 = vunpack.c.l.b16 %v734
        %v922 = vunpack.c.h.b16 %v734
        %v923 = vunpack.c.l.b16 %v735
        %v924 = vunpack.c.h.b16 %v735
        %v925 = vunpack.c.l.b16 %v736
        %v926 = vunpack.c.h.b16 %v736
        %v927 = vunpack.c.l.b16 %v737
        %v928 = vunpack.c.h.b16 %v737
        %v929 = vunpack.c.l.b16 %v738
        %v930 = vunpack.c.h.b16 %v738
        %v931 = vpack.c.b16 %v811, %v803
        %v932 = vpack.c.b16 %v812, %v804
        %v933 = vpack.c.b16 %v813, %v805
        %v934 = vpack.c.b16 %v814, %v806
        %v935 = vpack.c.b16 %v815, %v807
        %v936 = vpack.c.b16 %v816, %v808
        %v937 = vpack.c.b16 %v817, %v809
        %v938 = vpack.c.b16 %v818, %v810
        %v939 = vpack.c.b16 %v827, %v819
        %v940 = vpack.c.b16 %v828, %v820
        %v941 = vpack.c.b16 %v829, %v821
        %v942 = vpack.c.b16 %v830, %v822
        %v943 = vpack.c.b16 %v831, %v823
        %v944 = vpack.c.b16 %v832, %v824
        %v945 = vpack.c.b16 %v833, %v825
        %v946 = vpack.c.b16 %v834, %v826
        %v947 = vpack.c.b16 %v843, %v835
        %v948 = vpack.c.b16 %v844, %v836
        %v949 = vpack.c.b16 %v845, %v837
        %v950 = vpack.c.b16 %v846, %v838
        %v951 = vpack.c.b16 %v847, %v839
        %v952 = vpack.c.b16 %v848, %v840
        %v953 = vpack.c.b16 %v849, %v841
        %v954 = vpack.c.b16 %v850, %v842
        %v955 = vpack.c.b16 %v859, %v851
        %v956 = vpack.c.b16 %v860, %v852
        %v957 = vpack.c.b16 %v861, %v853
        %v958 = vpack.c.b16 %v862, %v854
        %v959 = vpack.c.b16 %v863, %v855
        %v960 = vpack.c.b16 %v864, %v856
        %v961 = vpack.c.b16 %v865, %v857
        %v962 = vpack.c.b16 %v866, %v858
        %v963 = vpack.c.b16 %v875, %v867
        %v964 = vpack.c.b16 %v876, %v868
        %v965 = vpack.c.b16 %v877, %v869
        %v966 = vpack.c.b16 %v878, %v870
        %v967 = vpack.c.b16 %v879, %v871
        %v968 = vpack.c.b16 %v880, %v872
        %v969 = vpack.c.b16 %v881, %v873
        %v970 = vpack.c.b16 %v882, %v874
        %v971 = vpack.c.b16 %v891, %v883
        %v972 = vpack.c.b16 %v892, %v884
        %v973 = vpack.c.b16 %v893, %v885
        %v974 = vpack.c.b16 %v894, %v886
        %v975 = vpack.c.b16 %v895, %v887
        %v976 = vpack.c.b16 %v896, %v888
        %v977 = vpack.c.b16 %v897, %v889
        %v978 = vpack.c.b16 %v898, %v890
        %v979 = vpack.c.b16 %v907, %v899
        %v980 = vpack.c.b16 %v908, %v900
        %v981 = vpack.c.b16 %v909, %v901
        %v982 = vpack.c.b16 %v910, %v902
        %v983 = vpack.c.b16 %v911, %v903
        %v984 = vpack.c.b16 %v912, %v904
        %v985 = vpack.c.b16 %v913, %v905
        %v986 = vpack.c.b16 %v914, %v906
        %v987 = vpack.c.b16 %v923, %v915
        %v988 = vpack.c.b16 %v924, %v916
        %v989 = vpack.c.b16 %v925, %v917
        %v990 = vpack.c.b16 %v926, %v918
        %v991 = vpack.c.b16 %v927, %v919
        %v992 = vpack.c.b16 %v928, %v920
        %v993 = vpack.c.b16 %v929, %v921
        %v994 = vpack.c.b16 %v930, %v922
        %1059 = vmatprep.subr.bf16.mxu0 %v988
        %1060 = vmatpush1.bf16.msra.mxu0 %v987
        %1061 = vmatprep.subr.bf16.mxu0 %v980
        %1062 = vmatpush1.bf16.msra.mxu0 %v979
        %1063 = vmatprep.subr.bf16.mxu0 %v972
        %1064 = vmatpush1.bf16.msra.mxu0 %v971
        %1065 = vmatprep.subr.bf16.mxu0 %v964
        %1066 = vmatpush1.bf16.msra.mxu0 %v963
        %1067 = vmatprep.subr.bf16.mxu0 %v956
        %1068 = vmatpush1.bf16.msra.mxu0 %v955
        %1069 = vmatprep.subr.bf16.mxu0 %v948
        %1070 = vmatpush1.bf16.msra.mxu0 %v947
        %1071 = vmatprep.subr.bf16.mxu0 %v940
        %1072 = vmatpush1.bf16.msra.mxu0 %v939
        %1073 = vmatprep.subr.bf16.mxu0 %v932
        %1074 = vmatpush1.bf16.msra.mxu0 %v931
        %1075 = vmatprep.subr.bf16.mxu0 0
        %1076 = vmatpush2.bf16.msra.mxu0 0
        %1077 = vmatprep.subr.bf16.mxu0 0
        %1078 = vmatpush2.bf16.msra.mxu0 0
        %1079 = vmatprep.subr.bf16.mxu0 0
        %1080 = vmatpush2.bf16.msra.mxu0 0
        %1081 = vmatprep.subr.bf16.mxu0 0
        %1082 = vmatpush2.bf16.msra.mxu0 0
        %1083 = vmatprep.subr.bf16.mxu0 0
        %1084 = vmatpush2.bf16.msra.mxu0 0
        %1085 = vmatprep.subr.bf16.mxu0 0
        %1086 = vmatpush2.bf16.msra.mxu0 0
        %1087 = vmatprep.subr.bf16.mxu0 0
        %1088 = vmatpush2.bf16.msra.mxu0 0
        %1089 = vmatprep.subr.bf16.mxu0 0
        %1090 = vmatpush2.bf16.msra.mxu0 0
        %1091 = vmatprep.mubr.bf16.mxu0 0
        %1092 = vmatmul.mubr.bf16.gmra.mxu0 %v674
        %v1093 = vpop.f32.mrf.mxu0
        %v1094 = vadd.f32 0.0, %v1093
        %v1095 = vpop.f32.mrf.mxu0
        %v1096 = vadd.f32 0.0, %v1095
        %v1097 = vpop.f32.mrf.mxu0
        %v1098 = vadd.f32 0.0, %v1097
        %v1099 = vpop.f32.mrf.mxu0
        %v1100 = vadd.f32 0.0, %v1099
        %1101 = vdwg.mxu0
        %1102 = vmatprep.subr.bf16.mxu0 %v990
        %1103 = vmatpush1.bf16.msra.mxu0 %v989
        %1104 = vmatprep.subr.bf16.mxu0 %v982
        %1105 = vmatpush1.bf16.msra.mxu0 %v981
        %1106 = vmatprep.subr.bf16.mxu0 %v974
        %1107 = vmatpush1.bf16.msra.mxu0 %v973
        %1108 = vmatprep.subr.bf16.mxu0 %v966
        %1109 = vmatpush1.bf16.msra.mxu0 %v965
        %1110 = vmatprep.subr.bf16.mxu0 %v958
        %1111 = vmatpush1.bf16.msra.mxu0 %v957
        %1112 = vmatprep.subr.bf16.mxu0 %v950
        %1113 = vmatpush1.bf16.msra.mxu0 %v949
        %1114 = vmatprep.subr.bf16.mxu0 %v942
        %1115 = vmatpush1.bf16.msra.mxu0 %v941
        %1116 = vmatprep.subr.bf16.mxu0 %v934
        %1117 = vmatpush1.bf16.msra.mxu0 %v933
        %1118 = vmatprep.subr.bf16.mxu0 0
        %1119 = vmatpush2.bf16.msra.mxu0 0
        %1120 = vmatprep.subr.bf16.mxu0 0
        %1121 = vmatpush2.bf16.msra.mxu0 0
        %1122 = vmatprep.subr.bf16.mxu0 0
        %1123 = vmatpush2.bf16.msra.mxu0 0
        %1124 = vmatprep.subr.bf16.mxu0 0
        %1125 = vmatpush2.bf16.msra.mxu0 0
        %1126 = vmatprep.subr.bf16.mxu0 0
        %1127 = vmatpush2.bf16.msra.mxu0 0
        %1128 = vmatprep.subr.bf16.mxu0 0
        %1129 = vmatpush2.bf16.msra.mxu0 0
        %1130 = vmatprep.subr.bf16.mxu0 0
        %1131 = vmatpush2.bf16.msra.mxu0 0
        %1132 = vmatprep.subr.bf16.mxu0 0
        %1133 = vmatpush2.bf16.msra.mxu0 0
        %1134 = vmatprep.mubr.bf16.mxu0 0
        %1135 = vmatmul.mubr.bf16.gmra.mxu0 %v674
        %v1136 = vpop.f32.mrf.mxu0
        %v1137 = vadd.f32 0.0, %v1136
        %v1138 = vpop.f32.mrf.mxu0
        %v1139 = vadd.f32 0.0, %v1138
        %v1140 = vpop.f32.mrf.mxu0
        %v1141 = vadd.f32 0.0, %v1140
        %v1142 = vpop.f32.mrf.mxu0
        %v1143 = vadd.f32 0.0, %v1142
        %1144 = vdwg.mxu0
        %1145 = vmatprep.subr.bf16.mxu0 %v992
        %1146 = vmatpush1.bf16.msra.mxu0 %v991
        %1147 = vmatprep.subr.bf16.mxu0 %v984
        %1148 = vmatpush1.bf16.msra.mxu0 %v983
        %1149 = vmatprep.subr.bf16.mxu0 %v976
        %1150 = vmatpush1.bf16.msra.mxu0 %v975
        %1151 = vmatprep.subr.bf16.mxu0 %v968
        %1152 = vmatpush1.bf16.msra.mxu0 %v967
        %1153 = vmatprep.subr.bf16.mxu0 %v960
        %1154 = vmatpush1.bf16.msra.mxu0 %v959
        %1155 = vmatprep.subr.bf16.mxu0 %v952
        %1156 = vmatpush1.bf16.msra.mxu0 %v951
        %1157 = vmatprep.subr.bf16.mxu0 %v944
        %1158 = vmatpush1.bf16.msra.mxu0 %v943
        %1159 = vmatprep.subr.bf16.mxu0 %v936
        %1160 = vmatpush1.bf16.msra.mxu0 %v935
        %1161 = vmatprep.subr.bf16.mxu0 0
        %1162 = vmatpush2.bf16.msra.mxu0 0
        %1163 = vmatprep.subr.bf16.mxu0 0
        %1164 = vmatpush2.bf16.msra.mxu0 0
        %1165 = vmatprep.subr.bf16.mxu0 0
        %1166 = vmatpush2.bf16.msra.mxu0 0
        %1167 = vmatprep.subr.bf16.mxu0 0
        %1168 = vmatpush2.bf16.msra.mxu0 0
        %1169 = vmatprep.subr.bf16.mxu0 0
        %1170 = vmatpush2.bf16.msra.mxu0 0
        %1171 = vmatprep.subr.bf16.mxu0 0
        %1172 = vmatpush2.bf16.msra.mxu0 0
        %1173 = vmatprep.subr.bf16.mxu0 0
        %1174 = vmatpush2.bf16.msra.mxu0 0
        %1175 = vmatprep.subr.bf16.mxu0 0
        %1176 = vmatpush2.bf16.msra.mxu0 0
        %1177 = vmatprep.mubr.bf16.mxu0 0
        %1178 = vmatmul.mubr.bf16.gmra.mxu0 %v674
        %v1179 = vpop.f32.mrf.mxu0
        %v1180 = vadd.f32 0.0, %v1179
        %v1181 = vpop.f32.mrf.mxu0
        %v1182 = vadd.f32 0.0, %v1181
        %v1183 = vpop.f32.mrf.mxu0
        %v1184 = vadd.f32 0.0, %v1183
        %v1185 = vpop.f32.mrf.mxu0
        %v1186 = vadd.f32 0.0, %v1185
        %1187 = vdwg.mxu0
        %1188 = vmatprep.subr.bf16.mxu0 %v994
        %1189 = vmatpush1.bf16.msra.mxu0 %v993
        %1190 = vmatprep.subr.bf16.mxu0 %v986
        %1191 = vmatpush1.bf16.msra.mxu0 %v985
        %1192 = vmatprep.subr.bf16.mxu0 %v978
        %1193 = vmatpush1.bf16.msra.mxu0 %v977
        %1194 = vmatprep.subr.bf16.mxu0 %v970
        %1195 = vmatpush1.bf16.msra.mxu0 %v969
        %1196 = vmatprep.subr.bf16.mxu0 %v962
        %1197 = vmatpush1.bf16.msra.mxu0 %v961
        %1198 = vmatprep.subr.bf16.mxu0 %v954
        %1199 = vmatpush1.bf16.msra.mxu0 %v953
        %1200 = vmatprep.subr.bf16.mxu0 %v946
        %1201 = vmatpush1.bf16.msra.mxu0 %v945
        %1202 = vmatprep.subr.bf16.mxu0 %v938
        %1203 = vmatpush1.bf16.msra.mxu0 %v937
        %1204 = vmatprep.subr.bf16.mxu0 0
        %1205 = vmatpush2.bf16.msra.mxu0 0
        %1206 = vmatprep.subr.bf16.mxu0 0
        %1207 = vmatpush2.bf16.msra.mxu0 0
        %1208 = vmatprep.subr.bf16.mxu0 0
        %1209 = vmatpush2.bf16.msra.mxu0 0
        %1210 = vmatprep.subr.bf16.mxu0 0
        %1211 = vmatpush2.bf16.msra.mxu0 0
        %1212 = vmatprep.subr.bf16.mxu0 0
        %1213 = vmatpush2.bf16.msra.mxu0 0
        %1214 = vmatprep.subr.bf16.mxu0 0
        %1215 = vmatpush2.bf16.msra.mxu0 0
        %1216 = vmatprep.subr.bf16.mxu0 0
        %1217 = vmatpush2.bf16.msra.mxu0 0
        %1218 = vmatprep.subr.bf16.mxu0 0
        %1219 = vmatpush2.bf16.msra.mxu0 0
        %1220 = vmatprep.mubr.bf16.mxu0 0
        %1221 = vmatmul.mubr.bf16.gmra.mxu0 %v674
        %v1222 = vpop.f32.mrf.mxu0
        %v1223 = vadd.f32 0.0, %v1222
        %v1224 = vpop.f32.mrf.mxu0
        %v1225 = vadd.f32 0.0, %v1224
        %v1226 = vpop.f32.mrf.mxu0
        %v1227 = vadd.f32 0.0, %v1226
        %v1228 = vpop.f32.mrf.mxu0
        %v1229 = vadd.f32 0.0, %v1228
        %1230 = vdwg.mxu0
        %v1231 = vmax.f32 %v1094, %v1098
        %v1232 = vrot.slane %v1231, 4
        %v1233 = vmax.f32 %v1231, %v1232
        %v1234 = vrot.slane %v1233, 2
        %v1235 = vmax.f32 %v1233, %v1234
        %v1236 = vrot.slane %v1235, 1
        %v1237 = vmax.f32 %v1235, %v1236
        %v1238 = vmax.f32 %v1096, %v1100
        %v1239 = vrot.slane %v1238, 4
        %v1240 = vmax.f32 %v1238, %v1239
        %v1241 = vrot.slane %v1240, 2
        %v1242 = vmax.f32 %v1240, %v1241
        %v1243 = vrot.slane %v1242, 1
        %v1244 = vmax.f32 %v1242, %v1243
        %v1245 = vmax.f32 %v1137, %v1141
        %v1246 = vrot.slane %v1245, 4
        %v1247 = vmax.f32 %v1245, %v1246
        %v1248 = vrot.slane %v1247, 2
        %v1249 = vmax.f32 %v1247, %v1248
        %v1250 = vrot.slane %v1249, 1
        %v1251 = vmax.f32 %v1249, %v1250
        %v1252 = vmax.f32 %v1139, %v1143
        %v1253 = vrot.slane %v1252, 4
        %v1254 = vmax.f32 %v1252, %v1253
        %v1255 = vrot.slane %v1254, 2
        %v1256 = vmax.f32 %v1254, %v1255
        %v1257 = vrot.slane %v1256, 1
        %v1258 = vmax.f32 %v1256, %v1257
        %v1259 = vmax.f32 %v1180, %v1184
        %v1260 = vrot.slane %v1259, 4
        %v1261 = vmax.f32 %v1259, %v1260
        %v1262 = vrot.slane %v1261, 2
        %v1263 = vmax.f32 %v1261, %v1262
        %v1264 = vrot.slane %v1263, 1
        %v1265 = vmax.f32 %v1263, %v1264
        %v1266 = vmax.f32 %v1182, %v1186
        %v1267 = vrot.slane %v1266, 4
        %v1268 = vmax.f32 %v1266, %v1267
        %v1269 = vrot.slane %v1268, 2
        %v1270 = vmax.f32 %v1268, %v1269
        %v1271 = vrot.slane %v1270, 1
        %v1272 = vmax.f32 %v1270, %v1271
        %v1273 = vmax.f32 %v1223, %v1227
        %v1274 = vrot.slane %v1273, 4
        %v1275 = vmax.f32 %v1273, %v1274
        %v1276 = vrot.slane %v1275, 2
        %v1277 = vmax.f32 %v1275, %v1276
        %v1278 = vrot.slane %v1277, 1
        %v1279 = vmax.f32 %v1277, %v1278
        %v1280 = vmax.f32 %v1225, %v1229
        %v1281 = vrot.slane %v1280, 4
        %v1282 = vmax.f32 %v1280, %v1281
        %v1283 = vrot.slane %v1282, 2
        %v1284 = vmax.f32 %v1282, %v1283
        %v1285 = vrot.slane %v1284, 1
        %v1286 = vmax.f32 %v1284, %v1285
        %p1287 = scmp.eq.s32.totalorder %s32, 0
        // Predicated region
        $region89: #{pointnetfeat_forward.2} parent=71 // pred_check
          %p1288 = pneg %p1287
        $region90: #{pointnetfeat_forward.2} parent=71 // pred_check_branch
          %1290 = sbr.rel (%p1288) target = $region92
        $region91: #{pointnetfeat_forward.2} parent=71 // pred_region
          %v1299 = vcombine.low %v1237, %v1244
          %v1300 = vcombine.low %v1251, %v1258
          %v1301 = vcombine.low %v1265, %v1272
          %v1302 = vcombine.low %v1279, %v1286
          %v1304 = vunpack.c.l.s4 1966171168
          %v1305 = vunpack.c.0.s8 %v1304
          %v1306 = vlaneseq
          %v1307 = vshrl.u32 %v1306, 7
          %v1308 = vsub.s32 %v1305, %v1307
          %v1309 = vrot.slane %v1299, %v1308
          %v1311 = vunpack.c.l.s4 1966171168
          %v1312 = vunpack.c.0.s8 %v1311
          %v1313 = vlaneseq
          %v1314 = vshrl.u32 %v1313, 7
          %v1315 = vsub.s32 %v1312, %v1314
          %v1316 = vrot.slane %v1300, %v1315
          %v1318 = vunpack.c.l.s4 1966171168
          %v1319 = vunpack.c.0.s8 %v1318
          %v1320 = vlaneseq
          %v1321 = vshrl.u32 %v1320, 7
          %v1322 = vsub.s32 %v1319, %v1321
          %v1323 = vrot.slane %v1301, %v1322
          %v1325 = vunpack.c.l.s4 1966171168
          %v1326 = vunpack.c.0.s8 %v1325
          %v1327 = vlaneseq
          %v1328 = vshrl.u32 %v1327, 7
          %v1329 = vsub.s32 %v1326, %v1328
          %v1330 = vrot.slane %v1302, %v1329
          %v1331 = vcombine.low %v1309, %v1316
          %v1332 = vcombine.low %v1323, %v1330
          %v1334 = vunpack.c.l.s4 1966171168
          %v1335 = vunpack.c.0.s8 %v1334
          %v1336 = vlaneseq
          %v1337 = vshrl.u32 %v1336, 7
          %v1338 = vsub.s32 %v1335, %v1337
          %v1339 = vrot.slane %v1331, %v1338
          %v1341 = vunpack.c.l.s4 1966171168
          %v1342 = vunpack.c.0.s8 %v1341
          %v1343 = vlaneseq
          %v1344 = vshrl.u32 %v1343, 7
          %v1345 = vsub.s32 %v1342, %v1344
          %v1346 = vrot.slane %v1332, %v1345
          %v1347 = vcombine.low %v1339, %v1346
          %1349 = vst [vmem:[#allocation2] sm:$0xff] %v1347
        $region92: #{pointnetfeat_forward.2} parent=71 // pred_fallthru
          _
        %p1350 = scmp.gt.s32.totalorder %s32, 0
        // Predicated region
        $region93: #{pointnetfeat_forward.2} parent=71 // pred_check
          %p1351 = pneg %p1350
        $region94: #{pointnetfeat_forward.2} parent=71 // pred_check_branch
          %1353 = sbr.rel (%p1351) target = $region96
        $region95: #{pointnetfeat_forward.2} parent=71 // pred_region
          %v1354 = vld [vmem:[#allocation2] sm:$0xff]
          %v1363 = vcombine.low %v1237, %v1244
          %v1364 = vcombine.low %v1251, %v1258
          %v1365 = vcombine.low %v1265, %v1272
          %v1366 = vcombine.low %v1279, %v1286
          %v1368 = vunpack.c.l.s4 1966171168
          %v1369 = vunpack.c.0.s8 %v1368
          %v1370 = vlaneseq
          %v1371 = vshrl.u32 %v1370, 7
          %v1372 = vsub.s32 %v1369, %v1371
          %v1373 = vrot.slane %v1363, %v1372
          %v1375 = vunpack.c.l.s4 1966171168
          %v1376 = vunpack.c.0.s8 %v1375
          %v1377 = vlaneseq
          %v1378 = vshrl.u32 %v1377, 7
          %v1379 = vsub.s32 %v1376, %v1378
          %v1380 = vrot.slane %v1364, %v1379
          %v1382 = vunpack.c.l.s4 1966171168
          %v1383 = vunpack.c.0.s8 %v1382
          %v1384 = vlaneseq
          %v1385 = vshrl.u32 %v1384, 7
          %v1386 = vsub.s32 %v1383, %v1385
          %v1387 = vrot.slane %v1365, %v1386
          %v1389 = vunpack.c.l.s4 1966171168
          %v1390 = vunpack.c.0.s8 %v1389
          %v1391 = vlaneseq
          %v1392 = vshrl.u32 %v1391, 7
          %v1393 = vsub.s32 %v1390, %v1392
          %v1394 = vrot.slane %v1366, %v1393
          %v1395 = vcombine.low %v1373, %v1380
          %v1396 = vcombine.low %v1387, %v1394
          %v1398 = vunpack.c.l.s4 1966171168
          %v1399 = vunpack.c.0.s8 %v1398
          %v1400 = vlaneseq
          %v1401 = vshrl.u32 %v1400, 7
          %v1402 = vsub.s32 %v1399, %v1401
          %v1403 = vrot.slane %v1395, %v1402
          %v1405 = vunpack.c.l.s4 1966171168
          %v1406 = vunpack.c.0.s8 %v1405
          %v1407 = vlaneseq
          %v1408 = vshrl.u32 %v1407, 7
          %v1409 = vsub.s32 %v1406, %v1408
          %v1410 = vrot.slane %v1396, %v1409
          %v1411 = vcombine.low %v1403, %v1410
          %v1413 = vmax.f32 %v1354, %v1411
          %1414 = vst [vmem:[#allocation2] sm:$0xff] %v1413
        $region96: #{pointnetfeat_forward.2} parent=71 // pred_fallthru
          _
        // Predicated region
        $region97: #{pointnetfeat_forward.2} parent=71 // pred_check
          %p1415 = pneg %p1287
        $region98: #{pointnetfeat_forward.2} parent=71 // pred_check_branch
          %1417 = sbr.rel (%p1415) target = $region100
        $region99: #{pointnetfeat_forward.2} parent=71 // pred_region
          %v1418 = vld [vmem:[#allocation2] sm:$0xff]
          %v1419 = vld [vmem:[%s6] sm:$0xff]
          %v1420 = vadd.f32 %v1418, %v1419
          %v1421 = vmax.f32 %v1420, 0.0
          %v1423 = vlaneseq
          %v1424 = vshrl.u32 %v1423, 7
          %v1425 = vsub.s32 0, %v1424
          %v1426 = vrot.slane %v1421, %v1425
          %v1427 = vlaneseq
          %v1428 = vshrl.u32 %v1427, 7
          %v1429 = vsub.s32 1, %v1428
          %v1430 = vrot.slane %v1421, %v1429
          %v1431 = vlaneseq
          %v1432 = vshrl.u32 %v1431, 7
          %v1433 = vsub.s32 2, %v1432
          %v1434 = vrot.slane %v1421, %v1433
          %v1435 = vlaneseq
          %v1436 = vshrl.u32 %v1435, 7
          %v1437 = vsub.s32 3, %v1436
          %v1438 = vrot.slane %v1421, %v1437
          %v1439 = vlaneseq
          %v1440 = vshrl.u32 %v1439, 7
          %v1441 = vsub.s32 4, %v1440
          %v1442 = vrot.slane %v1421, %v1441
          %v1443 = vlaneseq
          %v1444 = vshrl.u32 %v1443, 7
          %v1445 = vsub.s32 5, %v1444
          %v1446 = vrot.slane %v1421, %v1445
          %v1447 = vlaneseq
          %v1448 = vshrl.u32 %v1447, 7
          %v1449 = vsub.s32 6, %v1448
          %v1450 = vrot.slane %v1421, %v1449
          %v1451 = vlaneseq
          %v1452 = vshrl.u32 %v1451, 7
          %v1453 = vsub.s32 7, %v1452
          %v1454 = vrot.slane %v1421, %v1453
          %v1463 = vpack.c.bf16 %v1426, %v1426
          %v1464 = vpack.c.bf16 %v1430, %v1430
          %v1465 = vpack.c.bf16 %v1434, %v1434
          %v1466 = vpack.c.bf16 %v1438, %v1438
          %v1467 = vpack.c.bf16 %v1442, %v1442
          %v1468 = vpack.c.bf16 %v1446, %v1446
          %v1469 = vpack.c.bf16 %v1450, %v1450
          %v1470 = vpack.c.bf16 %v1454, %v1454
          %v1471 = vld [vmem:[#allocation5] sm:$0xff]
          %v1472 = vld [vmem:[#allocation5 + $0x8] sm:$0xff]
          %v1473 = vld [vmem:[#allocation5 + $0x10] sm:$0xff]
          %v1474 = vld [vmem:[#allocation5 + $0x18] sm:$0xff]
          %v1475 = vld [vmem:[#allocation5 + $0x20] sm:$0xff]
          %v1476 = vld [vmem:[#allocation5 + $0x28] sm:$0xff]
          %v1477 = vld [vmem:[#allocation5 + $0x30] sm:$0xff]
          %v1478 = vld [vmem:[#allocation5 + $0x38] sm:$0xff]
          %v1479 = vld [vmem:[#allocation5 + $0x40] sm:$0xff]
          %v1480 = vld [vmem:[#allocation5 + $0x48] sm:$0xff]
          %v1481 = vld [vmem:[#allocation5 + $0x50] sm:$0xff]
          %v1482 = vld [vmem:[#allocation5 + $0x58] sm:$0xff]
          %v1483 = vld [vmem:[#allocation5 + $0x60] sm:$0xff]
          %v1484 = vld [vmem:[#allocation5 + $0x68] sm:$0xff]
          %v1485 = vld [vmem:[#allocation5 + $0x70] sm:$0xff]
          %v1486 = vld [vmem:[#allocation5 + $0x78] sm:$0xff]
          %v1487 = vld [vmem:[#allocation5 + $0x80] sm:$0xff]
          %v1488 = vld [vmem:[#allocation5 + $0x88] sm:$0xff]
          %v1489 = vld [vmem:[#allocation5 + $0x90] sm:$0xff]
          %v1490 = vld [vmem:[#allocation5 + $0x98] sm:$0xff]
          %v1491 = vld [vmem:[#allocation5 + $0xa0] sm:$0xff]
          %v1492 = vld [vmem:[#allocation5 + $0xa8] sm:$0xff]
          %v1493 = vld [vmem:[#allocation5 + $0xb0] sm:$0xff]
          %v1494 = vld [vmem:[#allocation5 + $0xb8] sm:$0xff]
          %v1495 = vld [vmem:[#allocation5 + $0xc0] sm:$0xff]
          %v1496 = vld [vmem:[#allocation5 + $0xc8] sm:$0xff]
          %v1497 = vld [vmem:[#allocation5 + $0xd0] sm:$0xff]
          %v1498 = vld [vmem:[#allocation5 + $0xd8] sm:$0xff]
          %v1499 = vld [vmem:[#allocation5 + $0xe0] sm:$0xff]
          %v1500 = vld [vmem:[#allocation5 + $0xe8] sm:$0xff]
          %v1501 = vld [vmem:[#allocation5 + $0xf0] sm:$0xff]
          %v1502 = vld [vmem:[#allocation5 + $0xf8] sm:$0xff]
          %v1503 = vld [vmem:[#allocation5 + $0x100] sm:$0xff]
          %v1504 = vld [vmem:[#allocation5 + $0x108] sm:$0xff]
          %v1505 = vld [vmem:[#allocation5 + $0x110] sm:$0xff]
          %v1506 = vld [vmem:[#allocation5 + $0x118] sm:$0xff]
          %v1507 = vld [vmem:[#allocation5 + $0x120] sm:$0xff]
          %v1508 = vld [vmem:[#allocation5 + $0x128] sm:$0xff]
          %v1509 = vld [vmem:[#allocation5 + $0x130] sm:$0xff]
          %v1510 = vld [vmem:[#allocation5 + $0x138] sm:$0xff]
          %v1511 = vld [vmem:[#allocation5 + $0x140] sm:$0xff]
          %v1512 = vld [vmem:[#allocation5 + $0x148] sm:$0xff]
          %v1513 = vld [vmem:[#allocation5 + $0x150] sm:$0xff]
          %v1514 = vld [vmem:[#allocation5 + $0x158] sm:$0xff]
          %v1515 = vld [vmem:[#allocation5 + $0x160] sm:$0xff]
          %v1516 = vld [vmem:[#allocation5 + $0x168] sm:$0xff]
          %v1517 = vld [vmem:[#allocation5 + $0x170] sm:$0xff]
          %v1518 = vld [vmem:[#allocation5 + $0x178] sm:$0xff]
          %v1519 = vld [vmem:[#allocation5 + $0x180] sm:$0xff]
          %v1520 = vld [vmem:[#allocation5 + $0x188] sm:$0xff]
          %v1521 = vld [vmem:[#allocation5 + $0x190] sm:$0xff]
          %v1522 = vld [vmem:[#allocation5 + $0x198] sm:$0xff]
          %v1523 = vld [vmem:[#allocation5 + $0x1a0] sm:$0xff]
          %v1524 = vld [vmem:[#allocation5 + $0x1a8] sm:$0xff]
          %v1525 = vld [vmem:[#allocation5 + $0x1b0] sm:$0xff]
          %v1526 = vld [vmem:[#allocation5 + $0x1b8] sm:$0xff]
          %v1527 = vld [vmem:[#allocation5 + $0x1c0] sm:$0xff]
          %v1528 = vld [vmem:[#allocation5 + $0x1c8] sm:$0xff]
          %v1529 = vld [vmem:[#allocation5 + $0x1d0] sm:$0xff]
          %v1530 = vld [vmem:[#allocation5 + $0x1d8] sm:$0xff]
          %v1531 = vld [vmem:[#allocation5 + $0x1e0] sm:$0xff]
          %v1532 = vld [vmem:[#allocation5 + $0x1e8] sm:$0xff]
          %v1533 = vld [vmem:[#allocation5 + $0x1f0] sm:$0xff]
          %v1534 = vld [vmem:[#allocation5 + $0x1f8] sm:$0xff]
          %v1535 = vld [vmem:[#allocation5 + $0x200] sm:$0xff]
          %v1536 = vld [vmem:[#allocation5 + $0x208] sm:$0xff]
          %v1537 = vld [vmem:[#allocation5 + $0x210] sm:$0xff]
          %v1538 = vld [vmem:[#allocation5 + $0x218] sm:$0xff]
          %v1539 = vld [vmem:[#allocation5 + $0x220] sm:$0xff]
          %v1540 = vld [vmem:[#allocation5 + $0x228] sm:$0xff]
          %v1541 = vld [vmem:[#allocation5 + $0x230] sm:$0xff]
          %v1542 = vld [vmem:[#allocation5 + $0x238] sm:$0xff]
          %v1543 = vld [vmem:[#allocation5 + $0x240] sm:$0xff]
          %v1544 = vld [vmem:[#allocation5 + $0x248] sm:$0xff]
          %v1545 = vld [vmem:[#allocation5 + $0x250] sm:$0xff]
          %v1546 = vld [vmem:[#allocation5 + $0x258] sm:$0xff]
          %v1547 = vld [vmem:[#allocation5 + $0x260] sm:$0xff]
          %v1548 = vld [vmem:[#allocation5 + $0x268] sm:$0xff]
          %v1549 = vld [vmem:[#allocation5 + $0x270] sm:$0xff]
          %v1550 = vld [vmem:[#allocation5 + $0x278] sm:$0xff]
          %v1551 = vld [vmem:[#allocation5 + $0x280] sm:$0xff]
          %v1552 = vld [vmem:[#allocation5 + $0x288] sm:$0xff]
          %v1553 = vld [vmem:[#allocation5 + $0x290] sm:$0xff]
          %v1554 = vld [vmem:[#allocation5 + $0x298] sm:$0xff]
          %v1555 = vld [vmem:[#allocation5 + $0x2a0] sm:$0xff]
          %v1556 = vld [vmem:[#allocation5 + $0x2a8] sm:$0xff]
          %v1557 = vld [vmem:[#allocation5 + $0x2b0] sm:$0xff]
          %v1558 = vld [vmem:[#allocation5 + $0x2b8] sm:$0xff]
          %v1559 = vld [vmem:[#allocation5 + $0x2c0] sm:$0xff]
          %v1560 = vld [vmem:[#allocation5 + $0x2c8] sm:$0xff]
          %v1561 = vld [vmem:[#allocation5 + $0x2d0] sm:$0xff]
          %v1562 = vld [vmem:[#allocation5 + $0x2d8] sm:$0xff]
          %v1563 = vld [vmem:[#allocation5 + $0x2e0] sm:$0xff]
          %v1564 = vld [vmem:[#allocation5 + $0x2e8] sm:$0xff]
          %v1565 = vld [vmem:[#allocation5 + $0x2f0] sm:$0xff]
          %v1566 = vld [vmem:[#allocation5 + $0x2f8] sm:$0xff]
          %v1567 = vld [vmem:[#allocation5 + $0x300] sm:$0xff]
          %v1568 = vld [vmem:[#allocation5 + $0x308] sm:$0xff]
          %v1569 = vld [vmem:[#allocation5 + $0x310] sm:$0xff]
          %v1570 = vld [vmem:[#allocation5 + $0x318] sm:$0xff]
          %v1571 = vld [vmem:[#allocation5 + $0x320] sm:$0xff]
          %v1572 = vld [vmem:[#allocation5 + $0x328] sm:$0xff]
          %v1573 = vld [vmem:[#allocation5 + $0x330] sm:$0xff]
          %v1574 = vld [vmem:[#allocation5 + $0x338] sm:$0xff]
          %v1575 = vld [vmem:[#allocation5 + $0x340] sm:$0xff]
          %v1576 = vld [vmem:[#allocation5 + $0x348] sm:$0xff]
          %v1577 = vld [vmem:[#allocation5 + $0x350] sm:$0xff]
          %v1578 = vld [vmem:[#allocation5 + $0x358] sm:$0xff]
          %v1579 = vld [vmem:[#allocation5 + $0x360] sm:$0xff]
          %v1580 = vld [vmem:[#allocation5 + $0x368] sm:$0xff]
          %v1581 = vld [vmem:[#allocation5 + $0x370] sm:$0xff]
          %v1582 = vld [vmem:[#allocation5 + $0x378] sm:$0xff]
          %v1583 = vld [vmem:[#allocation5 + $0x380] sm:$0xff]
          %v1584 = vld [vmem:[#allocation5 + $0x388] sm:$0xff]
          %v1585 = vld [vmem:[#allocation5 + $0x390] sm:$0xff]
          %v1586 = vld [vmem:[#allocation5 + $0x398] sm:$0xff]
          %v1587 = vld [vmem:[#allocation5 + $0x3a0] sm:$0xff]
          %v1588 = vld [vmem:[#allocation5 + $0x3a8] sm:$0xff]
          %v1589 = vld [vmem:[#allocation5 + $0x3b0] sm:$0xff]
          %v1590 = vld [vmem:[#allocation5 + $0x3b8] sm:$0xff]
          %v1591 = vld [vmem:[#allocation5 + $0x3c0] sm:$0xff]
          %v1592 = vld [vmem:[#allocation5 + $0x3c8] sm:$0xff]
          %v1593 = vld [vmem:[#allocation5 + $0x3d0] sm:$0xff]
          %v1594 = vld [vmem:[#allocation5 + $0x3d8] sm:$0xff]
          %v1595 = vld [vmem:[#allocation5 + $0x3e0] sm:$0xff]
          %v1596 = vld [vmem:[#allocation5 + $0x3e8] sm:$0xff]
          %v1597 = vld [vmem:[#allocation5 + $0x3f0] sm:$0xff]
          %v1598 = vld [vmem:[#allocation5 + $0x3f8] sm:$0xff]
          %v1599 = vld [vmem:[#allocation5 + $0x400] sm:$0xff]
          %v1600 = vld [vmem:[#allocation5 + $0x408] sm:$0xff]
          %v1601 = vld [vmem:[#allocation5 + $0x410] sm:$0xff]
          %v1602 = vld [vmem:[#allocation5 + $0x418] sm:$0xff]
          %v1603 = vld [vmem:[#allocation5 + $0x420] sm:$0xff]
          %v1604 = vld [vmem:[#allocation5 + $0x428] sm:$0xff]
          %v1605 = vld [vmem:[#allocation5 + $0x430] sm:$0xff]
          %v1606 = vld [vmem:[#allocation5 + $0x438] sm:$0xff]
          %v1607 = vld [vmem:[#allocation5 + $0x440] sm:$0xff]
          %v1608 = vld [vmem:[#allocation5 + $0x448] sm:$0xff]
          %v1609 = vld [vmem:[#allocation5 + $0x450] sm:$0xff]
          %v1610 = vld [vmem:[#allocation5 + $0x458] sm:$0xff]
          %v1611 = vld [vmem:[#allocation5 + $0x460] sm:$0xff]
          %v1612 = vld [vmem:[#allocation5 + $0x468] sm:$0xff]
          %v1613 = vld [vmem:[#allocation5 + $0x470] sm:$0xff]
          %v1614 = vld [vmem:[#allocation5 + $0x478] sm:$0xff]
          %v1615 = vld [vmem:[#allocation5 + $0x480] sm:$0xff]
          %v1616 = vld [vmem:[#allocation5 + $0x488] sm:$0xff]
          %v1617 = vld [vmem:[#allocation5 + $0x490] sm:$0xff]
          %v1618 = vld [vmem:[#allocation5 + $0x498] sm:$0xff]
          %v1619 = vld [vmem:[#allocation5 + $0x4a0] sm:$0xff]
          %v1620 = vld [vmem:[#allocation5 + $0x4a8] sm:$0xff]
          %v1621 = vld [vmem:[#allocation5 + $0x4b0] sm:$0xff]
          %v1622 = vld [vmem:[#allocation5 + $0x4b8] sm:$0xff]
          %v1623 = vld [vmem:[#allocation5 + $0x4c0] sm:$0xff]
          %v1624 = vld [vmem:[#allocation5 + $0x4c8] sm:$0xff]
          %v1625 = vld [vmem:[#allocation5 + $0x4d0] sm:$0xff]
          %v1626 = vld [vmem:[#allocation5 + $0x4d8] sm:$0xff]
          %v1627 = vld [vmem:[#allocation5 + $0x4e0] sm:$0xff]
          %v1628 = vld [vmem:[#allocation5 + $0x4e8] sm:$0xff]
          %v1629 = vld [vmem:[#allocation5 + $0x4f0] sm:$0xff]
          %v1630 = vld [vmem:[#allocation5 + $0x4f8] sm:$0xff]
          %v1631 = vld [vmem:[#allocation5 + $0x500] sm:$0xff]
          %v1632 = vld [vmem:[#allocation5 + $0x508] sm:$0xff]
          %v1633 = vld [vmem:[#allocation5 + $0x510] sm:$0xff]
          %v1634 = vld [vmem:[#allocation5 + $0x518] sm:$0xff]
          %v1635 = vld [vmem:[#allocation5 + $0x520] sm:$0xff]
          %v1636 = vld [vmem:[#allocation5 + $0x528] sm:$0xff]
          %v1637 = vld [vmem:[#allocation5 + $0x530] sm:$0xff]
          %v1638 = vld [vmem:[#allocation5 + $0x538] sm:$0xff]
          %v1639 = vld [vmem:[#allocation5 + $0x540] sm:$0xff]
          %v1640 = vld [vmem:[#allocation5 + $0x548] sm:$0xff]
          %v1641 = vld [vmem:[#allocation5 + $0x550] sm:$0xff]
          %v1642 = vld [vmem:[#allocation5 + $0x558] sm:$0xff]
          %v1643 = vld [vmem:[#allocation5 + $0x560] sm:$0xff]
          %v1644 = vld [vmem:[#allocation5 + $0x568] sm:$0xff]
          %v1645 = vld [vmem:[#allocation5 + $0x570] sm:$0xff]
          %v1646 = vld [vmem:[#allocation5 + $0x578] sm:$0xff]
          %v1647 = vld [vmem:[#allocation5 + $0x580] sm:$0xff]
          %v1648 = vld [vmem:[#allocation5 + $0x588] sm:$0xff]
          %v1649 = vld [vmem:[#allocation5 + $0x590] sm:$0xff]
          %v1650 = vld [vmem:[#allocation5 + $0x598] sm:$0xff]
          %v1651 = vld [vmem:[#allocation5 + $0x5a0] sm:$0xff]
          %v1652 = vld [vmem:[#allocation5 + $0x5a8] sm:$0xff]
          %v1653 = vld [vmem:[#allocation5 + $0x5b0] sm:$0xff]
          %v1654 = vld [vmem:[#allocation5 + $0x5b8] sm:$0xff]
          %v1655 = vld [vmem:[#allocation5 + $0x5c0] sm:$0xff]
          %v1656 = vld [vmem:[#allocation5 + $0x5c8] sm:$0xff]
          %v1657 = vld [vmem:[#allocation5 + $0x5d0] sm:$0xff]
          %v1658 = vld [vmem:[#allocation5 + $0x5d8] sm:$0xff]
          %v1659 = vld [vmem:[#allocation5 + $0x5e0] sm:$0xff]
          %v1660 = vld [vmem:[#allocation5 + $0x5e8] sm:$0xff]
          %v1661 = vld [vmem:[#allocation5 + $0x5f0] sm:$0xff]
          %v1662 = vld [vmem:[#allocation5 + $0x5f8] sm:$0xff]
          %v1663 = vld [vmem:[#allocation5 + $0x600] sm:$0xff]
          %v1664 = vld [vmem:[#allocation5 + $0x608] sm:$0xff]
          %v1665 = vld [vmem:[#allocation5 + $0x610] sm:$0xff]
          %v1666 = vld [vmem:[#allocation5 + $0x618] sm:$0xff]
          %v1667 = vld [vmem:[#allocation5 + $0x620] sm:$0xff]
          %v1668 = vld [vmem:[#allocation5 + $0x628] sm:$0xff]
          %v1669 = vld [vmem:[#allocation5 + $0x630] sm:$0xff]
          %v1670 = vld [vmem:[#allocation5 + $0x638] sm:$0xff]
          %v1671 = vld [vmem:[#allocation5 + $0x640] sm:$0xff]
          %v1672 = vld [vmem:[#allocation5 + $0x648] sm:$0xff]
          %v1673 = vld [vmem:[#allocation5 + $0x650] sm:$0xff]
          %v1674 = vld [vmem:[#allocation5 + $0x658] sm:$0xff]
          %v1675 = vld [vmem:[#allocation5 + $0x660] sm:$0xff]
          %v1676 = vld [vmem:[#allocation5 + $0x668] sm:$0xff]
          %v1677 = vld [vmem:[#allocation5 + $0x670] sm:$0xff]
          %v1678 = vld [vmem:[#allocation5 + $0x678] sm:$0xff]
          %v1679 = vld [vmem:[#allocation5 + $0x680] sm:$0xff]
          %v1680 = vld [vmem:[#allocation5 + $0x688] sm:$0xff]
          %v1681 = vld [vmem:[#allocation5 + $0x690] sm:$0xff]
          %v1682 = vld [vmem:[#allocation5 + $0x698] sm:$0xff]
          %v1683 = vld [vmem:[#allocation5 + $0x6a0] sm:$0xff]
          %v1684 = vld [vmem:[#allocation5 + $0x6a8] sm:$0xff]
          %v1685 = vld [vmem:[#allocation5 + $0x6b0] sm:$0xff]
          %v1686 = vld [vmem:[#allocation5 + $0x6b8] sm:$0xff]
          %v1687 = vld [vmem:[#allocation5 + $0x6c0] sm:$0xff]
          %v1688 = vld [vmem:[#allocation5 + $0x6c8] sm:$0xff]
          %v1689 = vld [vmem:[#allocation5 + $0x6d0] sm:$0xff]
          %v1690 = vld [vmem:[#allocation5 + $0x6d8] sm:$0xff]
          %v1691 = vld [vmem:[#allocation5 + $0x6e0] sm:$0xff]
          %v1692 = vld [vmem:[#allocation5 + $0x6e8] sm:$0xff]
          %v1693 = vld [vmem:[#allocation5 + $0x6f0] sm:$0xff]
          %v1694 = vld [vmem:[#allocation5 + $0x6f8] sm:$0xff]
          %v1695 = vld [vmem:[#allocation5 + $0x700] sm:$0xff]
          %v1696 = vld [vmem:[#allocation5 + $0x708] sm:$0xff]
          %v1697 = vld [vmem:[#allocation5 + $0x710] sm:$0xff]
          %v1698 = vld [vmem:[#allocation5 + $0x718] sm:$0xff]
          %v1699 = vld [vmem:[#allocation5 + $0x720] sm:$0xff]
          %v1700 = vld [vmem:[#allocation5 + $0x728] sm:$0xff]
          %v1701 = vld [vmem:[#allocation5 + $0x730] sm:$0xff]
          %v1702 = vld [vmem:[#allocation5 + $0x738] sm:$0xff]
          %v1703 = vld [vmem:[#allocation5 + $0x740] sm:$0xff]
          %v1704 = vld [vmem:[#allocation5 + $0x748] sm:$0xff]
          %v1705 = vld [vmem:[#allocation5 + $0x750] sm:$0xff]
          %v1706 = vld [vmem:[#allocation5 + $0x758] sm:$0xff]
          %v1707 = vld [vmem:[#allocation5 + $0x760] sm:$0xff]
          %v1708 = vld [vmem:[#allocation5 + $0x768] sm:$0xff]
          %v1709 = vld [vmem:[#allocation5 + $0x770] sm:$0xff]
          %v1710 = vld [vmem:[#allocation5 + $0x778] sm:$0xff]
          %v1711 = vld [vmem:[#allocation5 + $0x780] sm:$0xff]
          %v1712 = vld [vmem:[#allocation5 + $0x788] sm:$0xff]
          %v1713 = vld [vmem:[#allocation5 + $0x790] sm:$0xff]
          %v1714 = vld [vmem:[#allocation5 + $0x798] sm:$0xff]
          %v1715 = vld [vmem:[#allocation5 + $0x7a0] sm:$0xff]
          %v1716 = vld [vmem:[#allocation5 + $0x7a8] sm:$0xff]
          %v1717 = vld [vmem:[#allocation5 + $0x7b0] sm:$0xff]
          %v1718 = vld [vmem:[#allocation5 + $0x7b8] sm:$0xff]
          %v1719 = vld [vmem:[#allocation5 + $0x7c0] sm:$0xff]
          %v1720 = vld [vmem:[#allocation5 + $0x7c8] sm:$0xff]
          %v1721 = vld [vmem:[#allocation5 + $0x7d0] sm:$0xff]
          %v1722 = vld [vmem:[#allocation5 + $0x7d8] sm:$0xff]
          %v1723 = vld [vmem:[#allocation5 + $0x7e0] sm:$0xff]
          %v1724 = vld [vmem:[#allocation5 + $0x7e8] sm:$0xff]
          %v1725 = vld [vmem:[#allocation5 + $0x7f0] sm:$0xff]
          %v1726 = vld [vmem:[#allocation5 + $0x7f8] sm:$0xff]
          %v1727 = vld [vmem:[%s8] sm:$0xf]
          %v1984 = vunpack.c.l.b16 %v1471
          %v1985 = vunpack.c.h.b16 %v1471
          %v1986 = vunpack.c.l.b16 %v1472
          %v1987 = vunpack.c.h.b16 %v1472
          %v1988 = vunpack.c.l.b16 %v1473
          %v1989 = vunpack.c.h.b16 %v1473
          %v1990 = vunpack.c.l.b16 %v1474
          %v1991 = vunpack.c.h.b16 %v1474
          %v1992 = vunpack.c.l.b16 %v1475
          %v1993 = vunpack.c.h.b16 %v1475
          %v1994 = vunpack.c.l.b16 %v1476
          %v1995 = vunpack.c.h.b16 %v1476
          %v1996 = vunpack.c.l.b16 %v1477
          %v1997 = vunpack.c.h.b16 %v1477
          %v1998 = vunpack.c.l.b16 %v1478
          %v1999 = vunpack.c.h.b16 %v1478
          %v2000 = vunpack.c.l.b16 %v1479
          %v2001 = vunpack.c.h.b16 %v1479
          %v2002 = vunpack.c.l.b16 %v1480
          %v2003 = vunpack.c.h.b16 %v1480
          %v2004 = vunpack.c.l.b16 %v1481
          %v2005 = vunpack.c.h.b16 %v1481
          %v2006 = vunpack.c.l.b16 %v1482
          %v2007 = vunpack.c.h.b16 %v1482
          %v2008 = vunpack.c.l.b16 %v1483
          %v2009 = vunpack.c.h.b16 %v1483
          %v2010 = vunpack.c.l.b16 %v1484
          %v2011 = vunpack.c.h.b16 %v1484
          %v2012 = vunpack.c.l.b16 %v1485
          %v2013 = vunpack.c.h.b16 %v1485
          %v2014 = vunpack.c.l.b16 %v1486
          %v2015 = vunpack.c.h.b16 %v1486
          %v2016 = vunpack.c.l.b16 %v1487
          %v2017 = vunpack.c.h.b16 %v1487
          %v2018 = vunpack.c.l.b16 %v1488
          %v2019 = vunpack.c.h.b16 %v1488
          %v2020 = vunpack.c.l.b16 %v1489
          %v2021 = vunpack.c.h.b16 %v1489
          %v2022 = vunpack.c.l.b16 %v1490
          %v2023 = vunpack.c.h.b16 %v1490
          %v2024 = vunpack.c.l.b16 %v1491
          %v2025 = vunpack.c.h.b16 %v1491
          %v2026 = vunpack.c.l.b16 %v1492
          %v2027 = vunpack.c.h.b16 %v1492
          %v2028 = vunpack.c.l.b16 %v1493
          %v2029 = vunpack.c.h.b16 %v1493
          %v2030 = vunpack.c.l.b16 %v1494
          %v2031 = vunpack.c.h.b16 %v1494
          %v2032 = vunpack.c.l.b16 %v1495
          %v2033 = vunpack.c.h.b16 %v1495
          %v2034 = vunpack.c.l.b16 %v1496
          %v2035 = vunpack.c.h.b16 %v1496
          %v2036 = vunpack.c.l.b16 %v1497
          %v2037 = vunpack.c.h.b16 %v1497
          %v2038 = vunpack.c.l.b16 %v1498
          %v2039 = vunpack.c.h.b16 %v1498
          %v2040 = vunpack.c.l.b16 %v1499
          %v2041 = vunpack.c.h.b16 %v1499
          %v2042 = vunpack.c.l.b16 %v1500
          %v2043 = vunpack.c.h.b16 %v1500
          %v2044 = vunpack.c.l.b16 %v1501
          %v2045 = vunpack.c.h.b16 %v1501
          %v2046 = vunpack.c.l.b16 %v1502
          %v2047 = vunpack.c.h.b16 %v1502
          %v2048 = vunpack.c.l.b16 %v1503
          %v2049 = vunpack.c.h.b16 %v1503
          %v2050 = vunpack.c.l.b16 %v1504
          %v2051 = vunpack.c.h.b16 %v1504
          %v2052 = vunpack.c.l.b16 %v1505
          %v2053 = vunpack.c.h.b16 %v1505
          %v2054 = vunpack.c.l.b16 %v1506
          %v2055 = vunpack.c.h.b16 %v1506
          %v2056 = vunpack.c.l.b16 %v1507
          %v2057 = vunpack.c.h.b16 %v1507
          %v2058 = vunpack.c.l.b16 %v1508
          %v2059 = vunpack.c.h.b16 %v1508
          %v2060 = vunpack.c.l.b16 %v1509
          %v2061 = vunpack.c.h.b16 %v1509
          %v2062 = vunpack.c.l.b16 %v1510
          %v2063 = vunpack.c.h.b16 %v1510
          %v2064 = vunpack.c.l.b16 %v1511
          %v2065 = vunpack.c.h.b16 %v1511
          %v2066 = vunpack.c.l.b16 %v1512
          %v2067 = vunpack.c.h.b16 %v1512
          %v2068 = vunpack.c.l.b16 %v1513
          %v2069 = vunpack.c.h.b16 %v1513
          %v2070 = vunpack.c.l.b16 %v1514
          %v2071 = vunpack.c.h.b16 %v1514
          %v2072 = vunpack.c.l.b16 %v1515
          %v2073 = vunpack.c.h.b16 %v1515
          %v2074 = vunpack.c.l.b16 %v1516
          %v2075 = vunpack.c.h.b16 %v1516
          %v2076 = vunpack.c.l.b16 %v1517
          %v2077 = vunpack.c.h.b16 %v1517
          %v2078 = vunpack.c.l.b16 %v1518
          %v2079 = vunpack.c.h.b16 %v1518
          %v2080 = vunpack.c.l.b16 %v1519
          %v2081 = vunpack.c.h.b16 %v1519
          %v2082 = vunpack.c.l.b16 %v1520
          %v2083 = vunpack.c.h.b16 %v1520
          %v2084 = vunpack.c.l.b16 %v1521
          %v2085 = vunpack.c.h.b16 %v1521
          %v2086 = vunpack.c.l.b16 %v1522
          %v2087 = vunpack.c.h.b16 %v1522
          %v2088 = vunpack.c.l.b16 %v1523
          %v2089 = vunpack.c.h.b16 %v1523
          %v2090 = vunpack.c.l.b16 %v1524
          %v2091 = vunpack.c.h.b16 %v1524
          %v2092 = vunpack.c.l.b16 %v1525
          %v2093 = vunpack.c.h.b16 %v1525
          %v2094 = vunpack.c.l.b16 %v1526
          %v2095 = vunpack.c.h.b16 %v1526
          %v2096 = vunpack.c.l.b16 %v1527
          %v2097 = vunpack.c.h.b16 %v1527
          %v2098 = vunpack.c.l.b16 %v1528
          %v2099 = vunpack.c.h.b16 %v1528
          %v2100 = vunpack.c.l.b16 %v1529
          %v2101 = vunpack.c.h.b16 %v1529
          %v2102 = vunpack.c.l.b16 %v1530
          %v2103 = vunpack.c.h.b16 %v1530
          %v2104 = vunpack.c.l.b16 %v1531
          %v2105 = vunpack.c.h.b16 %v1531
          %v2106 = vunpack.c.l.b16 %v1532
          %v2107 = vunpack.c.h.b16 %v1532
          %v2108 = vunpack.c.l.b16 %v1533
          %v2109 = vunpack.c.h.b16 %v1533
          %v2110 = vunpack.c.l.b16 %v1534
          %v2111 = vunpack.c.h.b16 %v1534
          %v2112 = vunpack.c.l.b16 %v1535
          %v2113 = vunpack.c.h.b16 %v1535
          %v2114 = vunpack.c.l.b16 %v1536
          %v2115 = vunpack.c.h.b16 %v1536
          %v2116 = vunpack.c.l.b16 %v1537
          %v2117 = vunpack.c.h.b16 %v1537
          %v2118 = vunpack.c.l.b16 %v1538
          %v2119 = vunpack.c.h.b16 %v1538
          %v2120 = vunpack.c.l.b16 %v1539
          %v2121 = vunpack.c.h.b16 %v1539
          %v2122 = vunpack.c.l.b16 %v1540
          %v2123 = vunpack.c.h.b16 %v1540
          %v2124 = vunpack.c.l.b16 %v1541
          %v2125 = vunpack.c.h.b16 %v1541
          %v2126 = vunpack.c.l.b16 %v1542
          %v2127 = vunpack.c.h.b16 %v1542
          %v2128 = vunpack.c.l.b16 %v1543
          %v2129 = vunpack.c.h.b16 %v1543
          %v2130 = vunpack.c.l.b16 %v1544
          %v2131 = vunpack.c.h.b16 %v1544
          %v2132 = vunpack.c.l.b16 %v1545
          %v2133 = vunpack.c.h.b16 %v1545
          %v2134 = vunpack.c.l.b16 %v1546
          %v2135 = vunpack.c.h.b16 %v1546
          %v2136 = vunpack.c.l.b16 %v1547
          %v2137 = vunpack.c.h.b16 %v1547
          %v2138 = vunpack.c.l.b16 %v1548
          %v2139 = vunpack.c.h.b16 %v1548
          %v2140 = vunpack.c.l.b16 %v1549
          %v2141 = vunpack.c.h.b16 %v1549
          %v2142 = vunpack.c.l.b16 %v1550
          %v2143 = vunpack.c.h.b16 %v1550
          %v2144 = vunpack.c.l.b16 %v1551
          %v2145 = vunpack.c.h.b16 %v1551
          %v2146 = vunpack.c.l.b16 %v1552
          %v2147 = vunpack.c.h.b16 %v1552
          %v2148 = vunpack.c.l.b16 %v1553
          %v2149 = vunpack.c.h.b16 %v1553
          %v2150 = vunpack.c.l.b16 %v1554
          %v2151 = vunpack.c.h.b16 %v1554
          %v2152 = vunpack.c.l.b16 %v1555
          %v2153 = vunpack.c.h.b16 %v1555
          %v2154 = vunpack.c.l.b16 %v1556
          %v2155 = vunpack.c.h.b16 %v1556
          %v2156 = vunpack.c.l.b16 %v1557
          %v2157 = vunpack.c.h.b16 %v1557
          %v2158 = vunpack.c.l.b16 %v1558
          %v2159 = vunpack.c.h.b16 %v1558
          %v2160 = vunpack.c.l.b16 %v1559
          %v2161 = vunpack.c.h.b16 %v1559
          %v2162 = vunpack.c.l.b16 %v1560
          %v2163 = vunpack.c.h.b16 %v1560
          %v2164 = vunpack.c.l.b16 %v1561
          %v2165 = vunpack.c.h.b16 %v1561
          %v2166 = vunpack.c.l.b16 %v1562
          %v2167 = vunpack.c.h.b16 %v1562
          %v2168 = vunpack.c.l.b16 %v1563
          %v2169 = vunpack.c.h.b16 %v1563
          %v2170 = vunpack.c.l.b16 %v1564
          %v2171 = vunpack.c.h.b16 %v1564
          %v2172 = vunpack.c.l.b16 %v1565
          %v2173 = vunpack.c.h.b16 %v1565
          %v2174 = vunpack.c.l.b16 %v1566
          %v2175 = vunpack.c.h.b16 %v1566
          %v2176 = vunpack.c.l.b16 %v1567
          %v2177 = vunpack.c.h.b16 %v1567
          %v2178 = vunpack.c.l.b16 %v1568
          %v2179 = vunpack.c.h.b16 %v1568
          %v2180 = vunpack.c.l.b16 %v1569
          %v2181 = vunpack.c.h.b16 %v1569
          %v2182 = vunpack.c.l.b16 %v1570
          %v2183 = vunpack.c.h.b16 %v1570
          %v2184 = vunpack.c.l.b16 %v1571
          %v2185 = vunpack.c.h.b16 %v1571
          %v2186 = vunpack.c.l.b16 %v1572
          %v2187 = vunpack.c.h.b16 %v1572
          %v2188 = vunpack.c.l.b16 %v1573
          %v2189 = vunpack.c.h.b16 %v1573
          %v2190 = vunpack.c.l.b16 %v1574
          %v2191 = vunpack.c.h.b16 %v1574
          %v2192 = vunpack.c.l.b16 %v1575
          %v2193 = vunpack.c.h.b16 %v1575
          %v2194 = vunpack.c.l.b16 %v1576
          %v2195 = vunpack.c.h.b16 %v1576
          %v2196 = vunpack.c.l.b16 %v1577
          %v2197 = vunpack.c.h.b16 %v1577
          %v2198 = vunpack.c.l.b16 %v1578
          %v2199 = vunpack.c.h.b16 %v1578
          %v2200 = vunpack.c.l.b16 %v1579
          %v2201 = vunpack.c.h.b16 %v1579
          %v2202 = vunpack.c.l.b16 %v1580
          %v2203 = vunpack.c.h.b16 %v1580
          %v2204 = vunpack.c.l.b16 %v1581
          %v2205 = vunpack.c.h.b16 %v1581
          %v2206 = vunpack.c.l.b16 %v1582
          %v2207 = vunpack.c.h.b16 %v1582
          %v2208 = vunpack.c.l.b16 %v1583
          %v2209 = vunpack.c.h.b16 %v1583
          %v2210 = vunpack.c.l.b16 %v1584
          %v2211 = vunpack.c.h.b16 %v1584
          %v2212 = vunpack.c.l.b16 %v1585
          %v2213 = vunpack.c.h.b16 %v1585
          %v2214 = vunpack.c.l.b16 %v1586
          %v2215 = vunpack.c.h.b16 %v1586
          %v2216 = vunpack.c.l.b16 %v1587
          %v2217 = vunpack.c.h.b16 %v1587
          %v2218 = vunpack.c.l.b16 %v1588
          %v2219 = vunpack.c.h.b16 %v1588
          %v2220 = vunpack.c.l.b16 %v1589
          %v2221 = vunpack.c.h.b16 %v1589
          %v2222 = vunpack.c.l.b16 %v1590
          %v2223 = vunpack.c.h.b16 %v1590
          %v2224 = vunpack.c.l.b16 %v1591
          %v2225 = vunpack.c.h.b16 %v1591
          %v2226 = vunpack.c.l.b16 %v1592
          %v2227 = vunpack.c.h.b16 %v1592
          %v2228 = vunpack.c.l.b16 %v1593
          %v2229 = vunpack.c.h.b16 %v1593
          %v2230 = vunpack.c.l.b16 %v1594
          %v2231 = vunpack.c.h.b16 %v1594
          %v2232 = vunpack.c.l.b16 %v1595
          %v2233 = vunpack.c.h.b16 %v1595
          %v2234 = vunpack.c.l.b16 %v1596
          %v2235 = vunpack.c.h.b16 %v1596
          %v2236 = vunpack.c.l.b16 %v1597
          %v2237 = vunpack.c.h.b16 %v1597
          %v2238 = vunpack.c.l.b16 %v1598
          %v2239 = vunpack.c.h.b16 %v1598
          %v2240 = vunpack.c.l.b16 %v1599
          %v2241 = vunpack.c.h.b16 %v1599
          %v2242 = vunpack.c.l.b16 %v1600
          %v2243 = vunpack.c.h.b16 %v1600
          %v2244 = vunpack.c.l.b16 %v1601
          %v2245 = vunpack.c.h.b16 %v1601
          %v2246 = vunpack.c.l.b16 %v1602
          %v2247 = vunpack.c.h.b16 %v1602
          %v2248 = vunpack.c.l.b16 %v1603
          %v2249 = vunpack.c.h.b16 %v1603
          %v2250 = vunpack.c.l.b16 %v1604
          %v2251 = vunpack.c.h.b16 %v1604
          %v2252 = vunpack.c.l.b16 %v1605
          %v2253 = vunpack.c.h.b16 %v1605
          %v2254 = vunpack.c.l.b16 %v1606
          %v2255 = vunpack.c.h.b16 %v1606
          %v2256 = vunpack.c.l.b16 %v1607
          %v2257 = vunpack.c.h.b16 %v1607
          %v2258 = vunpack.c.l.b16 %v1608
          %v2259 = vunpack.c.h.b16 %v1608
          %v2260 = vunpack.c.l.b16 %v1609
          %v2261 = vunpack.c.h.b16 %v1609
          %v2262 = vunpack.c.l.b16 %v1610
          %v2263 = vunpack.c.h.b16 %v1610
          %v2264 = vunpack.c.l.b16 %v1611
          %v2265 = vunpack.c.h.b16 %v1611
          %v2266 = vunpack.c.l.b16 %v1612
          %v2267 = vunpack.c.h.b16 %v1612
          %v2268 = vunpack.c.l.b16 %v1613
          %v2269 = vunpack.c.h.b16 %v1613
          %v2270 = vunpack.c.l.b16 %v1614
          %v2271 = vunpack.c.h.b16 %v1614
          %v2272 = vunpack.c.l.b16 %v1615
          %v2273 = vunpack.c.h.b16 %v1615
          %v2274 = vunpack.c.l.b16 %v1616
          %v2275 = vunpack.c.h.b16 %v1616
          %v2276 = vunpack.c.l.b16 %v1617
          %v2277 = vunpack.c.h.b16 %v1617
          %v2278 = vunpack.c.l.b16 %v1618
          %v2279 = vunpack.c.h.b16 %v1618
          %v2280 = vunpack.c.l.b16 %v1619
          %v2281 = vunpack.c.h.b16 %v1619
          %v2282 = vunpack.c.l.b16 %v1620
          %v2283 = vunpack.c.h.b16 %v1620
          %v2284 = vunpack.c.l.b16 %v1621
          %v2285 = vunpack.c.h.b16 %v1621
          %v2286 = vunpack.c.l.b16 %v1622
          %v2287 = vunpack.c.h.b16 %v1622
          %v2288 = vunpack.c.l.b16 %v1623
          %v2289 = vunpack.c.h.b16 %v1623
          %v2290 = vunpack.c.l.b16 %v1624
          %v2291 = vunpack.c.h.b16 %v1624
          %v2292 = vunpack.c.l.b16 %v1625
          %v2293 = vunpack.c.h.b16 %v1625
          %v2294 = vunpack.c.l.b16 %v1626
          %v2295 = vunpack.c.h.b16 %v1626
          %v2296 = vunpack.c.l.b16 %v1627
          %v2297 = vunpack.c.h.b16 %v1627
          %v2298 = vunpack.c.l.b16 %v1628
          %v2299 = vunpack.c.h.b16 %v1628
          %v2300 = vunpack.c.l.b16 %v1629
          %v2301 = vunpack.c.h.b16 %v1629
          %v2302 = vunpack.c.l.b16 %v1630
          %v2303 = vunpack.c.h.b16 %v1630
          %v2304 = vunpack.c.l.b16 %v1631
          %v2305 = vunpack.c.h.b16 %v1631
          %v2306 = vunpack.c.l.b16 %v1632
          %v2307 = vunpack.c.h.b16 %v1632
          %v2308 = vunpack.c.l.b16 %v1633
          %v2309 = vunpack.c.h.b16 %v1633
          %v2310 = vunpack.c.l.b16 %v1634
          %v2311 = vunpack.c.h.b16 %v1634
          %v2312 = vunpack.c.l.b16 %v1635
          %v2313 = vunpack.c.h.b16 %v1635
          %v2314 = vunpack.c.l.b16 %v1636
          %v2315 = vunpack.c.h.b16 %v1636
          %v2316 = vunpack.c.l.b16 %v1637
          %v2317 = vunpack.c.h.b16 %v1637
          %v2318 = vunpack.c.l.b16 %v1638
          %v2319 = vunpack.c.h.b16 %v1638
          %v2320 = vunpack.c.l.b16 %v1639
          %v2321 = vunpack.c.h.b16 %v1639
          %v2322 = vunpack.c.l.b16 %v1640
          %v2323 = vunpack.c.h.b16 %v1640
          %v2324 = vunpack.c.l.b16 %v1641
          %v2325 = vunpack.c.h.b16 %v1641
          %v2326 = vunpack.c.l.b16 %v1642
          %v2327 = vunpack.c.h.b16 %v1642
          %v2328 = vunpack.c.l.b16 %v1643
          %v2329 = vunpack.c.h.b16 %v1643
          %v2330 = vunpack.c.l.b16 %v1644
          %v2331 = vunpack.c.h.b16 %v1644
          %v2332 = vunpack.c.l.b16 %v1645
          %v2333 = vunpack.c.h.b16 %v1645
          %v2334 = vunpack.c.l.b16 %v1646
          %v2335 = vunpack.c.h.b16 %v1646
          %v2336 = vunpack.c.l.b16 %v1647
          %v2337 = vunpack.c.h.b16 %v1647
          %v2338 = vunpack.c.l.b16 %v1648
          %v2339 = vunpack.c.h.b16 %v1648
          %v2340 = vunpack.c.l.b16 %v1649
          %v2341 = vunpack.c.h.b16 %v1649
          %v2342 = vunpack.c.l.b16 %v1650
          %v2343 = vunpack.c.h.b16 %v1650
          %v2344 = vunpack.c.l.b16 %v1651
          %v2345 = vunpack.c.h.b16 %v1651
          %v2346 = vunpack.c.l.b16 %v1652
          %v2347 = vunpack.c.h.b16 %v1652
          %v2348 = vunpack.c.l.b16 %v1653
          %v2349 = vunpack.c.h.b16 %v1653
          %v2350 = vunpack.c.l.b16 %v1654
          %v2351 = vunpack.c.h.b16 %v1654
          %v2352 = vunpack.c.l.b16 %v1655
          %v2353 = vunpack.c.h.b16 %v1655
          %v2354 = vunpack.c.l.b16 %v1656
          %v2355 = vunpack.c.h.b16 %v1656
          %v2356 = vunpack.c.l.b16 %v1657
          %v2357 = vunpack.c.h.b16 %v1657
          %v2358 = vunpack.c.l.b16 %v1658
          %v2359 = vunpack.c.h.b16 %v1658
          %v2360 = vunpack.c.l.b16 %v1659
          %v2361 = vunpack.c.h.b16 %v1659
          %v2362 = vunpack.c.l.b16 %v1660
          %v2363 = vunpack.c.h.b16 %v1660
          %v2364 = vunpack.c.l.b16 %v1661
          %v2365 = vunpack.c.h.b16 %v1661
          %v2366 = vunpack.c.l.b16 %v1662
          %v2367 = vunpack.c.h.b16 %v1662
          %v2368 = vunpack.c.l.b16 %v1663
          %v2369 = vunpack.c.h.b16 %v1663
          %v2370 = vunpack.c.l.b16 %v1664
          %v2371 = vunpack.c.h.b16 %v1664
          %v2372 = vunpack.c.l.b16 %v1665
          %v2373 = vunpack.c.h.b16 %v1665
          %v2374 = vunpack.c.l.b16 %v1666
          %v2375 = vunpack.c.h.b16 %v1666
          %v2376 = vunpack.c.l.b16 %v1667
          %v2377 = vunpack.c.h.b16 %v1667
          %v2378 = vunpack.c.l.b16 %v1668
          %v2379 = vunpack.c.h.b16 %v1668
          %v2380 = vunpack.c.l.b16 %v1669
          %v2381 = vunpack.c.h.b16 %v1669
          %v2382 = vunpack.c.l.b16 %v1670
          %v2383 = vunpack.c.h.b16 %v1670
          %v2384 = vunpack.c.l.b16 %v1671
          %v2385 = vunpack.c.h.b16 %v1671
          %v2386 = vunpack.c.l.b16 %v1672
          %v2387 = vunpack.c.h.b16 %v1672
          %v2388 = vunpack.c.l.b16 %v1673
          %v2389 = vunpack.c.h.b16 %v1673
          %v2390 = vunpack.c.l.b16 %v1674
          %v2391 = vunpack.c.h.b16 %v1674
          %v2392 = vunpack.c.l.b16 %v1675
          %v2393 = vunpack.c.h.b16 %v1675
          %v2394 = vunpack.c.l.b16 %v1676
          %v2395 = vunpack.c.h.b16 %v1676
          %v2396 = vunpack.c.l.b16 %v1677
          %v2397 = vunpack.c.h.b16 %v1677
          %v2398 = vunpack.c.l.b16 %v1678
          %v2399 = vunpack.c.h.b16 %v1678
          %v2400 = vunpack.c.l.b16 %v1679
          %v2401 = vunpack.c.h.b16 %v1679
          %v2402 = vunpack.c.l.b16 %v1680
          %v2403 = vunpack.c.h.b16 %v1680
          %v2404 = vunpack.c.l.b16 %v1681
          %v2405 = vunpack.c.h.b16 %v1681
          %v2406 = vunpack.c.l.b16 %v1682
          %v2407 = vunpack.c.h.b16 %v1682
          %v2408 = vunpack.c.l.b16 %v1683
          %v2409 = vunpack.c.h.b16 %v1683
          %v2410 = vunpack.c.l.b16 %v1684
          %v2411 = vunpack.c.h.b16 %v1684
          %v2412 = vunpack.c.l.b16 %v1685
          %v2413 = vunpack.c.h.b16 %v1685
          %v2414 = vunpack.c.l.b16 %v1686
          %v2415 = vunpack.c.h.b16 %v1686
          %v2416 = vunpack.c.l.b16 %v1687
          %v2417 = vunpack.c.h.b16 %v1687
          %v2418 = vunpack.c.l.b16 %v1688
          %v2419 = vunpack.c.h.b16 %v1688
          %v2420 = vunpack.c.l.b16 %v1689
          %v2421 = vunpack.c.h.b16 %v1689
          %v2422 = vunpack.c.l.b16 %v1690
          %v2423 = vunpack.c.h.b16 %v1690
          %v2424 = vunpack.c.l.b16 %v1691
          %v2425 = vunpack.c.h.b16 %v1691
          %v2426 = vunpack.c.l.b16 %v1692
          %v2427 = vunpack.c.h.b16 %v1692
          %v2428 = vunpack.c.l.b16 %v1693
          %v2429 = vunpack.c.h.b16 %v1693
          %v2430 = vunpack.c.l.b16 %v1694
          %v2431 = vunpack.c.h.b16 %v1694
          %v2432 = vunpack.c.l.b16 %v1695
          %v2433 = vunpack.c.h.b16 %v1695
          %v2434 = vunpack.c.l.b16 %v1696
          %v2435 = vunpack.c.h.b16 %v1696
          %v2436 = vunpack.c.l.b16 %v1697
          %v2437 = vunpack.c.h.b16 %v1697
          %v2438 = vunpack.c.l.b16 %v1698
          %v2439 = vunpack.c.h.b16 %v1698
          %v2440 = vunpack.c.l.b16 %v1699
          %v2441 = vunpack.c.h.b16 %v1699
          %v2442 = vunpack.c.l.b16 %v1700
          %v2443 = vunpack.c.h.b16 %v1700
          %v2444 = vunpack.c.l.b16 %v1701
          %v2445 = vunpack.c.h.b16 %v1701
          %v2446 = vunpack.c.l.b16 %v1702
          %v2447 = vunpack.c.h.b16 %v1702
          %v2448 = vunpack.c.l.b16 %v1703
          %v2449 = vunpack.c.h.b16 %v1703
          %v2450 = vunpack.c.l.b16 %v1704
          %v2451 = vunpack.c.h.b16 %v1704
          %v2452 = vunpack.c.l.b16 %v1705
          %v2453 = vunpack.c.h.b16 %v1705
          %v2454 = vunpack.c.l.b16 %v1706
          %v2455 = vunpack.c.h.b16 %v1706
          %v2456 = vunpack.c.l.b16 %v1707
          %v2457 = vunpack.c.h.b16 %v1707
          %v2458 = vunpack.c.l.b16 %v1708
          %v2459 = vunpack.c.h.b16 %v1708
          %v2460 = vunpack.c.l.b16 %v1709
          %v2461 = vunpack.c.h.b16 %v1709
          %v2462 = vunpack.c.l.b16 %v1710
          %v2463 = vunpack.c.h.b16 %v1710
          %v2464 = vunpack.c.l.b16 %v1711
          %v2465 = vunpack.c.h.b16 %v1711
          %v2466 = vunpack.c.l.b16 %v1712
          %v2467 = vunpack.c.h.b16 %v1712
          %v2468 = vunpack.c.l.b16 %v1713
          %v2469 = vunpack.c.h.b16 %v1713
          %v2470 = vunpack.c.l.b16 %v1714
          %v2471 = vunpack.c.h.b16 %v1714
          %v2472 = vunpack.c.l.b16 %v1715
          %v2473 = vunpack.c.h.b16 %v1715
          %v2474 = vunpack.c.l.b16 %v1716
          %v2475 = vunpack.c.h.b16 %v1716
          %v2476 = vunpack.c.l.b16 %v1717
          %v2477 = vunpack.c.h.b16 %v1717
          %v2478 = vunpack.c.l.b16 %v1718
          %v2479 = vunpack.c.h.b16 %v1718
          %v2480 = vunpack.c.l.b16 %v1719
          %v2481 = vunpack.c.h.b16 %v1719
          %v2482 = vunpack.c.l.b16 %v1720
          %v2483 = vunpack.c.h.b16 %v1720
          %v2484 = vunpack.c.l.b16 %v1721
          %v2485 = vunpack.c.h.b16 %v1721
          %v2486 = vunpack.c.l.b16 %v1722
          %v2487 = vunpack.c.h.b16 %v1722
          %v2488 = vunpack.c.l.b16 %v1723
          %v2489 = vunpack.c.h.b16 %v1723
          %v2490 = vunpack.c.l.b16 %v1724
          %v2491 = vunpack.c.h.b16 %v1724
          %v2492 = vunpack.c.l.b16 %v1725
          %v2493 = vunpack.c.h.b16 %v1725
          %v2494 = vunpack.c.l.b16 %v1726
          %v2495 = vunpack.c.h.b16 %v1726
          %v2496 = vpack.c.b16 %v1988, %v1984
          %v2497 = vpack.c.b16 %v1989, %v1985
          %v2498 = vpack.c.b16 %v1990, %v1986
          %v2499 = vpack.c.b16 %v1991, %v1987
          %v2500 = vpack.c.b16 %v1996, %v1992
          %v2501 = vpack.c.b16 %v1997, %v1993
          %v2502 = vpack.c.b16 %v1998, %v1994
          %v2503 = vpack.c.b16 %v1999, %v1995
          %v2504 = vpack.c.b16 %v2004, %v2000
          %v2505 = vpack.c.b16 %v2005, %v2001
          %v2506 = vpack.c.b16 %v2006, %v2002
          %v2507 = vpack.c.b16 %v2007, %v2003
          %v2508 = vpack.c.b16 %v2012, %v2008
          %v2509 = vpack.c.b16 %v2013, %v2009
          %v2510 = vpack.c.b16 %v2014, %v2010
          %v2511 = vpack.c.b16 %v2015, %v2011
          %v2512 = vpack.c.b16 %v2020, %v2016
          %v2513 = vpack.c.b16 %v2021, %v2017
          %v2514 = vpack.c.b16 %v2022, %v2018
          %v2515 = vpack.c.b16 %v2023, %v2019
          %v2516 = vpack.c.b16 %v2028, %v2024
          %v2517 = vpack.c.b16 %v2029, %v2025
          %v2518 = vpack.c.b16 %v2030, %v2026
          %v2519 = vpack.c.b16 %v2031, %v2027
          %v2520 = vpack.c.b16 %v2036, %v2032
          %v2521 = vpack.c.b16 %v2037, %v2033
          %v2522 = vpack.c.b16 %v2038, %v2034
          %v2523 = vpack.c.b16 %v2039, %v2035
          %v2524 = vpack.c.b16 %v2044, %v2040
          %v2525 = vpack.c.b16 %v2045, %v2041
          %v2526 = vpack.c.b16 %v2046, %v2042
          %v2527 = vpack.c.b16 %v2047, %v2043
          %v2528 = vpack.c.b16 %v2052, %v2048
          %v2529 = vpack.c.b16 %v2053, %v2049
          %v2530 = vpack.c.b16 %v2054, %v2050
          %v2531 = vpack.c.b16 %v2055, %v2051
          %v2532 = vpack.c.b16 %v2060, %v2056
          %v2533 = vpack.c.b16 %v2061, %v2057
          %v2534 = vpack.c.b16 %v2062, %v2058
          %v2535 = vpack.c.b16 %v2063, %v2059
          %v2536 = vpack.c.b16 %v2068, %v2064
          %v2537 = vpack.c.b16 %v2069, %v2065
          %v2538 = vpack.c.b16 %v2070, %v2066
          %v2539 = vpack.c.b16 %v2071, %v2067
          %v2540 = vpack.c.b16 %v2076, %v2072
          %v2541 = vpack.c.b16 %v2077, %v2073
          %v2542 = vpack.c.b16 %v2078, %v2074
          %v2543 = vpack.c.b16 %v2079, %v2075
          %v2544 = vpack.c.b16 %v2084, %v2080
          %v2545 = vpack.c.b16 %v2085, %v2081
          %v2546 = vpack.c.b16 %v2086, %v2082
          %v2547 = vpack.c.b16 %v2087, %v2083
          %v2548 = vpack.c.b16 %v2092, %v2088
          %v2549 = vpack.c.b16 %v2093, %v2089
          %v2550 = vpack.c.b16 %v2094, %v2090
          %v2551 = vpack.c.b16 %v2095, %v2091
          %v2552 = vpack.c.b16 %v2100, %v2096
          %v2553 = vpack.c.b16 %v2101, %v2097
          %v2554 = vpack.c.b16 %v2102, %v2098
          %v2555 = vpack.c.b16 %v2103, %v2099
          %v2556 = vpack.c.b16 %v2108, %v2104
          %v2557 = vpack.c.b16 %v2109, %v2105
          %v2558 = vpack.c.b16 %v2110, %v2106
          %v2559 = vpack.c.b16 %v2111, %v2107
          %v2560 = vpack.c.b16 %v2116, %v2112
          %v2561 = vpack.c.b16 %v2117, %v2113
          %v2562 = vpack.c.b16 %v2118, %v2114
          %v2563 = vpack.c.b16 %v2119, %v2115
          %v2564 = vpack.c.b16 %v2124, %v2120
          %v2565 = vpack.c.b16 %v2125, %v2121
          %v2566 = vpack.c.b16 %v2126, %v2122
          %v2567 = vpack.c.b16 %v2127, %v2123
          %v2568 = vpack.c.b16 %v2132, %v2128
          %v2569 = vpack.c.b16 %v2133, %v2129
          %v2570 = vpack.c.b16 %v2134, %v2130
          %v2571 = vpack.c.b16 %v2135, %v2131
          %v2572 = vpack.c.b16 %v2140, %v2136
          %v2573 = vpack.c.b16 %v2141, %v2137
          %v2574 = vpack.c.b16 %v2142, %v2138
          %v2575 = vpack.c.b16 %v2143, %v2139
          %v2576 = vpack.c.b16 %v2148, %v2144
          %v2577 = vpack.c.b16 %v2149, %v2145
          %v2578 = vpack.c.b16 %v2150, %v2146
          %v2579 = vpack.c.b16 %v2151, %v2147
          %v2580 = vpack.c.b16 %v2156, %v2152
          %v2581 = vpack.c.b16 %v2157, %v2153
          %v2582 = vpack.c.b16 %v2158, %v2154
          %v2583 = vpack.c.b16 %v2159, %v2155
          %v2584 = vpack.c.b16 %v2164, %v2160
          %v2585 = vpack.c.b16 %v2165, %v2161
          %v2586 = vpack.c.b16 %v2166, %v2162
          %v2587 = vpack.c.b16 %v2167, %v2163
          %v2588 = vpack.c.b16 %v2172, %v2168
          %v2589 = vpack.c.b16 %v2173, %v2169
          %v2590 = vpack.c.b16 %v2174, %v2170
          %v2591 = vpack.c.b16 %v2175, %v2171
          %v2592 = vpack.c.b16 %v2180, %v2176
          %v2593 = vpack.c.b16 %v2181, %v2177
          %v2594 = vpack.c.b16 %v2182, %v2178
          %v2595 = vpack.c.b16 %v2183, %v2179
          %v2596 = vpack.c.b16 %v2188, %v2184
          %v2597 = vpack.c.b16 %v2189, %v2185
          %v2598 = vpack.c.b16 %v2190, %v2186
          %v2599 = vpack.c.b16 %v2191, %v2187
          %v2600 = vpack.c.b16 %v2196, %v2192
          %v2601 = vpack.c.b16 %v2197, %v2193
          %v2602 = vpack.c.b16 %v2198, %v2194
          %v2603 = vpack.c.b16 %v2199, %v2195
          %v2604 = vpack.c.b16 %v2204, %v2200
          %v2605 = vpack.c.b16 %v2205, %v2201
          %v2606 = vpack.c.b16 %v2206, %v2202
          %v2607 = vpack.c.b16 %v2207, %v2203
          %v2608 = vpack.c.b16 %v2212, %v2208
          %v2609 = vpack.c.b16 %v2213, %v2209
          %v2610 = vpack.c.b16 %v2214, %v2210
          %v2611 = vpack.c.b16 %v2215, %v2211
          %v2612 = vpack.c.b16 %v2220, %v2216
          %v2613 = vpack.c.b16 %v2221, %v2217
          %v2614 = vpack.c.b16 %v2222, %v2218
          %v2615 = vpack.c.b16 %v2223, %v2219
          %v2616 = vpack.c.b16 %v2228, %v2224
          %v2617 = vpack.c.b16 %v2229, %v2225
          %v2618 = vpack.c.b16 %v2230, %v2226
          %v2619 = vpack.c.b16 %v2231, %v2227
          %v2620 = vpack.c.b16 %v2236, %v2232
          %v2621 = vpack.c.b16 %v2237, %v2233
          %v2622 = vpack.c.b16 %v2238, %v2234
          %v2623 = vpack.c.b16 %v2239, %v2235
          %v2624 = vpack.c.b16 %v2244, %v2240
          %v2625 = vpack.c.b16 %v2245, %v2241
          %v2626 = vpack.c.b16 %v2246, %v2242
          %v2627 = vpack.c.b16 %v2247, %v2243
          %v2628 = vpack.c.b16 %v2252, %v2248
          %v2629 = vpack.c.b16 %v2253, %v2249
          %v2630 = vpack.c.b16 %v2254, %v2250
          %v2631 = vpack.c.b16 %v2255, %v2251
          %v2632 = vpack.c.b16 %v2260, %v2256
          %v2633 = vpack.c.b16 %v2261, %v2257
          %v2634 = vpack.c.b16 %v2262, %v2258
          %v2635 = vpack.c.b16 %v2263, %v2259
          %v2636 = vpack.c.b16 %v2268, %v2264
          %v2637 = vpack.c.b16 %v2269, %v2265
          %v2638 = vpack.c.b16 %v2270, %v2266
          %v2639 = vpack.c.b16 %v2271, %v2267
          %v2640 = vpack.c.b16 %v2276, %v2272
          %v2641 = vpack.c.b16 %v2277, %v2273
          %v2642 = vpack.c.b16 %v2278, %v2274
          %v2643 = vpack.c.b16 %v2279, %v2275
          %v2644 = vpack.c.b16 %v2284, %v2280
          %v2645 = vpack.c.b16 %v2285, %v2281
          %v2646 = vpack.c.b16 %v2286, %v2282
          %v2647 = vpack.c.b16 %v2287, %v2283
          %v2648 = vpack.c.b16 %v2292, %v2288
          %v2649 = vpack.c.b16 %v2293, %v2289
          %v2650 = vpack.c.b16 %v2294, %v2290
          %v2651 = vpack.c.b16 %v2295, %v2291
          %v2652 = vpack.c.b16 %v2300, %v2296
          %v2653 = vpack.c.b16 %v2301, %v2297
          %v2654 = vpack.c.b16 %v2302, %v2298
          %v2655 = vpack.c.b16 %v2303, %v2299
          %v2656 = vpack.c.b16 %v2308, %v2304
          %v2657 = vpack.c.b16 %v2309, %v2305
          %v2658 = vpack.c.b16 %v2310, %v2306
          %v2659 = vpack.c.b16 %v2311, %v2307
          %v2660 = vpack.c.b16 %v2316, %v2312
          %v2661 = vpack.c.b16 %v2317, %v2313
          %v2662 = vpack.c.b16 %v2318, %v2314
          %v2663 = vpack.c.b16 %v2319, %v2315
          %v2664 = vpack.c.b16 %v2324, %v2320
          %v2665 = vpack.c.b16 %v2325, %v2321
          %v2666 = vpack.c.b16 %v2326, %v2322
          %v2667 = vpack.c.b16 %v2327, %v2323
          %v2668 = vpack.c.b16 %v2332, %v2328
          %v2669 = vpack.c.b16 %v2333, %v2329
          %v2670 = vpack.c.b16 %v2334, %v2330
          %v2671 = vpack.c.b16 %v2335, %v2331
          %v2672 = vpack.c.b16 %v2340, %v2336
          %v2673 = vpack.c.b16 %v2341, %v2337
          %v2674 = vpack.c.b16 %v2342, %v2338
          %v2675 = vpack.c.b16 %v2343, %v2339
          %v2676 = vpack.c.b16 %v2348, %v2344
          %v2677 = vpack.c.b16 %v2349, %v2345
          %v2678 = vpack.c.b16 %v2350, %v2346
          %v2679 = vpack.c.b16 %v2351, %v2347
          %v2680 = vpack.c.b16 %v2356, %v2352
          %v2681 = vpack.c.b16 %v2357, %v2353
          %v2682 = vpack.c.b16 %v2358, %v2354
          %v2683 = vpack.c.b16 %v2359, %v2355
          %v2684 = vpack.c.b16 %v2364, %v2360
          %v2685 = vpack.c.b16 %v2365, %v2361
          %v2686 = vpack.c.b16 %v2366, %v2362
          %v2687 = vpack.c.b16 %v2367, %v2363
          %v2688 = vpack.c.b16 %v2372, %v2368
          %v2689 = vpack.c.b16 %v2373, %v2369
          %v2690 = vpack.c.b16 %v2374, %v2370
          %v2691 = vpack.c.b16 %v2375, %v2371
          %v2692 = vpack.c.b16 %v2380, %v2376
          %v2693 = vpack.c.b16 %v2381, %v2377
          %v2694 = vpack.c.b16 %v2382, %v2378
          %v2695 = vpack.c.b16 %v2383, %v2379
          %v2696 = vpack.c.b16 %v2388, %v2384
          %v2697 = vpack.c.b16 %v2389, %v2385
          %v2698 = vpack.c.b16 %v2390, %v2386
          %v2699 = vpack.c.b16 %v2391, %v2387
          %v2700 = vpack.c.b16 %v2396, %v2392
          %v2701 = vpack.c.b16 %v2397, %v2393
          %v2702 = vpack.c.b16 %v2398, %v2394
          %v2703 = vpack.c.b16 %v2399, %v2395
          %v2704 = vpack.c.b16 %v2404, %v2400
          %v2705 = vpack.c.b16 %v2405, %v2401
          %v2706 = vpack.c.b16 %v2406, %v2402
          %v2707 = vpack.c.b16 %v2407, %v2403
          %v2708 = vpack.c.b16 %v2412, %v2408
          %v2709 = vpack.c.b16 %v2413, %v2409
          %v2710 = vpack.c.b16 %v2414, %v2410
          %v2711 = vpack.c.b16 %v2415, %v2411
          %v2712 = vpack.c.b16 %v2420, %v2416
          %v2713 = vpack.c.b16 %v2421, %v2417
          %v2714 = vpack.c.b16 %v2422, %v2418
          %v2715 = vpack.c.b16 %v2423, %v2419
          %v2716 = vpack.c.b16 %v2428, %v2424
          %v2717 = vpack.c.b16 %v2429, %v2425
          %v2718 = vpack.c.b16 %v2430, %v2426
          %v2719 = vpack.c.b16 %v2431, %v2427
          %v2720 = vpack.c.b16 %v2436, %v2432
          %v2721 = vpack.c.b16 %v2437, %v2433
          %v2722 = vpack.c.b16 %v2438, %v2434
          %v2723 = vpack.c.b16 %v2439, %v2435
          %v2724 = vpack.c.b16 %v2444, %v2440
          %v2725 = vpack.c.b16 %v2445, %v2441
          %v2726 = vpack.c.b16 %v2446, %v2442
          %v2727 = vpack.c.b16 %v2447, %v2443
          %v2728 = vpack.c.b16 %v2452, %v2448
          %v2729 = vpack.c.b16 %v2453, %v2449
          %v2730 = vpack.c.b16 %v2454, %v2450
          %v2731 = vpack.c.b16 %v2455, %v2451
          %v2732 = vpack.c.b16 %v2460, %v2456
          %v2733 = vpack.c.b16 %v2461, %v2457
          %v2734 = vpack.c.b16 %v2462, %v2458
          %v2735 = vpack.c.b16 %v2463, %v2459
          %v2736 = vpack.c.b16 %v2468, %v2464
          %v2737 = vpack.c.b16 %v2469, %v2465
          %v2738 = vpack.c.b16 %v2470, %v2466
          %v2739 = vpack.c.b16 %v2471, %v2467
          %v2740 = vpack.c.b16 %v2476, %v2472
          %v2741 = vpack.c.b16 %v2477, %v2473
          %v2742 = vpack.c.b16 %v2478, %v2474
          %v2743 = vpack.c.b16 %v2479, %v2475
          %v2744 = vpack.c.b16 %v2484, %v2480
          %v2745 = vpack.c.b16 %v2485, %v2481
          %v2746 = vpack.c.b16 %v2486, %v2482
          %v2747 = vpack.c.b16 %v2487, %v2483
          %v2748 = vpack.c.b16 %v2492, %v2488
          %v2749 = vpack.c.b16 %v2493, %v2489
          %v2750 = vpack.c.b16 %v2494, %v2490
          %v2751 = vpack.c.b16 %v2495, %v2491
          %v3009 = vlaneseq
          %v3010 = vshrl.u32 %v3009, 7
          %v3011 = vsub.s32 0, %v3010
          %v3012 = vrot.slane %v1727, %v3011
          %v3013 = vlaneseq
          %v3014 = vshrl.u32 %v3013, 7
          %v3015 = vsub.s32 1, %v3014
          %v3016 = vrot.slane %v1727, %v3015
          %v3017 = vlaneseq
          %v3018 = vshrl.u32 %v3017, 7
          %v3019 = vsub.s32 2, %v3018
          %v3020 = vrot.slane %v1727, %v3019
          %v3021 = vlaneseq
          %v3022 = vshrl.u32 %v3021, 7
          %v3023 = vsub.s32 3, %v3022
          %v3024 = vrot.slane %v1727, %v3023
          %3029 = vmatprep.subr.bf16.mxu0 %v2525
          %3030 = vmatpush1.bf16.msra.mxu0 %v2524
          %3031 = vmatprep.subr.bf16.mxu0 %v2521
          %3032 = vmatpush1.bf16.msra.mxu0 %v2520
          %3033 = vmatprep.subr.bf16.mxu0 %v2517
          %3034 = vmatpush1.bf16.msra.mxu0 %v2516
          %3035 = vmatprep.subr.bf16.mxu0 %v2513
          %3036 = vmatpush1.bf16.msra.mxu0 %v2512
          %3037 = vmatprep.subr.bf16.mxu0 %v2509
          %3038 = vmatpush1.bf16.msra.mxu0 %v2508
          %3039 = vmatprep.subr.bf16.mxu0 %v2505
          %3040 = vmatpush1.bf16.msra.mxu0 %v2504
          %3041 = vmatprep.subr.bf16.mxu0 %v2501
          %3042 = vmatpush1.bf16.msra.mxu0 %v2500
          %3043 = vmatprep.subr.bf16.mxu0 %v2497
          %3044 = vmatpush1.bf16.msra.mxu0 %v2496
          %3045 = vmatprep.subr.bf16.mxu0 %v2557
          %3046 = vmatpush2.bf16.msra.mxu0 %v2556
          %3047 = vmatprep.subr.bf16.mxu0 %v2553
          %3048 = vmatpush2.bf16.msra.mxu0 %v2552
          %3049 = vmatprep.subr.bf16.mxu0 %v2549
          %3050 = vmatpush2.bf16.msra.mxu0 %v2548
          %3051 = vmatprep.subr.bf16.mxu0 %v2545
          %3052 = vmatpush2.bf16.msra.mxu0 %v2544
          %3053 = vmatprep.subr.bf16.mxu0 %v2541
          %3054 = vmatpush2.bf16.msra.mxu0 %v2540
          %3055 = vmatprep.subr.bf16.mxu0 %v2537
          %3056 = vmatpush2.bf16.msra.mxu0 %v2536
          %3057 = vmatprep.subr.bf16.mxu0 %v2533
          %3058 = vmatpush2.bf16.msra.mxu0 %v2532
          %3059 = vmatprep.subr.bf16.mxu0 %v2529
          %3060 = vmatpush2.bf16.msra.mxu0 %v2528
          %3061 = vmatprep.mubr.bf16.mxu0 %v1464
          %3062 = vmatmul.mubr.bf16.gmra.mxu0 %v1463
          %v3063 = vpop.f32.mrf.mxu0
          %v3064 = vadd.f32 %v3012, %v3063
          %v3065 = vpop.f32.mrf.mxu0
          %v3066 = vadd.f32 %v3016, %v3065
          %v3067 = vpop.f32.mrf.mxu0
          %v3068 = vpop.f32.mrf.mxu0
          %3069 = vdwg.mxu0
          %3070 = vmatprep.subr.bf16.mxu0 %v2589
          %3071 = vmatpush1.bf16.msra.mxu0 %v2588
          %3072 = vmatprep.subr.bf16.mxu0 %v2585
          %3073 = vmatpush1.bf16.msra.mxu0 %v2584
          %3074 = vmatprep.subr.bf16.mxu0 %v2581
          %3075 = vmatpush1.bf16.msra.mxu0 %v2580
          %3076 = vmatprep.subr.bf16.mxu0 %v2577
          %3077 = vmatpush1.bf16.msra.mxu0 %v2576
          %3078 = vmatprep.subr.bf16.mxu0 %v2573
          %3079 = vmatpush1.bf16.msra.mxu0 %v2572
          %3080 = vmatprep.subr.bf16.mxu0 %v2569
          %3081 = vmatpush1.bf16.msra.mxu0 %v2568
          %3082 = vmatprep.subr.bf16.mxu0 %v2565
          %3083 = vmatpush1.bf16.msra.mxu0 %v2564
          %3084 = vmatprep.subr.bf16.mxu0 %v2561
          %3085 = vmatpush1.bf16.msra.mxu0 %v2560
          %3086 = vmatprep.subr.bf16.mxu0 %v2621
          %3087 = vmatpush2.bf16.msra.mxu0 %v2620
          %3088 = vmatprep.subr.bf16.mxu0 %v2617
          %3089 = vmatpush2.bf16.msra.mxu0 %v2616
          %3090 = vmatprep.subr.bf16.mxu0 %v2613
          %3091 = vmatpush2.bf16.msra.mxu0 %v2612
          %3092 = vmatprep.subr.bf16.mxu0 %v2609
          %3093 = vmatpush2.bf16.msra.mxu0 %v2608
          %3094 = vmatprep.subr.bf16.mxu0 %v2605
          %3095 = vmatpush2.bf16.msra.mxu0 %v2604
          %3096 = vmatprep.subr.bf16.mxu0 %v2601
          %3097 = vmatpush2.bf16.msra.mxu0 %v2600
          %3098 = vmatprep.subr.bf16.mxu0 %v2597
          %3099 = vmatpush2.bf16.msra.mxu0 %v2596
          %3100 = vmatprep.subr.bf16.mxu0 %v2593
          %3101 = vmatpush2.bf16.msra.mxu0 %v2592
          %3102 = vmatprep.mubr.bf16.mxu0 %v1466
          %3103 = vmatmul.mubr.bf16.gmra.mxu0 %v1465
          %v3104 = vpop.f32.mrf.mxu0
          %v3105 = vadd.f32 %v3064, %v3104
          %v3106 = vpop.f32.mrf.mxu0
          %v3107 = vadd.f32 %v3066, %v3106
          %v3108 = vpop.f32.mrf.mxu0
          %v3109 = vpop.f32.mrf.mxu0
          %3110 = vdwg.mxu0
          %3111 = vmatprep.subr.bf16.mxu0 %v2653
          %3112 = vmatpush1.bf16.msra.mxu0 %v2652
          %3113 = vmatprep.subr.bf16.mxu0 %v2649
          %3114 = vmatpush1.bf16.msra.mxu0 %v2648
          %3115 = vmatprep.subr.bf16.mxu0 %v2645
          %3116 = vmatpush1.bf16.msra.mxu0 %v2644
          %3117 = vmatprep.subr.bf16.mxu0 %v2641
          %3118 = vmatpush1.bf16.msra.mxu0 %v2640
          %3119 = vmatprep.subr.bf16.mxu0 %v2637
          %3120 = vmatpush1.bf16.msra.mxu0 %v2636
          %3121 = vmatprep.subr.bf16.mxu0 %v2633
          %3122 = vmatpush1.bf16.msra.mxu0 %v2632
          %3123 = vmatprep.subr.bf16.mxu0 %v2629
          %3124 = vmatpush1.bf16.msra.mxu0 %v2628
          %3125 = vmatprep.subr.bf16.mxu0 %v2625
          %3126 = vmatpush1.bf16.msra.mxu0 %v2624
          %3127 = vmatprep.subr.bf16.mxu0 %v2685
          %3128 = vmatpush2.bf16.msra.mxu0 %v2684
          %3129 = vmatprep.subr.bf16.mxu0 %v2681
          %3130 = vmatpush2.bf16.msra.mxu0 %v2680
          %3131 = vmatprep.subr.bf16.mxu0 %v2677
          %3132 = vmatpush2.bf16.msra.mxu0 %v2676
          %3133 = vmatprep.subr.bf16.mxu0 %v2673
          %3134 = vmatpush2.bf16.msra.mxu0 %v2672
          %3135 = vmatprep.subr.bf16.mxu0 %v2669
          %3136 = vmatpush2.bf16.msra.mxu0 %v2668
          %3137 = vmatprep.subr.bf16.mxu0 %v2665
          %3138 = vmatpush2.bf16.msra.mxu0 %v2664
          %3139 = vmatprep.subr.bf16.mxu0 %v2661
          %3140 = vmatpush2.bf16.msra.mxu0 %v2660
          %3141 = vmatprep.subr.bf16.mxu0 %v2657
          %3142 = vmatpush2.bf16.msra.mxu0 %v2656
          %3143 = vmatprep.mubr.bf16.mxu0 %v1468
          %3144 = vmatmul.mubr.bf16.gmra.mxu0 %v1467
          %v3145 = vpop.f32.mrf.mxu0
          %v3146 = vadd.f32 %v3105, %v3145
          %v3147 = vpop.f32.mrf.mxu0
          %v3148 = vadd.f32 %v3107, %v3147
          %v3149 = vpop.f32.mrf.mxu0
          %v3150 = vpop.f32.mrf.mxu0
          %3151 = vdwg.mxu0
          %3152 = vmatprep.subr.bf16.mxu0 %v2717
          %3153 = vmatpush1.bf16.msra.mxu0 %v2716
          %3154 = vmatprep.subr.bf16.mxu0 %v2713
          %3155 = vmatpush1.bf16.msra.mxu0 %v2712
          %3156 = vmatprep.subr.bf16.mxu0 %v2709
          %3157 = vmatpush1.bf16.msra.mxu0 %v2708
          %3158 = vmatprep.subr.bf16.mxu0 %v2705
          %3159 = vmatpush1.bf16.msra.mxu0 %v2704
          %3160 = vmatprep.subr.bf16.mxu0 %v2701
          %3161 = vmatpush1.bf16.msra.mxu0 %v2700
          %3162 = vmatprep.subr.bf16.mxu0 %v2697
          %3163 = vmatpush1.bf16.msra.mxu0 %v2696
          %3164 = vmatprep.subr.bf16.mxu0 %v2693
          %3165 = vmatpush1.bf16.msra.mxu0 %v2692
          %3166 = vmatprep.subr.bf16.mxu0 %v2689
          %3167 = vmatpush1.bf16.msra.mxu0 %v2688
          %3168 = vmatprep.subr.bf16.mxu0 %v2749
          %3169 = vmatpush2.bf16.msra.mxu0 %v2748
          %3170 = vmatprep.subr.bf16.mxu0 %v2745
          %3171 = vmatpush2.bf16.msra.mxu0 %v2744
          %3172 = vmatprep.subr.bf16.mxu0 %v2741
          %3173 = vmatpush2.bf16.msra.mxu0 %v2740
          %3174 = vmatprep.subr.bf16.mxu0 %v2737
          %3175 = vmatpush2.bf16.msra.mxu0 %v2736
          %3176 = vmatprep.subr.bf16.mxu0 %v2733
          %3177 = vmatpush2.bf16.msra.mxu0 %v2732
          %3178 = vmatprep.subr.bf16.mxu0 %v2729
          %3179 = vmatpush2.bf16.msra.mxu0 %v2728
          %3180 = vmatprep.subr.bf16.mxu0 %v2725
          %3181 = vmatpush2.bf16.msra.mxu0 %v2724
          %3182 = vmatprep.subr.bf16.mxu0 %v2721
          %3183 = vmatpush2.bf16.msra.mxu0 %v2720
          %3184 = vmatprep.mubr.bf16.mxu0 %v1470
          %3185 = vmatmul.mubr.bf16.gmra.mxu0 %v1469
          %v3186 = vpop.f32.mrf.mxu0
          %v3187 = vadd.f32 %v3146, %v3186
          %v3188 = vpop.f32.mrf.mxu0
          %v3189 = vadd.f32 %v3148, %v3188
          %v3190 = vpop.f32.mrf.mxu0
          %v3191 = vpop.f32.mrf.mxu0
          %3192 = vdwg.mxu0
          %3193 = vmatprep.subr.bf16.mxu0 %v2527
          %3194 = vmatpush1.bf16.msra.mxu0 %v2526
          %3195 = vmatprep.subr.bf16.mxu0 %v2523
          %3196 = vmatpush1.bf16.msra.mxu0 %v2522
          %3197 = vmatprep.subr.bf16.mxu0 %v2519
          %3198 = vmatpush1.bf16.msra.mxu0 %v2518
          %3199 = vmatprep.subr.bf16.mxu0 %v2515
          %3200 = vmatpush1.bf16.msra.mxu0 %v2514
          %3201 = vmatprep.subr.bf16.mxu0 %v2511
          %3202 = vmatpush1.bf16.msra.mxu0 %v2510
          %3203 = vmatprep.subr.bf16.mxu0 %v2507
          %3204 = vmatpush1.bf16.msra.mxu0 %v2506
          %3205 = vmatprep.subr.bf16.mxu0 %v2503
          %3206 = vmatpush1.bf16.msra.mxu0 %v2502
          %3207 = vmatprep.subr.bf16.mxu0 %v2499
          %3208 = vmatpush1.bf16.msra.mxu0 %v2498
          %3209 = vmatprep.subr.bf16.mxu0 %v2559
          %3210 = vmatpush2.bf16.msra.mxu0 %v2558
          %3211 = vmatprep.subr.bf16.mxu0 %v2555
          %3212 = vmatpush2.bf16.msra.mxu0 %v2554
          %3213 = vmatprep.subr.bf16.mxu0 %v2551
          %3214 = vmatpush2.bf16.msra.mxu0 %v2550
          %3215 = vmatprep.subr.bf16.mxu0 %v2547
          %3216 = vmatpush2.bf16.msra.mxu0 %v2546
          %3217 = vmatprep.subr.bf16.mxu0 %v2543
          %3218 = vmatpush2.bf16.msra.mxu0 %v2542
          %3219 = vmatprep.subr.bf16.mxu0 %v2539
          %3220 = vmatpush2.bf16.msra.mxu0 %v2538
          %3221 = vmatprep.subr.bf16.mxu0 %v2535
          %3222 = vmatpush2.bf16.msra.mxu0 %v2534
          %3223 = vmatprep.subr.bf16.mxu0 %v2531
          %3224 = vmatpush2.bf16.msra.mxu0 %v2530
          %3225 = vmatprep.mubr.bf16.mxu0 %v1464
          %3226 = vmatmul.mubr.bf16.gmra.mxu0 %v1463
          %v3227 = vpop.f32.mrf.mxu0
          %v3228 = vadd.f32 %v3020, %v3227
          %v3229 = vpop.f32.mrf.mxu0
          %v3230 = vadd.f32 %v3024, %v3229
          %v3231 = vpop.f32.mrf.mxu0
          %v3232 = vpop.f32.mrf.mxu0
          %3233 = vdwg.mxu0
          %3234 = vmatprep.subr.bf16.mxu0 %v2591
          %3235 = vmatpush1.bf16.msra.mxu0 %v2590
          %3236 = vmatprep.subr.bf16.mxu0 %v2587
          %3237 = vmatpush1.bf16.msra.mxu0 %v2586
          %3238 = vmatprep.subr.bf16.mxu0 %v2583
          %3239 = vmatpush1.bf16.msra.mxu0 %v2582
          %3240 = vmatprep.subr.bf16.mxu0 %v2579
          %3241 = vmatpush1.bf16.msra.mxu0 %v2578
          %3242 = vmatprep.subr.bf16.mxu0 %v2575
          %3243 = vmatpush1.bf16.msra.mxu0 %v2574
          %3244 = vmatprep.subr.bf16.mxu0 %v2571
          %3245 = vmatpush1.bf16.msra.mxu0 %v2570
          %3246 = vmatprep.subr.bf16.mxu0 %v2567
          %3247 = vmatpush1.bf16.msra.mxu0 %v2566
          %3248 = vmatprep.subr.bf16.mxu0 %v2563
          %3249 = vmatpush1.bf16.msra.mxu0 %v2562
          %3250 = vmatprep.subr.bf16.mxu0 %v2623
          %3251 = vmatpush2.bf16.msra.mxu0 %v2622
          %3252 = vmatprep.subr.bf16.mxu0 %v2619
          %3253 = vmatpush2.bf16.msra.mxu0 %v2618
          %3254 = vmatprep.subr.bf16.mxu0 %v2615
          %3255 = vmatpush2.bf16.msra.mxu0 %v2614
          %3256 = vmatprep.subr.bf16.mxu0 %v2611
          %3257 = vmatpush2.bf16.msra.mxu0 %v2610
          %3258 = vmatprep.subr.bf16.mxu0 %v2607
          %3259 = vmatpush2.bf16.msra.mxu0 %v2606
          %3260 = vmatprep.subr.bf16.mxu0 %v2603
          %3261 = vmatpush2.bf16.msra.mxu0 %v2602
          %3262 = vmatprep.subr.bf16.mxu0 %v2599
          %3263 = vmatpush2.bf16.msra.mxu0 %v2598
          %3264 = vmatprep.subr.bf16.mxu0 %v2595
          %3265 = vmatpush2.bf16.msra.mxu0 %v2594
          %3266 = vmatprep.mubr.bf16.mxu0 %v1466
          %3267 = vmatmul.mubr.bf16.gmra.mxu0 %v1465
          %v3268 = vpop.f32.mrf.mxu0
          %v3269 = vadd.f32 %v3228, %v3268
          %v3270 = vpop.f32.mrf.mxu0
          %v3271 = vadd.f32 %v3230, %v3270
          %v3272 = vpop.f32.mrf.mxu0
          %v3273 = vpop.f32.mrf.mxu0
          %3274 = vdwg.mxu0
          %3275 = vmatprep.subr.bf16.mxu0 %v2655
          %3276 = vmatpush1.bf16.msra.mxu0 %v2654
          %3277 = vmatprep.subr.bf16.mxu0 %v2651
          %3278 = vmatpush1.bf16.msra.mxu0 %v2650
          %3279 = vmatprep.subr.bf16.mxu0 %v2647
          %3280 = vmatpush1.bf16.msra.mxu0 %v2646
          %3281 = vmatprep.subr.bf16.mxu0 %v2643
          %3282 = vmatpush1.bf16.msra.mxu0 %v2642
          %3283 = vmatprep.subr.bf16.mxu0 %v2639
          %3284 = vmatpush1.bf16.msra.mxu0 %v2638
          %3285 = vmatprep.subr.bf16.mxu0 %v2635
          %3286 = vmatpush1.bf16.msra.mxu0 %v2634
          %3287 = vmatprep.subr.bf16.mxu0 %v2631
          %3288 = vmatpush1.bf16.msra.mxu0 %v2630
          %3289 = vmatprep.subr.bf16.mxu0 %v2627
          %3290 = vmatpush1.bf16.msra.mxu0 %v2626
          %3291 = vmatprep.subr.bf16.mxu0 %v2687
          %3292 = vmatpush2.bf16.msra.mxu0 %v2686
          %3293 = vmatprep.subr.bf16.mxu0 %v2683
          %3294 = vmatpush2.bf16.msra.mxu0 %v2682
          %3295 = vmatprep.subr.bf16.mxu0 %v2679
          %3296 = vmatpush2.bf16.msra.mxu0 %v2678
          %3297 = vmatprep.subr.bf16.mxu0 %v2675
          %3298 = vmatpush2.bf16.msra.mxu0 %v2674
          %3299 = vmatprep.subr.bf16.mxu0 %v2671
          %3300 = vmatpush2.bf16.msra.mxu0 %v2670
          %3301 = vmatprep.subr.bf16.mxu0 %v2667
          %3302 = vmatpush2.bf16.msra.mxu0 %v2666
          %3303 = vmatprep.subr.bf16.mxu0 %v2663
          %3304 = vmatpush2.bf16.msra.mxu0 %v2662
          %3305 = vmatprep.subr.bf16.mxu0 %v2659
          %3306 = vmatpush2.bf16.msra.mxu0 %v2658
          %3307 = vmatprep.mubr.bf16.mxu0 %v1468
          %3308 = vmatmul.mubr.bf16.gmra.mxu0 %v1467
          %v3309 = vpop.f32.mrf.mxu0
          %v3310 = vadd.f32 %v3269, %v3309
          %v3311 = vpop.f32.mrf.mxu0
          %v3312 = vadd.f32 %v3271, %v3311
          %v3313 = vpop.f32.mrf.mxu0
          %v3314 = vpop.f32.mrf.mxu0
          %3315 = vdwg.mxu0
          %3316 = vmatprep.subr.bf16.mxu0 %v2719
          %3317 = vmatpush1.bf16.msra.mxu0 %v2718
          %3318 = vmatprep.subr.bf16.mxu0 %v2715
          %3319 = vmatpush1.bf16.msra.mxu0 %v2714
          %3320 = vmatprep.subr.bf16.mxu0 %v2711
          %3321 = vmatpush1.bf16.msra.mxu0 %v2710
          %3322 = vmatprep.subr.bf16.mxu0 %v2707
          %3323 = vmatpush1.bf16.msra.mxu0 %v2706
          %3324 = vmatprep.subr.bf16.mxu0 %v2703
          %3325 = vmatpush1.bf16.msra.mxu0 %v2702
          %3326 = vmatprep.subr.bf16.mxu0 %v2699
          %3327 = vmatpush1.bf16.msra.mxu0 %v2698
          %3328 = vmatprep.subr.bf16.mxu0 %v2695
          %3329 = vmatpush1.bf16.msra.mxu0 %v2694
          %3330 = vmatprep.subr.bf16.mxu0 %v2691
          %3331 = vmatpush1.bf16.msra.mxu0 %v2690
          %3332 = vmatprep.subr.bf16.mxu0 %v2751
          %3333 = vmatpush2.bf16.msra.mxu0 %v2750
          %3334 = vmatprep.subr.bf16.mxu0 %v2747
          %3335 = vmatpush2.bf16.msra.mxu0 %v2746
          %3336 = vmatprep.subr.bf16.mxu0 %v2743
          %3337 = vmatpush2.bf16.msra.mxu0 %v2742
          %3338 = vmatprep.subr.bf16.mxu0 %v2739
          %3339 = vmatpush2.bf16.msra.mxu0 %v2738
          %3340 = vmatprep.subr.bf16.mxu0 %v2735
          %3341 = vmatpush2.bf16.msra.mxu0 %v2734
          %3342 = vmatprep.subr.bf16.mxu0 %v2731
          %3343 = vmatpush2.bf16.msra.mxu0 %v2730
          %3344 = vmatprep.subr.bf16.mxu0 %v2727
          %3345 = vmatpush2.bf16.msra.mxu0 %v2726
          %3346 = vmatprep.subr.bf16.mxu0 %v2723
          %3347 = vmatpush2.bf16.msra.mxu0 %v2722
          %3348 = vmatprep.mubr.bf16.mxu0 %v1470
          %3349 = vmatmul.mubr.bf16.gmra.mxu0 %v1469
          %v3350 = vpop.f32.mrf.mxu0
          %v3351 = vadd.f32 %v3310, %v3350
          %v3352 = vpop.f32.mrf.mxu0
          %v3353 = vadd.f32 %v3312, %v3352
          %v3354 = vpop.f32.mrf.mxu0
          %v3355 = vpop.f32.mrf.mxu0
          %3356 = vdwg.mxu0
          %v3357 = vmax.f32 %v3187, 0.0
          %v3358 = vmax.f32 %v3189, 0.0
          %v3359 = vmax.f32 %v3351, 0.0
          %v3360 = vmax.f32 %v3353, 0.0
          %v3361 = vpack.c.bf16 %v3357, %v3357
          %v3362 = vpack.c.bf16 %v3358, %v3358
          %v3363 = vpack.c.bf16 %v3359, %v3359
          %v3364 = vpack.c.bf16 %v3360, %v3360
          %v3365 = vld [vmem:[#allocation7] sm:$0xff]
          %v3366 = vld [vmem:[#allocation7 + $0x8] sm:$0xff]
          %v3367 = vld [vmem:[#allocation7 + $0x10] sm:$0xff]
          %v3368 = vld [vmem:[#allocation7 + $0x18] sm:$0xff]
          %v3369 = vld [vmem:[#allocation7 + $0x20] sm:$0xff]
          %v3370 = vld [vmem:[#allocation7 + $0x28] sm:$0xff]
          %v3371 = vld [vmem:[#allocation7 + $0x30] sm:$0xff]
          %v3372 = vld [vmem:[#allocation7 + $0x38] sm:$0xff]
          %v3373 = vld [vmem:[#allocation7 + $0x40] sm:$0xff]
          %v3374 = vld [vmem:[#allocation7 + $0x48] sm:$0xff]
          %v3375 = vld [vmem:[#allocation7 + $0x50] sm:$0xff]
          %v3376 = vld [vmem:[#allocation7 + $0x58] sm:$0xff]
          %v3377 = vld [vmem:[#allocation7 + $0x60] sm:$0xff]
          %v3378 = vld [vmem:[#allocation7 + $0x68] sm:$0xff]
          %v3379 = vld [vmem:[#allocation7 + $0x70] sm:$0xff]
          %v3380 = vld [vmem:[#allocation7 + $0x78] sm:$0xff]
          %v3381 = vld [vmem:[#allocation7 + $0x80] sm:$0xff]
          %v3382 = vld [vmem:[#allocation7 + $0x88] sm:$0xff]
          %v3383 = vld [vmem:[#allocation7 + $0x90] sm:$0xff]
          %v3384 = vld [vmem:[#allocation7 + $0x98] sm:$0xff]
          %v3385 = vld [vmem:[#allocation7 + $0xa0] sm:$0xff]
          %v3386 = vld [vmem:[#allocation7 + $0xa8] sm:$0xff]
          %v3387 = vld [vmem:[#allocation7 + $0xb0] sm:$0xff]
          %v3388 = vld [vmem:[#allocation7 + $0xb8] sm:$0xff]
          %v3389 = vld [vmem:[#allocation7 + $0xc0] sm:$0xff]
          %v3390 = vld [vmem:[#allocation7 + $0xc8] sm:$0xff]
          %v3391 = vld [vmem:[#allocation7 + $0xd0] sm:$0xff]
          %v3392 = vld [vmem:[#allocation7 + $0xd8] sm:$0xff]
          %v3393 = vld [vmem:[#allocation7 + $0xe0] sm:$0xff]
          %v3394 = vld [vmem:[#allocation7 + $0xe8] sm:$0xff]
          %v3395 = vld [vmem:[#allocation7 + $0xf0] sm:$0xff]
          %v3396 = vld [vmem:[#allocation7 + $0xf8] sm:$0xff]
          %v3397 = vld [vmem:[#allocation7 + $0x100] sm:$0xff]
          %v3398 = vld [vmem:[#allocation7 + $0x108] sm:$0xff]
          %v3399 = vld [vmem:[#allocation7 + $0x110] sm:$0xff]
          %v3400 = vld [vmem:[#allocation7 + $0x118] sm:$0xff]
          %v3401 = vld [vmem:[#allocation7 + $0x120] sm:$0xff]
          %v3402 = vld [vmem:[#allocation7 + $0x128] sm:$0xff]
          %v3403 = vld [vmem:[#allocation7 + $0x130] sm:$0xff]
          %v3404 = vld [vmem:[#allocation7 + $0x138] sm:$0xff]
          %v3405 = vld [vmem:[#allocation7 + $0x140] sm:$0xff]
          %v3406 = vld [vmem:[#allocation7 + $0x148] sm:$0xff]
          %v3407 = vld [vmem:[#allocation7 + $0x150] sm:$0xff]
          %v3408 = vld [vmem:[#allocation7 + $0x158] sm:$0xff]
          %v3409 = vld [vmem:[#allocation7 + $0x160] sm:$0xff]
          %v3410 = vld [vmem:[#allocation7 + $0x168] sm:$0xff]
          %v3411 = vld [vmem:[#allocation7 + $0x170] sm:$0xff]
          %v3412 = vld [vmem:[#allocation7 + $0x178] sm:$0xff]
          %v3413 = vld [vmem:[#allocation7 + $0x180] sm:$0xff]
          %v3414 = vld [vmem:[#allocation7 + $0x188] sm:$0xff]
          %v3415 = vld [vmem:[#allocation7 + $0x190] sm:$0xff]
          %v3416 = vld [vmem:[#allocation7 + $0x198] sm:$0xff]
          %v3417 = vld [vmem:[#allocation7 + $0x1a0] sm:$0xff]
          %v3418 = vld [vmem:[#allocation7 + $0x1a8] sm:$0xff]
          %v3419 = vld [vmem:[#allocation7 + $0x1b0] sm:$0xff]
          %v3420 = vld [vmem:[#allocation7 + $0x1b8] sm:$0xff]
          %v3421 = vld [vmem:[#allocation7 + $0x1c0] sm:$0xff]
          %v3422 = vld [vmem:[#allocation7 + $0x1c8] sm:$0xff]
          %v3423 = vld [vmem:[#allocation7 + $0x1d0] sm:$0xff]
          %v3424 = vld [vmem:[#allocation7 + $0x1d8] sm:$0xff]
          %v3425 = vld [vmem:[#allocation7 + $0x1e0] sm:$0xff]
          %v3426 = vld [vmem:[#allocation7 + $0x1e8] sm:$0xff]
          %v3427 = vld [vmem:[#allocation7 + $0x1f0] sm:$0xff]
          %v3428 = vld [vmem:[#allocation7 + $0x1f8] sm:$0xff]
          %v3429 = vld [vmem:[%s10] sm:$0x3]
          %v3494 = vunpack.c.l.b16 %v3365
          %v3495 = vunpack.c.h.b16 %v3365
          %v3496 = vunpack.c.l.b16 %v3366
          %v3497 = vunpack.c.h.b16 %v3366
          %v3498 = vunpack.c.l.b16 %v3367
          %v3499 = vunpack.c.h.b16 %v3367
          %v3500 = vunpack.c.l.b16 %v3368
          %v3501 = vunpack.c.h.b16 %v3368
          %v3502 = vunpack.c.l.b16 %v3369
          %v3503 = vunpack.c.h.b16 %v3369
          %v3504 = vunpack.c.l.b16 %v3370
          %v3505 = vunpack.c.h.b16 %v3370
          %v3506 = vunpack.c.l.b16 %v3371
          %v3507 = vunpack.c.h.b16 %v3371
          %v3508 = vunpack.c.l.b16 %v3372
          %v3509 = vunpack.c.h.b16 %v3372
          %v3510 = vunpack.c.l.b16 %v3373
          %v3511 = vunpack.c.h.b16 %v3373
          %v3512 = vunpack.c.l.b16 %v3374
          %v3513 = vunpack.c.h.b16 %v3374
          %v3514 = vunpack.c.l.b16 %v3375
          %v3515 = vunpack.c.h.b16 %v3375
          %v3516 = vunpack.c.l.b16 %v3376
          %v3517 = vunpack.c.h.b16 %v3376
          %v3518 = vunpack.c.l.b16 %v3377
          %v3519 = vunpack.c.h.b16 %v3377
          %v3520 = vunpack.c.l.b16 %v3378
          %v3521 = vunpack.c.h.b16 %v3378
          %v3522 = vunpack.c.l.b16 %v3379
          %v3523 = vunpack.c.h.b16 %v3379
          %v3524 = vunpack.c.l.b16 %v3380
          %v3525 = vunpack.c.h.b16 %v3380
          %v3526 = vunpack.c.l.b16 %v3381
          %v3527 = vunpack.c.h.b16 %v3381
          %v3528 = vunpack.c.l.b16 %v3382
          %v3529 = vunpack.c.h.b16 %v3382
          %v3530 = vunpack.c.l.b16 %v3383
          %v3531 = vunpack.c.h.b16 %v3383
          %v3532 = vunpack.c.l.b16 %v3384
          %v3533 = vunpack.c.h.b16 %v3384
          %v3534 = vunpack.c.l.b16 %v3385
          %v3535 = vunpack.c.h.b16 %v3385
          %v3536 = vunpack.c.l.b16 %v3386
          %v3537 = vunpack.c.h.b16 %v3386
          %v3538 = vunpack.c.l.b16 %v3387
          %v3539 = vunpack.c.h.b16 %v3387
          %v3540 = vunpack.c.l.b16 %v3388
          %v3541 = vunpack.c.h.b16 %v3388
          %v3542 = vunpack.c.l.b16 %v3389
          %v3543 = vunpack.c.h.b16 %v3389
          %v3544 = vunpack.c.l.b16 %v3390
          %v3545 = vunpack.c.h.b16 %v3390
          %v3546 = vunpack.c.l.b16 %v3391
          %v3547 = vunpack.c.h.b16 %v3391
          %v3548 = vunpack.c.l.b16 %v3392
          %v3549 = vunpack.c.h.b16 %v3392
          %v3550 = vunpack.c.l.b16 %v3393
          %v3551 = vunpack.c.h.b16 %v3393
          %v3552 = vunpack.c.l.b16 %v3394
          %v3553 = vunpack.c.h.b16 %v3394
          %v3554 = vunpack.c.l.b16 %v3395
          %v3555 = vunpack.c.h.b16 %v3395
          %v3556 = vunpack.c.l.b16 %v3396
          %v3557 = vunpack.c.h.b16 %v3396
          %v3558 = vunpack.c.l.b16 %v3397
          %v3559 = vunpack.c.h.b16 %v3397
          %v3560 = vunpack.c.l.b16 %v3398
          %v3561 = vunpack.c.h.b16 %v3398
          %v3562 = vunpack.c.l.b16 %v3399
          %v3563 = vunpack.c.h.b16 %v3399
          %v3564 = vunpack.c.l.b16 %v3400
          %v3565 = vunpack.c.h.b16 %v3400
          %v3566 = vunpack.c.l.b16 %v3401
          %v3567 = vunpack.c.h.b16 %v3401
          %v3568 = vunpack.c.l.b16 %v3402
          %v3569 = vunpack.c.h.b16 %v3402
          %v3570 = vunpack.c.l.b16 %v3403
          %v3571 = vunpack.c.h.b16 %v3403
          %v3572 = vunpack.c.l.b16 %v3404
          %v3573 = vunpack.c.h.b16 %v3404
          %v3574 = vunpack.c.l.b16 %v3405
          %v3575 = vunpack.c.h.b16 %v3405
          %v3576 = vunpack.c.l.b16 %v3406
          %v3577 = vunpack.c.h.b16 %v3406
          %v3578 = vunpack.c.l.b16 %v3407
          %v3579 = vunpack.c.h.b16 %v3407
          %v3580 = vunpack.c.l.b16 %v3408
          %v3581 = vunpack.c.h.b16 %v3408
          %v3582 = vunpack.c.l.b16 %v3409
          %v3583 = vunpack.c.h.b16 %v3409
          %v3584 = vunpack.c.l.b16 %v3410
          %v3585 = vunpack.c.h.b16 %v3410
          %v3586 = vunpack.c.l.b16 %v3411
          %v3587 = vunpack.c.h.b16 %v3411
          %v3588 = vunpack.c.l.b16 %v3412
          %v3589 = vunpack.c.h.b16 %v3412
          %v3590 = vunpack.c.l.b16 %v3413
          %v3591 = vunpack.c.h.b16 %v3413
          %v3592 = vunpack.c.l.b16 %v3414
          %v3593 = vunpack.c.h.b16 %v3414
          %v3594 = vunpack.c.l.b16 %v3415
          %v3595 = vunpack.c.h.b16 %v3415
          %v3596 = vunpack.c.l.b16 %v3416
          %v3597 = vunpack.c.h.b16 %v3416
          %v3598 = vunpack.c.l.b16 %v3417
          %v3599 = vunpack.c.h.b16 %v3417
          %v3600 = vunpack.c.l.b16 %v3418
          %v3601 = vunpack.c.h.b16 %v3418
          %v3602 = vunpack.c.l.b16 %v3419
          %v3603 = vunpack.c.h.b16 %v3419
          %v3604 = vunpack.c.l.b16 %v3420
          %v3605 = vunpack.c.h.b16 %v3420
          %v3606 = vunpack.c.l.b16 %v3421
          %v3607 = vunpack.c.h.b16 %v3421
          %v3608 = vunpack.c.l.b16 %v3422
          %v3609 = vunpack.c.h.b16 %v3422
          %v3610 = vunpack.c.l.b16 %v3423
          %v3611 = vunpack.c.h.b16 %v3423
          %v3612 = vunpack.c.l.b16 %v3424
          %v3613 = vunpack.c.h.b16 %v3424
          %v3614 = vunpack.c.l.b16 %v3425
          %v3615 = vunpack.c.h.b16 %v3425
          %v3616 = vunpack.c.l.b16 %v3426
          %v3617 = vunpack.c.h.b16 %v3426
          %v3618 = vunpack.c.l.b16 %v3427
          %v3619 = vunpack.c.h.b16 %v3427
          %v3620 = vunpack.c.l.b16 %v3428
          %v3621 = vunpack.c.h.b16 %v3428
          %v3622 = vpack.c.b16 %v3496, %v3494
          %v3623 = vpack.c.b16 %v3497, %v3495
          %v3624 = vpack.c.b16 %v3500, %v3498
          %v3625 = vpack.c.b16 %v3501, %v3499
          %v3626 = vpack.c.b16 %v3504, %v3502
          %v3627 = vpack.c.b16 %v3505, %v3503
          %v3628 = vpack.c.b16 %v3508, %v3506
          %v3629 = vpack.c.b16 %v3509, %v3507
          %v3630 = vpack.c.b16 %v3512, %v3510
          %v3631 = vpack.c.b16 %v3513, %v3511
          %v3632 = vpack.c.b16 %v3516, %v3514
          %v3633 = vpack.c.b16 %v3517, %v3515
          %v3634 = vpack.c.b16 %v3520, %v3518
          %v3635 = vpack.c.b16 %v3521, %v3519
          %v3636 = vpack.c.b16 %v3524, %v3522
          %v3637 = vpack.c.b16 %v3525, %v3523
          %v3638 = vpack.c.b16 %v3528, %v3526
          %v3639 = vpack.c.b16 %v3529, %v3527
          %v3640 = vpack.c.b16 %v3532, %v3530
          %v3641 = vpack.c.b16 %v3533, %v3531
          %v3642 = vpack.c.b16 %v3536, %v3534
          %v3643 = vpack.c.b16 %v3537, %v3535
          %v3644 = vpack.c.b16 %v3540, %v3538
          %v3645 = vpack.c.b16 %v3541, %v3539
          %v3646 = vpack.c.b16 %v3544, %v3542
          %v3647 = vpack.c.b16 %v3545, %v3543
          %v3648 = vpack.c.b16 %v3548, %v3546
          %v3649 = vpack.c.b16 %v3549, %v3547
          %v3650 = vpack.c.b16 %v3552, %v3550
          %v3651 = vpack.c.b16 %v3553, %v3551
          %v3652 = vpack.c.b16 %v3556, %v3554
          %v3653 = vpack.c.b16 %v3557, %v3555
          %v3654 = vpack.c.b16 %v3560, %v3558
          %v3655 = vpack.c.b16 %v3561, %v3559
          %v3656 = vpack.c.b16 %v3564, %v3562
          %v3657 = vpack.c.b16 %v3565, %v3563
          %v3658 = vpack.c.b16 %v3568, %v3566
          %v3659 = vpack.c.b16 %v3569, %v3567
          %v3660 = vpack.c.b16 %v3572, %v3570
          %v3661 = vpack.c.b16 %v3573, %v3571
          %v3662 = vpack.c.b16 %v3576, %v3574
          %v3663 = vpack.c.b16 %v3577, %v3575
          %v3664 = vpack.c.b16 %v3580, %v3578
          %v3665 = vpack.c.b16 %v3581, %v3579
          %v3666 = vpack.c.b16 %v3584, %v3582
          %v3667 = vpack.c.b16 %v3585, %v3583
          %v3668 = vpack.c.b16 %v3588, %v3586
          %v3669 = vpack.c.b16 %v3589, %v3587
          %v3670 = vpack.c.b16 %v3592, %v3590
          %v3671 = vpack.c.b16 %v3593, %v3591
          %v3672 = vpack.c.b16 %v3596, %v3594
          %v3673 = vpack.c.b16 %v3597, %v3595
          %v3674 = vpack.c.b16 %v3600, %v3598
          %v3675 = vpack.c.b16 %v3601, %v3599
          %v3676 = vpack.c.b16 %v3604, %v3602
          %v3677 = vpack.c.b16 %v3605, %v3603
          %v3678 = vpack.c.b16 %v3608, %v3606
          %v3679 = vpack.c.b16 %v3609, %v3607
          %v3680 = vpack.c.b16 %v3612, %v3610
          %v3681 = vpack.c.b16 %v3613, %v3611
          %v3682 = vpack.c.b16 %v3616, %v3614
          %v3683 = vpack.c.b16 %v3617, %v3615
          %v3684 = vpack.c.b16 %v3620, %v3618
          %v3685 = vpack.c.b16 %v3621, %v3619
          %v3751 = vlaneseq
          %v3752 = vshrl.u32 %v3751, 7
          %v3753 = vsub.s32 0, %v3752
          %v3754 = vrot.slane %v3429, %v3753
          %v3755 = vlaneseq
          %v3756 = vshrl.u32 %v3755, 7
          %v3757 = vsub.s32 1, %v3756
          %v3758 = vrot.slane %v3429, %v3757
          %3761 = vmatprep.subr.bf16.mxu0 %v3637
          %3762 = vmatpush1.bf16.msra.mxu0 %v3636
          %3763 = vmatprep.subr.bf16.mxu0 %v3635
          %3764 = vmatpush1.bf16.msra.mxu0 %v3634
          %3765 = vmatprep.subr.bf16.mxu0 %v3633
          %3766 = vmatpush1.bf16.msra.mxu0 %v3632
          %3767 = vmatprep.subr.bf16.mxu0 %v3631
          %3768 = vmatpush1.bf16.msra.mxu0 %v3630
          %3769 = vmatprep.subr.bf16.mxu0 %v3629
          %3770 = vmatpush1.bf16.msra.mxu0 %v3628
          %3771 = vmatprep.subr.bf16.mxu0 %v3627
          %3772 = vmatpush1.bf16.msra.mxu0 %v3626
          %3773 = vmatprep.subr.bf16.mxu0 %v3625
          %3774 = vmatpush1.bf16.msra.mxu0 %v3624
          %3775 = vmatprep.subr.bf16.mxu0 %v3623
          %3776 = vmatpush1.bf16.msra.mxu0 %v3622
          %3777 = vmatprep.subr.bf16.mxu0 %v3653
          %3778 = vmatpush2.bf16.msra.mxu0 %v3652
          %3779 = vmatprep.subr.bf16.mxu0 %v3651
          %3780 = vmatpush2.bf16.msra.mxu0 %v3650
          %3781 = vmatprep.subr.bf16.mxu0 %v3649
          %3782 = vmatpush2.bf16.msra.mxu0 %v3648
          %3783 = vmatprep.subr.bf16.mxu0 %v3647
          %3784 = vmatpush2.bf16.msra.mxu0 %v3646
          %3785 = vmatprep.subr.bf16.mxu0 %v3645
          %3786 = vmatpush2.bf16.msra.mxu0 %v3644
          %3787 = vmatprep.subr.bf16.mxu0 %v3643
          %3788 = vmatpush2.bf16.msra.mxu0 %v3642
          %3789 = vmatprep.subr.bf16.mxu0 %v3641
          %3790 = vmatpush2.bf16.msra.mxu0 %v3640
          %3791 = vmatprep.subr.bf16.mxu0 %v3639
          %3792 = vmatpush2.bf16.msra.mxu0 %v3638
          %3793 = vmatprep.mubr.bf16.mxu0 %v3362
          %3794 = vmatmul.mubr.bf16.gmra.mxu0 %v3361
          %v3795 = vpop.f32.mrf.mxu0
          %v3796 = vadd.f32 %v3754, %v3795
          %v3797 = vpop.f32.mrf.mxu0
          %v3798 = vadd.f32 %v3758, %v3797
          %v3799 = vpop.f32.mrf.mxu0
          %v3800 = vpop.f32.mrf.mxu0
          %3801 = vdwg.mxu0
          %3802 = vmatprep.subr.bf16.mxu0 %v3669
          %3803 = vmatpush1.bf16.msra.mxu0 %v3668
          %3804 = vmatprep.subr.bf16.mxu0 %v3667
          %3805 = vmatpush1.bf16.msra.mxu0 %v3666
          %3806 = vmatprep.subr.bf16.mxu0 %v3665
          %3807 = vmatpush1.bf16.msra.mxu0 %v3664
          %3808 = vmatprep.subr.bf16.mxu0 %v3663
          %3809 = vmatpush1.bf16.msra.mxu0 %v3662
          %3810 = vmatprep.subr.bf16.mxu0 %v3661
          %3811 = vmatpush1.bf16.msra.mxu0 %v3660
          %3812 = vmatprep.subr.bf16.mxu0 %v3659
          %3813 = vmatpush1.bf16.msra.mxu0 %v3658
          %3814 = vmatprep.subr.bf16.mxu0 %v3657
          %3815 = vmatpush1.bf16.msra.mxu0 %v3656
          %3816 = vmatprep.subr.bf16.mxu0 %v3655
          %3817 = vmatpush1.bf16.msra.mxu0 %v3654
          %3818 = vmatprep.subr.bf16.mxu0 %v3685
          %3819 = vmatpush2.bf16.msra.mxu0 %v3684
          %3820 = vmatprep.subr.bf16.mxu0 %v3683
          %3821 = vmatpush2.bf16.msra.mxu0 %v3682
          %3822 = vmatprep.subr.bf16.mxu0 %v3681
          %3823 = vmatpush2.bf16.msra.mxu0 %v3680
          %3824 = vmatprep.subr.bf16.mxu0 %v3679
          %3825 = vmatpush2.bf16.msra.mxu0 %v3678
          %3826 = vmatprep.subr.bf16.mxu0 %v3677
          %3827 = vmatpush2.bf16.msra.mxu0 %v3676
          %3828 = vmatprep.subr.bf16.mxu0 %v3675
          %3829 = vmatpush2.bf16.msra.mxu0 %v3674
          %3830 = vmatprep.subr.bf16.mxu0 %v3673
          %3831 = vmatpush2.bf16.msra.mxu0 %v3672
          %3832 = vmatprep.subr.bf16.mxu0 %v3671
          %3833 = vmatpush2.bf16.msra.mxu0 %v3670
          %3834 = vmatprep.mubr.bf16.mxu0 %v3364
          %3835 = vmatmul.mubr.bf16.gmra.mxu0 %v3363
          %v3836 = vpop.f32.mrf.mxu0
          %v3837 = vadd.f32 %v3796, %v3836
          %v3838 = vpop.f32.mrf.mxu0
          %v3839 = vadd.f32 %v3798, %v3838
          %v3840 = vpop.f32.mrf.mxu0
          %v3841 = vpop.f32.mrf.mxu0
          %3842 = vdwg.mxu0
          %v3843 = vmax.f32 %v3837, 0.0
          %v3844 = vmax.f32 %v3839, 0.0
          %v3845 = vpack.c.bf16 %v3843, %v3843
          %v3846 = vpack.c.bf16 %v3844, %v3844
          %v3847 = vld [vmem:[#allocation8] sm:$0xf]
          %v3848 = vld [vmem:[#allocation8 + $0x4] sm:$0xf]
          %v3849 = vld [vmem:[#allocation8 + $0x8] sm:$0xf]
          %v3850 = vld [vmem:[#allocation8 + $0xc] sm:$0xf]
          %v3851 = vld [vmem:[#allocation8 + $0x10] sm:$0xf]
          %v3852 = vld [vmem:[#allocation8 + $0x14] sm:$0xf]
          %v3853 = vld [vmem:[#allocation8 + $0x18] sm:$0xf]
          %v3854 = vld [vmem:[#allocation8 + $0x1c] sm:$0xf]
          %v3855 = vld [vmem:[#allocation8 + $0x20] sm:$0xf]
          %v3856 = vld [vmem:[#allocation8 + $0x24] sm:$0xf]
          %v3857 = vld [vmem:[#allocation8 + $0x28] sm:$0xf]
          %v3858 = vld [vmem:[#allocation8 + $0x2c] sm:$0xf]
          %v3859 = vld [vmem:[#allocation8 + $0x30] sm:$0xf]
          %v3860 = vld [vmem:[#allocation8 + $0x34] sm:$0xf]
          %v3861 = vld [vmem:[#allocation8 + $0x38] sm:$0xf]
          %v3862 = vld [vmem:[#allocation8 + $0x3c] sm:$0xf]
          %v3863 = vld [vmem:[#allocation8 + $0x40] sm:$0xf]
          %v3864 = vld [vmem:[#allocation8 + $0x44] sm:$0xf]
          %v3865 = vld [vmem:[#allocation8 + $0x48] sm:$0xf]
          %v3866 = vld [vmem:[#allocation8 + $0x4c] sm:$0xf]
          %v3867 = vld [vmem:[#allocation8 + $0x50] sm:$0xf]
          %v3868 = vld [vmem:[#allocation8 + $0x54] sm:$0xf]
          %v3869 = vld [vmem:[#allocation8 + $0x58] sm:$0xf]
          %v3870 = vld [vmem:[#allocation8 + $0x5c] sm:$0xf]
          %v3871 = vld [vmem:[#allocation8 + $0x60] sm:$0xf]
          %v3872 = vld [vmem:[#allocation8 + $0x64] sm:$0xf]
          %v3873 = vld [vmem:[#allocation8 + $0x68] sm:$0xf]
          %v3874 = vld [vmem:[#allocation8 + $0x6c] sm:$0xf]
          %v3875 = vld [vmem:[#allocation8 + $0x70] sm:$0xf]
          %v3876 = vld [vmem:[#allocation8 + $0x74] sm:$0xf]
          %v3877 = vld [vmem:[#allocation8 + $0x78] sm:$0xf]
          %v3878 = vld [vmem:[#allocation8 + $0x7c] sm:$0xf]
          %v3879 = vld [vmem:[%s12] sm:$0x1]
          %v3912 = vunpack.c.l.b16 %v3847
          %v3913 = vunpack.c.l.b16 %v3848
          %v3914 = vunpack.c.l.b16 %v3849
          %v3915 = vunpack.c.l.b16 %v3850
          %v3916 = vunpack.c.l.b16 %v3851
          %v3917 = vunpack.c.l.b16 %v3852
          %v3918 = vunpack.c.l.b16 %v3853
          %v3919 = vunpack.c.l.b16 %v3854
          %v3920 = vunpack.c.l.b16 %v3855
          %v3921 = vunpack.c.l.b16 %v3856
          %v3922 = vunpack.c.l.b16 %v3857
          %v3923 = vunpack.c.l.b16 %v3858
          %v3924 = vunpack.c.l.b16 %v3859
          %v3925 = vunpack.c.l.b16 %v3860
          %v3926 = vunpack.c.l.b16 %v3861
          %v3927 = vunpack.c.l.b16 %v3862
          %v3928 = vunpack.c.l.b16 %v3863
          %v3929 = vunpack.c.l.b16 %v3864
          %v3930 = vunpack.c.l.b16 %v3865
          %v3931 = vunpack.c.l.b16 %v3866
          %v3932 = vunpack.c.l.b16 %v3867
          %v3933 = vunpack.c.l.b16 %v3868
          %v3934 = vunpack.c.l.b16 %v3869
          %v3935 = vunpack.c.l.b16 %v3870
          %v3936 = vunpack.c.l.b16 %v3871
          %v3937 = vunpack.c.l.b16 %v3872
          %v3938 = vunpack.c.l.b16 %v3873
          %v3939 = vunpack.c.l.b16 %v3874
          %v3940 = vunpack.c.l.b16 %v3875
          %v3941 = vunpack.c.l.b16 %v3876
          %v3942 = vunpack.c.l.b16 %v3877
          %v3943 = vunpack.c.l.b16 %v3878
          %v3944 = vpack.c.b16 %v3913, %v3912
          %v3945 = vpack.c.b16 %v3915, %v3914
          %v3946 = vpack.c.b16 %v3917, %v3916
          %v3947 = vpack.c.b16 %v3919, %v3918
          %v3948 = vpack.c.b16 %v3921, %v3920
          %v3949 = vpack.c.b16 %v3923, %v3922
          %v3950 = vpack.c.b16 %v3925, %v3924
          %v3951 = vpack.c.b16 %v3927, %v3926
          %v3952 = vpack.c.b16 %v3929, %v3928
          %v3953 = vpack.c.b16 %v3931, %v3930
          %v3954 = vpack.c.b16 %v3933, %v3932
          %v3955 = vpack.c.b16 %v3935, %v3934
          %v3956 = vpack.c.b16 %v3937, %v3936
          %v3957 = vpack.c.b16 %v3939, %v3938
          %v3958 = vpack.c.b16 %v3941, %v3940
          %v3959 = vpack.c.b16 %v3943, %v3942
          %3976 = vmatprep.subr.bf16.mxu0 0
          %3977 = vmatpush1.bf16.msra.mxu0 %v3951
          %3978 = vmatprep.subr.bf16.mxu0 0
          %3979 = vmatpush1.bf16.msra.mxu0 %v3950
          %3980 = vmatprep.subr.bf16.mxu0 0
          %3981 = vmatpush1.bf16.msra.mxu0 %v3949
          %3982 = vmatprep.subr.bf16.mxu0 0
          %3983 = vmatpush1.bf16.msra.mxu0 %v3948
          %3984 = vmatprep.subr.bf16.mxu0 0
          %3985 = vmatpush1.bf16.msra.mxu0 %v3947
          %3986 = vmatprep.subr.bf16.mxu0 0
          %3987 = vmatpush1.bf16.msra.mxu0 %v3946
          %3988 = vmatprep.subr.bf16.mxu0 0
          %3989 = vmatpush1.bf16.msra.mxu0 %v3945
          %3990 = vmatprep.subr.bf16.mxu0 0
          %3991 = vmatpush1.bf16.msra.mxu0 %v3944
          %3992 = vmatprep.subr.bf16.mxu0 0
          %3993 = vmatpush2.bf16.msra.mxu0 %v3959
          %3994 = vmatprep.subr.bf16.mxu0 0
          %3995 = vmatpush2.bf16.msra.mxu0 %v3958
          %3996 = vmatprep.subr.bf16.mxu0 0
          %3997 = vmatpush2.bf16.msra.mxu0 %v3957
          %3998 = vmatprep.subr.bf16.mxu0 0
          %3999 = vmatpush2.bf16.msra.mxu0 %v3956
          %4000 = vmatprep.subr.bf16.mxu0 0
          %4001 = vmatpush2.bf16.msra.mxu0 %v3955
          %4002 = vmatprep.subr.bf16.mxu0 0
          %4003 = vmatpush2.bf16.msra.mxu0 %v3954
          %4004 = vmatprep.subr.bf16.mxu0 0
          %4005 = vmatpush2.bf16.msra.mxu0 %v3953
          %4006 = vmatprep.subr.bf16.mxu0 0
          %4007 = vmatpush2.bf16.msra.mxu0 %v3952
          %4008 = vmatprep.mubr.bf16.mxu0 %v3846
          %4009 = vmatmul.mubr.bf16.gmra.mxu0 %v3845
          %v4010 = vpop.f32.mrf.mxu0
          %v4011 = vadd.f32 %v3879, %v4010
          %v4012 = vpop.f32.mrf.mxu0
          %v4013 = vpop.f32.mrf.mxu0
          %v4014 = vpop.f32.mrf.mxu0
          %4015 = vdwg.mxu0
          %4016 = vst [vmem:[%s523] sm:$0x1] %v4011
        $region100: #{pointnetfeat_forward.2} parent=71 // pred_fallthru
          _
        %p4017 = scmp.lt.s32.totalorder %s31, 1
        %s4018 = scalar_select %p4017, %s31, 1
        %s4019 = scalar_lea.vmem %s13, %s4018
        // Predicated region
        $region101: #{pointnetfeat_forward.2} parent=71 // pred_check
          %p4020 = pneg %p337
        $region102: #{pointnetfeat_forward.2} parent=71 // pred_check_branch
          %4022 = sbr.rel (%p4020) target = $region104
        $region103: #{pointnetfeat_forward.2} parent=71 // pred_region
          _
        $region104: #{pointnetfeat_forward.2} parent=71 // pred_fallthru
          _
      $region72: #{pointnetfeat_forward.2} parent=5 // pred_fallthru
        _
      %p4023 = scmp.le.s32.totalorder 2, %s22
      // Predicated region
      $region105: #{pointnetfeat_forward.2} parent=5 // pred_check
        %p4024 = pneg %p4023
      $region106: #{pointnetfeat_forward.2} parent=5 // pred_check_branch
        %4026 = sbr.rel (%p4024) target = $region108
      $region107: #{pointnetfeat_forward.2} parent=5 // pred_region
        %s4027 = ssub.s32 %s22, 2
        // Predicated region
        $region109: #{pointnetfeat_forward.2} parent=107 // pred_check
          %p4028 = pneg %p343
        $region110: #{pointnetfeat_forward.2} parent=107 // pred_check_branch
          %4030 = sbr.rel (%p4028) target = $region112
        $region111: #{pointnetfeat_forward.2} parent=107 // pred_region
          %p4031 = scmp.lt.s32.totalorder %s33, 1
          %s4032 = scalar_select %p4031, %s33, 1
          %s4033 = scalar_lea.vmem %s13, %s4032
        $region112: #{pointnetfeat_forward.2} parent=107 // pred_fallthru
          _
      $region108: #{pointnetfeat_forward.2} parent=5 // pred_fallthru
        _
    $region6: #{pointnetfeat_forward.2} parent=1 // loop_footer
      %s26 = sadd.s32 1, %s22
    $region7: #{pointnetfeat_forward.2} parent=1 // loop_footer_branch
      %21 = sbr.rel target = $region3
    $region8: #{pointnetfeat_forward.2} parent=1 // loop_exit
      _
    %4034 = vsyncpa [#allocation4], 1
    %s4035 = scalar_lea.sflag [#allocation4], 1
    %4036 = vsyncpa %s4035, 1
    %4037 = vsyncpa [#allocation6], 1
    %4038 = vsyncpa [#allocation9], 1

</llo_original>
